<compile_context>
chip_gen: v5e
topology: v5e:2x2
jax: 0.10.0
libtpu: 0.0.40
codegen_flags: <defaults>
</compile_context>

<pallas_src>
import numpy as np

import jax
import jax.numpy as jnp
from jax.experimental import pallas as pl
from jax.experimental.pallas import tpu as pltpu


IN_H = IN_W = 28
IN_FEATS = IN_H * IN_W          # 784
NUM_CLASSES = 10
OUT_PAD = 128                   # lane-dense output width


def _round_up(n, m):
    return (n + m - 1) // m * m


# ----------------------------------------------------------------------------
# Fused kernel: whole network for one batch tile.
# ----------------------------------------------------------------------------
def _classifier_kernel(x_ref, w1_ref, b1_ref, w2_ref, b2_ref,
                       wf1_ref, bf1_ref, wf2_ref, bf2_ref,
                       wf3_ref, bf3_ref, o_ref):
    f32 = jnp.float32
    x = x_ref[...]                                                   # [TB, 784]

    # conv1 (pre-lowered to dense matmul) + relu        -> [TB, 12*12*6 = 864]
    h1 = jnp.dot(x, w1_ref[...], preferred_element_type=f32) + b1_ref[...]
    h1 = jnp.maximum(h1, 0.0)

    # conv2 (pre-lowered to dense matmul) + relu        -> [TB, 5*5*16 = 400]
    h2 = jnp.dot(h1, w2_ref[...], preferred_element_type=f32) + b2_ref[...]
    h2 = jnp.maximum(h2, 0.0)

    # fc1 + relu (flatten permutation folded into wf1)  -> [TB, 120]
    f1 = jnp.dot(h2, wf1_ref[...], preferred_element_type=f32) + bf1_ref[...]
    f1 = jnp.maximum(f1, 0.0)

    # fc2 + relu                                        -> [TB, 84]
    f2 = jnp.dot(f1, wf2_ref[...], preferred_element_type=f32) + bf2_ref[...]
    f2 = jnp.maximum(f2, 0.0)

    # fc3 (N padded to 128 for an unmasked store)       -> [TB, 128]
    out = jnp.dot(f2, wf3_ref[...], preferred_element_type=f32) + bf3_ref[...]
    o_ref[...] = out.astype(o_ref.dtype)


# ----------------------------------------------------------------------------
# Wrapper: batch tiling + single pallas_call.
# ----------------------------------------------------------------------------
def classifier_forward(eff, x):
    n = x.shape[0]
    x2 = x.reshape(n, IN_FEATS).astype(jnp.float32)

    tb = min(128, _round_up(max(n, 1), 8))           # batch tile (multiple of 8)
    n_pad = _round_up(n, tb)
    if n_pad != n:
        x2 = jnp.pad(x2, ((0, n_pad - n), (0, 0)))

    weight_args = (eff["w1"], eff["b1"], eff["w2"], eff["b2"],
                   eff["wf1"], eff["bf1"], eff["wf2"], eff["bf2"],
                   eff["wf3"], eff["bf3"])

    row_map = lambda i: (i, 0)      # batch-tiled arrays
    const_map = lambda i: (0, 0)    # VMEM-resident weights (fetched once)

    in_specs = [pl.BlockSpec((tb, IN_FEATS), row_map)]
    in_specs += [pl.BlockSpec(w.shape, const_map) for w in weight_args]

    out = pl.pallas_call(
        _classifier_kernel,
        out_shape=jax.ShapeDtypeStruct((n_pad, OUT_PAD), jnp.float32),
        grid=(n_pad // tb,),
        in_specs=in_specs,
        out_specs=pl.BlockSpec((tb, OUT_PAD), row_map),
        compiler_params=pltpu.CompilerParams(
            dimension_semantics=("parallel",),
            vmem_limit_bytes=32 * 1024 * 1024),
    )(x2, *weight_args)

    return out[:n, :NUM_CLASSES]


# ----------------------------------------------------------------------------
# One-time (outside jit) lowering of the PyTorch parameters to kernel layout.
# ----------------------------------------------------------------------------
def _conv_as_dense(w, b, in_h, in_w, stride):
    """Fold im2col into the conv weight.

    Input layout : flat (ih, iw, cin)   (channel-last)
    Output layout: flat (oh, ow, cout)  (channel-last)
    """
    w = np.asarray(w, np.float32)
    b = np.asarray(b, np.float32)
    cout, cin, kh, kw = w.shape
    out_h = (in_h - kh) // stride + 1
    out_w = (in_w - kw) // stride + 1
    mat = np.zeros((in_h * in_w * cin, out_h * out_w * cout), np.float32)
    for oh in range(out_h):
        for ow in range(out_w):
            col0 = (oh * out_w + ow) * cout
            for dh in range(kh):
                for dw in range(kw):
                    ih = oh * stride + dh
                    iw = ow * stride + dw
                    for ci in range(cin):
                        row = (ih * in_w + iw) * cin + ci
                        mat[row, col0:col0 + cout] += w[:, ci, dh, dw]
    bias = np.tile(b, out_h * out_w)
    return mat, bias, out_h, out_w


def _chw_to_hwc_perm(c, h, w):
    """perm[hwc_index] = chw_index (to absorb PyTorch's view(-1, C*H*W))."""
    perm = np.zeros(c * h * w, np.int32)
    for ci in range(c):
        for hi in range(h):
            for wi in range(w):
                perm[(hi * w + wi) * c + ci] = ci * h * w + hi * w + wi
    return perm


def build_kernel_params(p):
    w1, b1, oh1, ow1 = _conv_as_dense(p["conv1_w"], p["conv1_b"], IN_H, IN_W, 2)
    w2, b2, oh2, ow2 = _conv_as_dense(p["conv2_w"], p["conv2_b"], oh1, ow1, 2)

    c2 = p["conv2_w"].shape[0]                              # 16
    perm = _chw_to_hwc_perm(c2, oh2, ow2)                   # 400 entries
    fc1_w = np.asarray(p["fc1_w"], np.float32)              # [120, 400]
    wf1 = fc1_w.T[perm]                                     # [400, 120], hwc rows
    bf1 = np.asarray(p["fc1_b"], np.float32)

    wf2 = np.asarray(p["fc2_w"], np.float32).T              # [120, 84]
    bf2 = np.asarray(p["fc2_b"], np.float32)

    fc3_wt = np.asarray(p["fc3_w"], np.float32).T           # [84, 10]
    wf3 = np.zeros((fc3_wt.shape[0], OUT_PAD), np.float32)
    wf3[:, :NUM_CLASSES] = fc3_wt
    bf3 = np.zeros((OUT_PAD,), np.float32)
    bf3[:NUM_CLASSES] = np.asarray(p["fc3_b"], np.float32)

    def dev(a):
        return jnp.asarray(a, jnp.float32)

    return {
        "w1": dev(w1), "b1": dev(b1).reshape(1, -1),
        "w2": dev(w2), "b2": dev(b2).reshape(1, -1),
        "wf1": dev(wf1), "bf1": dev(bf1).reshape(1, -1),
        "wf2": dev(wf2), "bf2": dev(bf2).reshape(1, -1),
        "wf3": dev(wf3), "bf3": dev(bf3).reshape(1, -1),
    }


# ----------------------------------------------------------------------------
# Deterministic parameter init (PyTorch-style uniform(-1/sqrt(fan_in), +))
# ----------------------------------------------------------------------------
def _uniform(key, shape, fan_in):
    bound = 1.0 / np.sqrt(float(fan_in))
    return jax.random.uniform(key, shape, jnp.float32, -bound, bound)


def init_params(key):
    ks = jax.random.split(key, 10)
    p = {}
    p["conv1_w"] = _uniform(ks[0], (6, 1, 5, 5), 1 * 5 * 5)
    p["conv1_b"] = _uniform(ks[1], (6,), 1 * 5 * 5)
    p["conv2_w"] = _uniform(ks[2], (16, 6, 3, 3), 6 * 3 * 3)
    p["conv2_b"] = _uniform(ks[3], (16,), 6 * 3 * 3)
    p["fc1_w"] = _uniform(ks[4], (120, 400), 400)
    p["fc1_b"] = _uniform(ks[5], (120,), 400)
    p["fc2_w"] = _uniform(ks[6], (84, 120), 120)
    p["fc2_b"] = _uniform(ks[7], (84,), 120)
    p["fc3_w"] = _uniform(ks[8], (10, 84), 84)
    p["fc3_b"] = _uniform(ks[9], (10,), 84)
    return p


# ----------------------------------------------------------------------------
# Pure-JAX reference (matches the PyTorch module) for a correctness check.
# ----------------------------------------------------------------------------
def reference_forward(p, x):
    hp = jax.lax.Precision.HIGHEST
    y = jax.lax.conv_general_dilated(
        x, p["conv1_w"], window_strides=(2, 2), padding="VALID",
        dimension_numbers=("NCHW", "OIHW", "NCHW"), precision=hp)
    y = jnp.maximum(y + p["conv1_b"][None, :, None, None], 0.0)
    y = jax.lax.conv_general_dilated(
        y, p["conv2_w"], window_strides=(2, 2), padding="VALID",
        dimension_numbers=("NCHW", "OIHW", "NCHW"), precision=hp)
    y = jnp.maximum(y + p["conv2_b"][None, :, None, None], 0.0)
    y = y.reshape(y.shape[0], -1)                               # (C,H,W) flatten
    y = jnp.maximum(jnp.dot(y, p["fc1_w"].T, precision=hp) + p["fc1_b"], 0.0)
    y = jnp.maximum(jnp.dot(y, p["fc2_w"].T, precision=hp) + p["fc2_b"], 0.0)
    return jnp.dot(y, p["fc3_w"].T, precision=hp) + p["fc3_b"]


if __name__ == "__main__":
    key = jax.random.PRNGKey(0)
    k_x, k_p = jax.random.split(key)

    # Module implies 28x28 single-channel input (16*5*5 after two strided convs).
    x = jax.random.normal(k_x, (2, 1, 28, 28), dtype=jnp.float32)
    params = init_params(k_p)
    eff = build_kernel_params(params)        # one-time, outside jit

    fwd = jax.jit(classifier_forward)
    logits = fwd(eff, x)
    jax.block_until_ready(logits)
    assert logits.shape == (2, NUM_CLASSES), logits.shape

    ref = reference_forward(params, x)
    max_err = float(jnp.max(jnp.abs(logits - ref)))
    assert max_err < 5e-2, f"mismatch vs reference: max abs err {max_err}"

    print("KERNEL_OK")
</pallas_src>

<mosaic_0001>
module attributes {stable_mosaic.version = 11 : i64} {
  func.func @_classifier_kernel(%arg0: i32, %arg1: memref<8x784xf32, #tpu.memory_space<vmem>>, %arg2: memref<784x864xf32, #tpu.memory_space<vmem>>, %arg3: memref<1x864xf32, #tpu.memory_space<vmem>>, %arg4: memref<864x400xf32, #tpu.memory_space<vmem>>, %arg5: memref<1x400xf32, #tpu.memory_space<vmem>>, %arg6: memref<400x120xf32, #tpu.memory_space<vmem>>, %arg7: memref<1x120xf32, #tpu.memory_space<vmem>>, %arg8: memref<120x84xf32, #tpu.memory_space<vmem>>, %arg9: memref<1x84xf32, #tpu.memory_space<vmem>>, %arg10: memref<84x128xf32, #tpu.memory_space<vmem>>, %arg11: memref<1x128xf32, #tpu.memory_space<vmem>>, %arg12: memref<8x128xf32, #tpu.memory_space<vmem>>) attributes {dimension_semantics = [#tpu.dimension_semantics<parallel>], iteration_bounds = array<i64: 1>, scalar_prefetch = 0 : i64, scratch_operands = 0 : i64, tpu.core_type = #tpu.core_type<tc>, window_params = [{transform_indices = @transform_0, window_bounds = array<i64: 8, 784>}, {pipeline_mode = #tpu.pipeline_mode<synchronous>, transform_indices = @transform_1, window_bounds = array<i64: 784, 864>}, {pipeline_mode = #tpu.pipeline_mode<synchronous>, transform_indices = @transform_2, window_bounds = array<i64: 1, 864>}, {pipeline_mode = #tpu.pipeline_mode<synchronous>, transform_indices = @transform_3, window_bounds = array<i64: 864, 400>}, {pipeline_mode = #tpu.pipeline_mode<synchronous>, transform_indices = @transform_4, window_bounds = array<i64: 1, 400>}, {pipeline_mode = #tpu.pipeline_mode<synchronous>, transform_indices = @transform_5, window_bounds = array<i64: 400, 120>}, {pipeline_mode = #tpu.pipeline_mode<synchronous>, transform_indices = @transform_6, window_bounds = array<i64: 1, 120>}, {pipeline_mode = #tpu.pipeline_mode<synchronous>, transform_indices = @transform_7, window_bounds = array<i64: 120, 84>}, {pipeline_mode = #tpu.pipeline_mode<synchronous>, transform_indices = @transform_8, window_bounds = array<i64: 1, 84>}, {pipeline_mode = #tpu.pipeline_mode<synchronous>, transform_indices = @transform_9, window_bounds = array<i64: 84, 128>}, {pipeline_mode = #tpu.pipeline_mode<synchronous>, transform_indices = @transform_10, window_bounds = array<i64: 1, 128>}, {transform_indices = @transform_11, window_bounds = array<i64: 8, 128>}]} {
    %c0 = arith.constant 0 : index
    %c0_0 = arith.constant 0 : index
    %0 = vector.load %arg1[%c0, %c0_0] : memref<8x784xf32, #tpu.memory_space<vmem>>, vector<8x784xf32>
    %c0_1 = arith.constant 0 : index
    %c0_2 = arith.constant 0 : index
    %1 = vector.load %arg2[%c0_1, %c0_2] : memref<784x864xf32, #tpu.memory_space<vmem>>, vector<784x864xf32>
    %cst = arith.constant dense<0.000000e+00> : vector<8x864xf32>
    %2 = tpu.matmul %0, %1, %cst {dimension_numbers = #tpu.dot_dimension_numbers<[1], [0], [0], [1], [0, 0, 1, 1], [], []>} : vector<8x784xf32>, vector<784x864xf32>, vector<8x864xf32> -> vector<8x864xf32>
    %c0_3 = arith.constant 0 : index
    %c0_4 = arith.constant 0 : index
    %3 = vector.load %arg3[%c0_3, %c0_4] : memref<1x864xf32, #tpu.memory_space<vmem>>, vector<1x864xf32>
    %4 = vector.broadcast %3 : vector<1x864xf32> to vector<8x864xf32>
    %5 = arith.addf %2, %4 : vector<8x864xf32>
    %cst_5 = arith.constant 0.000000e+00 : f32
    %6 = vector.broadcast %cst_5 : f32 to vector<8x864xf32>
    %7 = arith.maximumf %5, %6 : vector<8x864xf32>
    %c0_6 = arith.constant 0 : index
    %c0_7 = arith.constant 0 : index
    %8 = vector.load %arg4[%c0_6, %c0_7] : memref<864x400xf32, #tpu.memory_space<vmem>>, vector<864x400xf32>
    %cst_8 = arith.constant dense<0.000000e+00> : vector<8x400xf32>
    %9 = tpu.matmul %7, %8, %cst_8 {dimension_numbers = #tpu.dot_dimension_numbers<[1], [0], [0], [1], [0, 0, 1, 1], [], []>} : vector<8x864xf32>, vector<864x400xf32>, vector<8x400xf32> -> vector<8x400xf32>
    %c0_9 = arith.constant 0 : index
    %c0_10 = arith.constant 0 : index
    %10 = vector.load %arg5[%c0_9, %c0_10] : memref<1x400xf32, #tpu.memory_space<vmem>>, vector<1x400xf32>
    %11 = vector.broadcast %10 : vector<1x400xf32> to vector<8x400xf32>
    %12 = arith.addf %9, %11 : vector<8x400xf32>
    %cst_11 = arith.constant 0.000000e+00 : f32
    %13 = vector.broadcast %cst_11 : f32 to vector<8x400xf32>
    %14 = arith.maximumf %12, %13 : vector<8x400xf32>
    %c0_12 = arith.constant 0 : index
    %c0_13 = arith.constant 0 : index
    %15 = vector.load %arg6[%c0_12, %c0_13] : memref<400x120xf32, #tpu.memory_space<vmem>>, vector<400x120xf32>
    %cst_14 = arith.constant dense<0.000000e+00> : vector<8x120xf32>
    %16 = tpu.matmul %14, %15, %cst_14 {dimension_numbers = #tpu.dot_dimension_numbers<[1], [0], [0], [1], [0, 0, 1, 1], [], []>} : vector<8x400xf32>, vector<400x120xf32>, vector<8x120xf32> -> vector<8x120xf32>
    %c0_15 = arith.constant 0 : index
    %c0_16 = arith.constant 0 : index
    %17 = vector.load %arg7[%c0_15, %c0_16] : memref<1x120xf32, #tpu.memory_space<vmem>>, vector<1x120xf32>
    %18 = vector.broadcast %17 : vector<1x120xf32> to vector<8x120xf32>
    %19 = arith.addf %16, %18 : vector<8x120xf32>
    %cst_17 = arith.constant 0.000000e+00 : f32
    %20 = vector.broadcast %cst_17 : f32 to vector<8x120xf32>
    %21 = arith.maximumf %19, %20 : vector<8x120xf32>
    %c0_18 = arith.constant 0 : index
    %c0_19 = arith.constant 0 : index
    %22 = vector.load %arg8[%c0_18, %c0_19] : memref<120x84xf32, #tpu.memory_space<vmem>>, vector<120x84xf32>
    %cst_20 = arith.constant dense<0.000000e+00> : vector<8x84xf32>
    %23 = tpu.matmul %21, %22, %cst_20 {dimension_numbers = #tpu.dot_dimension_numbers<[1], [0], [0], [1], [0, 0, 1, 1], [], []>} : vector<8x120xf32>, vector<120x84xf32>, vector<8x84xf32> -> vector<8x84xf32>
    %c0_21 = arith.constant 0 : index
    %c0_22 = arith.constant 0 : index
    %24 = vector.load %arg9[%c0_21, %c0_22] : memref<1x84xf32, #tpu.memory_space<vmem>>, vector<1x84xf32>
    %25 = vector.broadcast %24 : vector<1x84xf32> to vector<8x84xf32>
    %26 = arith.addf %23, %25 : vector<8x84xf32>
    %cst_23 = arith.constant 0.000000e+00 : f32
    %27 = vector.broadcast %cst_23 : f32 to vector<8x84xf32>
    %28 = arith.maximumf %26, %27 : vector<8x84xf32>
    %c0_24 = arith.constant 0 : index
    %c0_25 = arith.constant 0 : index
    %29 = vector.load %arg10[%c0_24, %c0_25] : memref<84x128xf32, #tpu.memory_space<vmem>>, vector<84x128xf32>
    %cst_26 = arith.constant dense<0.000000e+00> : vector<8x128xf32>
    %30 = tpu.matmul %28, %29, %cst_26 {dimension_numbers = #tpu.dot_dimension_numbers<[1], [0], [0], [1], [0, 0, 1, 1], [], []>} : vector<8x84xf32>, vector<84x128xf32>, vector<8x128xf32> -> vector<8x128xf32>
    %c0_27 = arith.constant 0 : index
    %c0_28 = arith.constant 0 : index
    %31 = vector.load %arg11[%c0_27, %c0_28] : memref<1x128xf32, #tpu.memory_space<vmem>>, vector<1x128xf32>
    %32 = vector.broadcast %31 : vector<1x128xf32> to vector<8x128xf32>
    %33 = arith.addf %30, %32 : vector<8x128xf32>
    %c0_29 = arith.constant 0 : index
    %c0_30 = arith.constant 0 : index
    %34 = vector.load %arg12[%c0_29, %c0_30] : memref<8x128xf32, #tpu.memory_space<vmem>>, vector<8x128xf32>
    tpu.vector_store %arg12[%c0_29, %c0_30], %33 {strides = array<i32>} : memref<8x128xf32, #tpu.memory_space<vmem>>, vector<8x128xf32>,
    return
  }
  func.func @transform_0(%arg0: i32) -> (i32, i32) {
    %c0_i32 = arith.constant 0 : i32
    %c0_i32_0 = arith.constant 0 : i32
    return %arg0, %c0_i32 : i32, i32
  }
  func.func @transform_1(%arg0: i32) -> (i32, i32) {
    %c0_i32 = arith.constant 0 : i32
    %c0_i32_0 = arith.constant 0 : i32
    %c0_i32_1 = arith.constant 0 : i32
    return %c0_i32, %c0_i32_0 : i32, i32
  }
  func.func @transform_2(%arg0: i32) -> (i32, i32) {
    %c0_i32 = arith.constant 0 : i32
    %c0_i32_0 = arith.constant 0 : i32
    %c0_i32_1 = arith.constant 0 : i32
    return %c0_i32, %c0_i32_0 : i32, i32
  }
  func.func @transform_3(%arg0: i32) -> (i32, i32) {
    %c0_i32 = arith.constant 0 : i32
    %c0_i32_0 = arith.constant 0 : i32
    %c0_i32_1 = arith.constant 0 : i32
    return %c0_i32, %c0_i32_0 : i32, i32
  }
  func.func @transform_4(%arg0: i32) -> (i32, i32) {
    %c0_i32 = arith.constant 0 : i32
    %c0_i32_0 = arith.constant 0 : i32
    %c0_i32_1 = arith.constant 0 : i32
    return %c0_i32, %c0_i32_0 : i32, i32
  }
  func.func @transform_5(%arg0: i32) -> (i32, i32) {
    %c0_i32 = arith.constant 0 : i32
    %c0_i32_0 = arith.constant 0 : i32
    %c0_i32_1 = arith.constant 0 : i32
    return %c0_i32, %c0_i32_0 : i32, i32
  }
  func.func @transform_6(%arg0: i32) -> (i32, i32) {
    %c0_i32 = arith.constant 0 : i32
    %c0_i32_0 = arith.constant 0 : i32
    %c0_i32_1 = arith.constant 0 : i32
    return %c0_i32, %c0_i32_0 : i32, i32
  }
  func.func @transform_7(%arg0: i32) -> (i32, i32) {
    %c0_i32 = arith.constant 0 : i32
    %c0_i32_0 = arith.constant 0 : i32
    %c0_i32_1 = arith.constant 0 : i32
    return %c0_i32, %c0_i32_0 : i32, i32
  }
  func.func @transform_8(%arg0: i32) -> (i32, i32) {
    %c0_i32 = arith.constant 0 : i32
    %c0_i32_0 = arith.constant 0 : i32
    %c0_i32_1 = arith.constant 0 : i32
    return %c0_i32, %c0_i32_0 : i32, i32
  }
  func.func @transform_9(%arg0: i32) -> (i32, i32) {
    %c0_i32 = arith.constant 0 : i32
    %c0_i32_0 = arith.constant 0 : i32
    %c0_i32_1 = arith.constant 0 : i32
    return %c0_i32, %c0_i32_0 : i32, i32
  }
  func.func @transform_10(%arg0: i32) -> (i32, i32) {
    %c0_i32 = arith.constant 0 : i32
    %c0_i32_0 = arith.constant 0 : i32
    %c0_i32_1 = arith.constant 0 : i32
    return %c0_i32, %c0_i32_0 : i32, i32
  }
  func.func @transform_11(%arg0: i32) -> (i32, i32) {
    %c0_i32 = arith.constant 0 : i32
    %c0_i32_0 = arith.constant 0 : i32
    return %arg0, %c0_i32 : i32, i32
  }
}

</mosaic_0001>

<llo_original>
// kernel: classifier_forward.1
$region0: #{classifier_forward.1}
  #allocation0 [shape = 'u32[]', space=smem, size = 0x4, offset = 0x4, fixed_abs, tag = 'smem constant byte address 0x4 - core index']
  #allocation1 [shape = 'u32[72,128]{1,0:T(1,128)}', space=vmem, size = 0x9000, scoped, tag = 'internal scratch']
  %s0 = inlined_call_operand.vmem [shape: f32[8,784], index: 0, kind: input, shape index: {}]
  %s1 = inlined_call_operand.vmem [shape: f32[784,864], index: 1, kind: input, shape index: {}]
  %s2 = inlined_call_operand.vmem [shape: f32[1,864], index: 2, kind: input, shape index: {}]
  %s3 = inlined_call_operand.vmem [shape: f32[864,400], index: 3, kind: input, shape index: {}]
  %s4 = inlined_call_operand.vmem [shape: f32[1,400], index: 4, kind: input, shape index: {}]
  %s5 = inlined_call_operand.vmem [shape: f32[400,120], index: 5, kind: input, shape index: {}]
  %s6 = inlined_call_operand.vmem [shape: f32[1,120], index: 6, kind: input, shape index: {}]
  %s7 = inlined_call_operand.vmem [shape: f32[120,84], index: 7, kind: input, shape index: {}]
  %s8 = inlined_call_operand.vmem [shape: f32[1,84], index: 8, kind: input, shape index: {}]
  %s9 = inlined_call_operand.vmem [shape: f32[84,128], index: 9, kind: input, shape index: {}]
  %s10 = inlined_call_operand.vmem [shape: f32[1,128], index: 10, kind: input, shape index: {}]
  %s11 = inlined_call_operand.vmem [shape: f32[8,128], index: 11, kind: output, shape index: {}]
  %s12 = sld [smem:[#allocation0]]
  $region54: #{classifier_forward.1} parent=0
    _
  %s14 = ssub.s32 1, %s12
  %s15 = scalar_select 0, %s14, %s12
  // Predicated region
  $region2: #{classifier_forward.1} parent=0 // pred_check
    _
  $region3: #{classifier_forward.1} parent=0 // pred_check_branch
    %17 = sbr.rel (0) target = $region5
  $region4: #{classifier_forward.1} parent=0 // pred_region
    _
  $region5: #{classifier_forward.1} parent=0 // pred_fallthru
    _
  // Predicated region
  $region6: #{classifier_forward.1} parent=0 // pred_check
    _
  $region7: #{classifier_forward.1} parent=0 // pred_check_branch
    %19 = sbr.rel (0) target = $region9
  $region8: #{classifier_forward.1} parent=0 // pred_region
    _
  $region9: #{classifier_forward.1} parent=0 // pred_fallthru
    _
  // Predicated region
  $region10: #{classifier_forward.1} parent=0 // pred_check
    _
  $region11: #{classifier_forward.1} parent=0 // pred_check_branch
    %21 = sbr.rel (0) target = $region13
  $region12: #{classifier_forward.1} parent=0 // pred_region
    _
  $region13: #{classifier_forward.1} parent=0 // pred_fallthru
    _
  // Predicated region
  $region14: #{classifier_forward.1} parent=0 // pred_check
    _
  $region15: #{classifier_forward.1} parent=0 // pred_check_branch
    %23 = sbr.rel (0) target = $region17
  $region16: #{classifier_forward.1} parent=0 // pred_region
    _
  $region17: #{classifier_forward.1} parent=0 // pred_fallthru
    _
  // Predicated region
  $region18: #{classifier_forward.1} parent=0 // pred_check
    _
  $region19: #{classifier_forward.1} parent=0 // pred_check_branch
    %25 = sbr.rel (0) target = $region21
  $region20: #{classifier_forward.1} parent=0 // pred_region
    _
  $region21: #{classifier_forward.1} parent=0 // pred_fallthru
    _
  // Predicated region
  $region22: #{classifier_forward.1} parent=0 // pred_check
    _
  $region23: #{classifier_forward.1} parent=0 // pred_check_branch
    %27 = sbr.rel (0) target = $region25
  $region24: #{classifier_forward.1} parent=0 // pred_region
    _
  $region25: #{classifier_forward.1} parent=0 // pred_fallthru
    _
  // Predicated region
  $region26: #{classifier_forward.1} parent=0 // pred_check
    _
  $region27: #{classifier_forward.1} parent=0 // pred_check_branch
    %29 = sbr.rel (0) target = $region29
  $region28: #{classifier_forward.1} parent=0 // pred_region
    _
  $region29: #{classifier_forward.1} parent=0 // pred_fallthru
    _
  // Predicated region
  $region30: #{classifier_forward.1} parent=0 // pred_check
    _
  $region31: #{classifier_forward.1} parent=0 // pred_check_branch
    %31 = sbr.rel (0) target = $region33
  $region32: #{classifier_forward.1} parent=0 // pred_region
    _
  $region33: #{classifier_forward.1} parent=0 // pred_fallthru
    _
  // Predicated region
  $region34: #{classifier_forward.1} parent=0 // pred_check
    _
  $region35: #{classifier_forward.1} parent=0 // pred_check_branch
    %33 = sbr.rel (0) target = $region37
  $region36: #{classifier_forward.1} parent=0 // pred_region
    _
  $region37: #{classifier_forward.1} parent=0 // pred_fallthru
    _
  // Predicated region
  $region38: #{classifier_forward.1} parent=0 // pred_check
    _
  $region39: #{classifier_forward.1} parent=0 // pred_check_branch
    %35 = sbr.rel (0) target = $region41
  $region40: #{classifier_forward.1} parent=0 // pred_region
    _
  $region41: #{classifier_forward.1} parent=0 // pred_fallthru
    _
  // Predicated region
  $region42: #{classifier_forward.1} parent=0 // pred_check
    _
  $region43: #{classifier_forward.1} parent=0 // pred_check_branch
    %37 = sbr.rel (0) target = $region45
  $region44: #{classifier_forward.1} parent=0 // pred_region
    _
  $region45: #{classifier_forward.1} parent=0 // pred_fallthru
    _
  %v38 = vld [vmem:[%s0] sm:$0xff]
  %v39 = vld [vmem:[%s0 + $0x8] sm:$0xff]
  %v40 = vld [vmem:[%s0 + $0x10] sm:$0xff]
  %v41 = vld [vmem:[%s0 + $0x18] sm:$0xff]
  %v42 = vld [vmem:[%s0 + $0x20] sm:$0xff]
  %v43 = vld [vmem:[%s0 + $0x28] sm:$0xff]
  %v44 = vld [vmem:[%s0 + $0x30] sm:$0xff]
  %v45 = vld [vmem:[%s1] sm:$0xff]
  %v46 = vld [vmem:[%s1 + $0x8] sm:$0xff]
  %v47 = vld [vmem:[%s1 + $0x10] sm:$0xff]
  %v48 = vld [vmem:[%s1 + $0x18] sm:$0xff]
  %v49 = vld [vmem:[%s1 + $0x20] sm:$0xff]
  %v50 = vld [vmem:[%s1 + $0x28] sm:$0xff]
  %v51 = vld [vmem:[%s1 + $0x30] sm:$0xff]
  %v52 = vld [vmem:[%s1 + $0x38] sm:$0xff]
  %v53 = vld [vmem:[%s1 + $0x40] sm:$0xff]
  %v54 = vld [vmem:[%s1 + $0x48] sm:$0xff]
  %v55 = vld [vmem:[%s1 + $0x50] sm:$0xff]
  %v56 = vld [vmem:[%s1 + $0x58] sm:$0xff]
  %v57 = vld [vmem:[%s1 + $0x60] sm:$0xff]
  %v58 = vld [vmem:[%s1 + $0x68] sm:$0xff]
  %v59 = vld [vmem:[%s1 + $0x70] sm:$0xff]
  %v60 = vld [vmem:[%s1 + $0x78] sm:$0xff]
  %v61 = vld [vmem:[%s1 + $0x80] sm:$0xff]
  %v62 = vld [vmem:[%s1 + $0x88] sm:$0xff]
  %v63 = vld [vmem:[%s1 + $0x90] sm:$0xff]
  %v64 = vld [vmem:[%s1 + $0x98] sm:$0xff]
  %v65 = vld [vmem:[%s1 + $0xa0] sm:$0xff]
  %v66 = vld [vmem:[%s1 + $0xa8] sm:$0xff]
  %v67 = vld [vmem:[%s1 + $0xb0] sm:$0xff]
  %v68 = vld [vmem:[%s1 + $0xb8] sm:$0xff]
  %v69 = vld [vmem:[%s1 + $0xc0] sm:$0xff]
  %v70 = vld [vmem:[%s1 + $0xc8] sm:$0xff]
  %v71 = vld [vmem:[%s1 + $0xd0] sm:$0xff]
  %v72 = vld [vmem:[%s1 + $0xd8] sm:$0xff]
  %v73 = vld [vmem:[%s1 + $0xe0] sm:$0xff]
  %v74 = vld [vmem:[%s1 + $0xe8] sm:$0xff]
  %v75 = vld [vmem:[%s1 + $0xf0] sm:$0xff]
  %v76 = vld [vmem:[%s1 + $0xf8] sm:$0xff]
  %v77 = vld [vmem:[%s1 + $0x100] sm:$0xff]
  %v78 = vld [vmem:[%s1 + $0x108] sm:$0xff]
  %v79 = vld [vmem:[%s1 + $0x110] sm:$0xff]
  %v80 = vld [vmem:[%s1 + $0x118] sm:$0xff]
  %v81 = vld [vmem:[%s1 + $0x120] sm:$0xff]
  %v82 = vld [vmem:[%s1 + $0x128] sm:$0xff]
  %v83 = vld [vmem:[%s1 + $0x130] sm:$0xff]
  %v84 = vld [vmem:[%s1 + $0x138] sm:$0xff]
  %v85 = vld [vmem:[%s1 + $0x140] sm:$0xff]
  %v86 = vld [vmem:[%s1 + $0x148] sm:$0xff]
  %v87 = vld [vmem:[%s1 + $0x150] sm:$0xff]
  %v88 = vld [vmem:[%s1 + $0x158] sm:$0xff]
  %v89 = vld [vmem:[%s1 + $0x160] sm:$0xff]
  %v90 = vld [vmem:[%s1 + $0x168] sm:$0xff]
  %v91 = vld [vmem:[%s1 + $0x170] sm:$0xff]
  %v92 = vld [vmem:[%s1 + $0x178] sm:$0xff]
  %v93 = vld [vmem:[%s1 + $0x180] sm:$0xff]
  %v94 = vld [vmem:[%s1 + $0x188] sm:$0xff]
  %v95 = vld [vmem:[%s1 + $0x190] sm:$0xff]
  %v96 = vld [vmem:[%s1 + $0x198] sm:$0xff]
  %v97 = vld [vmem:[%s1 + $0x1a0] sm:$0xff]
  %v98 = vld [vmem:[%s1 + $0x1a8] sm:$0xff]
  %v99 = vld [vmem:[%s1 + $0x1b0] sm:$0xff]
  %v100 = vld [vmem:[%s1 + $0x1b8] sm:$0xff]
  %v101 = vld [vmem:[%s1 + $0x1c0] sm:$0xff]
  %v102 = vld [vmem:[%s1 + $0x1c8] sm:$0xff]
  %v103 = vld [vmem:[%s1 + $0x1d0] sm:$0xff]
  %v104 = vld [vmem:[%s1 + $0x1d8] sm:$0xff]
  %v105 = vld [vmem:[%s1 + $0x1e0] sm:$0xff]
  %v106 = vld [vmem:[%s1 + $0x1e8] sm:$0xff]
  %v107 = vld [vmem:[%s1 + $0x1f0] sm:$0xff]
  %v108 = vld [vmem:[%s1 + $0x1f8] sm:$0xff]
  %v109 = vld [vmem:[%s1 + $0x200] sm:$0xff]
  %v110 = vld [vmem:[%s1 + $0x208] sm:$0xff]
  %v111 = vld [vmem:[%s1 + $0x210] sm:$0xff]
  %v112 = vld [vmem:[%s1 + $0x218] sm:$0xff]
  %v113 = vld [vmem:[%s1 + $0x220] sm:$0xff]
  %v114 = vld [vmem:[%s1 + $0x228] sm:$0xff]
  %v115 = vld [vmem:[%s1 + $0x230] sm:$0xff]
  %v116 = vld [vmem:[%s1 + $0x238] sm:$0xff]
  %v117 = vld [vmem:[%s1 + $0x240] sm:$0xff]
  %v118 = vld [vmem:[%s1 + $0x248] sm:$0xff]
  %v119 = vld [vmem:[%s1 + $0x250] sm:$0xff]
  %v120 = vld [vmem:[%s1 + $0x258] sm:$0xff]
  %v121 = vld [vmem:[%s1 + $0x260] sm:$0xff]
  %v122 = vld [vmem:[%s1 + $0x268] sm:$0xff]
  %v123 = vld [vmem:[%s1 + $0x270] sm:$0xff]
  %v124 = vld [vmem:[%s1 + $0x278] sm:$0xff]
  %v125 = vld [vmem:[%s1 + $0x280] sm:$0xff]
  %v126 = vld [vmem:[%s1 + $0x288] sm:$0xff]
  %v127 = vld [vmem:[%s1 + $0x290] sm:$0xff]
  %v128 = vld [vmem:[%s1 + $0x298] sm:$0xff]
  %v129 = vld [vmem:[%s1 + $0x2a0] sm:$0xff]
  %v130 = vld [vmem:[%s1 + $0x2a8] sm:$0xff]
  %v131 = vld [vmem:[%s1 + $0x2b0] sm:$0xff]
  %v132 = vld [vmem:[%s1 + $0x2b8] sm:$0xff]
  %v133 = vld [vmem:[%s1 + $0x2c0] sm:$0xff]
  %v134 = vld [vmem:[%s1 + $0x2c8] sm:$0xff]
  %v135 = vld [vmem:[%s1 + $0x2d0] sm:$0xff]
  %v136 = vld [vmem:[%s1 + $0x2d8] sm:$0xff]
  %v137 = vld [vmem:[%s1 + $0x2e0] sm:$0xff]
  %v138 = vld [vmem:[%s1 + $0x2e8] sm:$0xff]
  %v139 = vld [vmem:[%s1 + $0x2f0] sm:$0xff]
  %v140 = vld [vmem:[%s1 + $0x2f8] sm:$0xff]
  %v141 = vld [vmem:[%s1 + $0x300] sm:$0xff]
  %v142 = vld [vmem:[%s1 + $0x308] sm:$0xff]
  %v143 = vld [vmem:[%s1 + $0x310] sm:$0xff]
  %v144 = vld [vmem:[%s1 + $0x318] sm:$0xff]
  %v145 = vld [vmem:[%s1 + $0x320] sm:$0xff]
  %v146 = vld [vmem:[%s1 + $0x328] sm:$0xff]
  %v147 = vld [vmem:[%s1 + $0x330] sm:$0xff]
  %v148 = vld [vmem:[%s1 + $0x338] sm:$0xff]
  %v149 = vld [vmem:[%s1 + $0x340] sm:$0xff]
  %v150 = vld [vmem:[%s1 + $0x348] sm:$0xff]
  %v151 = vld [vmem:[%s1 + $0x350] sm:$0xff]
  %v152 = vld [vmem:[%s1 + $0x358] sm:$0xff]
  %v153 = vld [vmem:[%s1 + $0x360] sm:$0xff]
  %v154 = vld [vmem:[%s1 + $0x368] sm:$0xff]
  %v155 = vld [vmem:[%s1 + $0x370] sm:$0xff]
  %v156 = vld [vmem:[%s1 + $0x378] sm:$0xff]
  %v157 = vld [vmem:[%s1 + $0x380] sm:$0xff]
  %v158 = vld [vmem:[%s1 + $0x388] sm:$0xff]
  %v159 = vld [vmem:[%s1 + $0x390] sm:$0xff]
  %v160 = vld [vmem:[%s1 + $0x398] sm:$0xff]
  %v161 = vld [vmem:[%s1 + $0x3a0] sm:$0xff]
  %v162 = vld [vmem:[%s1 + $0x3a8] sm:$0xff]
  %v163 = vld [vmem:[%s1 + $0x3b0] sm:$0xff]
  %v164 = vld [vmem:[%s1 + $0x3b8] sm:$0xff]
  %v165 = vld [vmem:[%s1 + $0x3c0] sm:$0xff]
  %v166 = vld [vmem:[%s1 + $0x3c8] sm:$0xff]
  %v167 = vld [vmem:[%s1 + $0x3d0] sm:$0xff]
  %v168 = vld [vmem:[%s1 + $0x3d8] sm:$0xff]
  %v169 = vld [vmem:[%s1 + $0x3e0] sm:$0xff]
  %v170 = vld [vmem:[%s1 + $0x3e8] sm:$0xff]
  %v171 = vld [vmem:[%s1 + $0x3f0] sm:$0xff]
  %v172 = vld [vmem:[%s1 + $0x3f8] sm:$0xff]
  %v173 = vld [vmem:[%s1 + $0x400] sm:$0xff]
  %v174 = vld [vmem:[%s1 + $0x408] sm:$0xff]
  %v175 = vld [vmem:[%s1 + $0x410] sm:$0xff]
  %v176 = vld [vmem:[%s1 + $0x418] sm:$0xff]
  %v177 = vld [vmem:[%s1 + $0x420] sm:$0xff]
  %v178 = vld [vmem:[%s1 + $0x428] sm:$0xff]
  %v179 = vld [vmem:[%s1 + $0x430] sm:$0xff]
  %v180 = vld [vmem:[%s1 + $0x438] sm:$0xff]
  %v181 = vld [vmem:[%s1 + $0x440] sm:$0xff]
  %v182 = vld [vmem:[%s1 + $0x448] sm:$0xff]
  %v183 = vld [vmem:[%s1 + $0x450] sm:$0xff]
  %v184 = vld [vmem:[%s1 + $0x458] sm:$0xff]
  %v185 = vld [vmem:[%s1 + $0x460] sm:$0xff]
  %v186 = vld [vmem:[%s1 + $0x468] sm:$0xff]
  %v187 = vld [vmem:[%s1 + $0x470] sm:$0xff]
  %v188 = vld [vmem:[%s1 + $0x478] sm:$0xff]
  %v189 = vld [vmem:[%s1 + $0x480] sm:$0xff]
  %v190 = vld [vmem:[%s1 + $0x488] sm:$0xff]
  %v191 = vld [vmem:[%s1 + $0x490] sm:$0xff]
  %v192 = vld [vmem:[%s1 + $0x498] sm:$0xff]
  %v193 = vld [vmem:[%s1 + $0x4a0] sm:$0xff]
  %v194 = vld [vmem:[%s1 + $0x4a8] sm:$0xff]
  %v195 = vld [vmem:[%s1 + $0x4b0] sm:$0xff]
  %v196 = vld [vmem:[%s1 + $0x4b8] sm:$0xff]
  %v197 = vld [vmem:[%s1 + $0x4c0] sm:$0xff]
  %v198 = vld [vmem:[%s1 + $0x4c8] sm:$0xff]
  %v199 = vld [vmem:[%s1 + $0x4d0] sm:$0xff]
  %v200 = vld [vmem:[%s1 + $0x4d8] sm:$0xff]
  %v201 = vld [vmem:[%s1 + $0x4e0] sm:$0xff]
  %v202 = vld [vmem:[%s1 + $0x4e8] sm:$0xff]
  %v203 = vld [vmem:[%s1 + $0x4f0] sm:$0xff]
  %v204 = vld [vmem:[%s1 + $0x4f8] sm:$0xff]
  %v205 = vld [vmem:[%s1 + $0x500] sm:$0xff]
  %v206 = vld [vmem:[%s1 + $0x508] sm:$0xff]
  %v207 = vld [vmem:[%s1 + $0x510] sm:$0xff]
  %v208 = vld [vmem:[%s1 + $0x518] sm:$0xff]
  %v209 = vld [vmem:[%s1 + $0x520] sm:$0xff]
  %v210 = vld [vmem:[%s1 + $0x528] sm:$0xff]
  %v211 = vld [vmem:[%s1 + $0x530] sm:$0xff]
  %v212 = vld [vmem:[%s1 + $0x538] sm:$0xff]
  %v213 = vld [vmem:[%s1 + $0x540] sm:$0xff]
  %v214 = vld [vmem:[%s1 + $0x548] sm:$0xff]
  %v215 = vld [vmem:[%s1 + $0x550] sm:$0xff]
  %v216 = vld [vmem:[%s1 + $0x558] sm:$0xff]
  %v217 = vld [vmem:[%s1 + $0x560] sm:$0xff]
  %v218 = vld [vmem:[%s1 + $0x568] sm:$0xff]
  %v219 = vld [vmem:[%s1 + $0x570] sm:$0xff]
  %v220 = vld [vmem:[%s1 + $0x578] sm:$0xff]
  %v221 = vld [vmem:[%s1 + $0x580] sm:$0xff]
  %v222 = vld [vmem:[%s1 + $0x588] sm:$0xff]
  %v223 = vld [vmem:[%s1 + $0x590] sm:$0xff]
  %v224 = vld [vmem:[%s1 + $0x598] sm:$0xff]
  %v225 = vld [vmem:[%s1 + $0x5a0] sm:$0xff]
  %v226 = vld [vmem:[%s1 + $0x5a8] sm:$0xff]
  %v227 = vld [vmem:[%s1 + $0x5b0] sm:$0xff]
  %v228 = vld [vmem:[%s1 + $0x5b8] sm:$0xff]
  %v229 = vld [vmem:[%s1 + $0x5c0] sm:$0xff]
  %v230 = vld [vmem:[%s1 + $0x5c8] sm:$0xff]
  %v231 = vld [vmem:[%s1 + $0x5d0] sm:$0xff]
  %v232 = vld [vmem:[%s1 + $0x5d8] sm:$0xff]
  %v233 = vld [vmem:[%s1 + $0x5e0] sm:$0xff]
  %v234 = vld [vmem:[%s1 + $0x5e8] sm:$0xff]
  %v235 = vld [vmem:[%s1 + $0x5f0] sm:$0xff]
  %v236 = vld [vmem:[%s1 + $0x5f8] sm:$0xff]
  %v237 = vld [vmem:[%s1 + $0x600] sm:$0xff]
  %v238 = vld [vmem:[%s1 + $0x608] sm:$0xff]
  %v239 = vld [vmem:[%s1 + $0x610] sm:$0xff]
  %v240 = vld [vmem:[%s1 + $0x618] sm:$0xff]
  %v241 = vld [vmem:[%s1 + $0x620] sm:$0xff]
  %v242 = vld [vmem:[%s1 + $0x628] sm:$0xff]
  %v243 = vld [vmem:[%s1 + $0x630] sm:$0xff]
  %v244 = vld [vmem:[%s1 + $0x638] sm:$0xff]
  %v245 = vld [vmem:[%s1 + $0x640] sm:$0xff]
  %v246 = vld [vmem:[%s1 + $0x648] sm:$0xff]
  %v247 = vld [vmem:[%s1 + $0x650] sm:$0xff]
  %v248 = vld [vmem:[%s1 + $0x658] sm:$0xff]
  %v249 = vld [vmem:[%s1 + $0x660] sm:$0xff]
  %v250 = vld [vmem:[%s1 + $0x668] sm:$0xff]
  %v251 = vld [vmem:[%s1 + $0x670] sm:$0xff]
  %v252 = vld [vmem:[%s1 + $0x678] sm:$0xff]
  %v253 = vld [vmem:[%s1 + $0x680] sm:$0xff]
  %v254 = vld [vmem:[%s1 + $0x688] sm:$0xff]
  %v255 = vld [vmem:[%s1 + $0x690] sm:$0xff]
  %v256 = vld [vmem:[%s1 + $0x698] sm:$0xff]
  %v257 = vld [vmem:[%s1 + $0x6a0] sm:$0xff]
  %v258 = vld [vmem:[%s1 + $0x6a8] sm:$0xff]
  %v259 = vld [vmem:[%s1 + $0x6b0] sm:$0xff]
  %v260 = vld [vmem:[%s1 + $0x6b8] sm:$0xff]
  %v261 = vld [vmem:[%s1 + $0x6c0] sm:$0xff]
  %v262 = vld [vmem:[%s1 + $0x6c8] sm:$0xff]
  %v263 = vld [vmem:[%s1 + $0x6d0] sm:$0xff]
  %v264 = vld [vmem:[%s1 + $0x6d8] sm:$0xff]
  %v265 = vld [vmem:[%s1 + $0x6e0] sm:$0xff]
  %v266 = vld [vmem:[%s1 + $0x6e8] sm:$0xff]
  %v267 = vld [vmem:[%s1 + $0x6f0] sm:$0xff]
  %v268 = vld [vmem:[%s1 + $0x6f8] sm:$0xff]
  %v269 = vld [vmem:[%s1 + $0x700] sm:$0xff]
  %v270 = vld [vmem:[%s1 + $0x708] sm:$0xff]
  %v271 = vld [vmem:[%s1 + $0x710] sm:$0xff]
  %v272 = vld [vmem:[%s1 + $0x718] sm:$0xff]
  %v273 = vld [vmem:[%s1 + $0x720] sm:$0xff]
  %v274 = vld [vmem:[%s1 + $0x728] sm:$0xff]
  %v275 = vld [vmem:[%s1 + $0x730] sm:$0xff]
  %v276 = vld [vmem:[%s1 + $0x738] sm:$0xff]
  %v277 = vld [vmem:[%s1 + $0x740] sm:$0xff]
  %v278 = vld [vmem:[%s1 + $0x748] sm:$0xff]
  %v279 = vld [vmem:[%s1 + $0x750] sm:$0xff]
  %v280 = vld [vmem:[%s1 + $0x758] sm:$0xff]
  %v281 = vld [vmem:[%s1 + $0x760] sm:$0xff]
  %v282 = vld [vmem:[%s1 + $0x768] sm:$0xff]
  %v283 = vld [vmem:[%s1 + $0x770] sm:$0xff]
  %v284 = vld [vmem:[%s1 + $0x778] sm:$0xff]
  %v285 = vld [vmem:[%s1 + $0x780] sm:$0xff]
  %v286 = vld [vmem:[%s1 + $0x788] sm:$0xff]
  %v287 = vld [vmem:[%s1 + $0x790] sm:$0xff]
  %v288 = vld [vmem:[%s1 + $0x798] sm:$0xff]
  %v289 = vld [vmem:[%s1 + $0x7a0] sm:$0xff]
  %v290 = vld [vmem:[%s1 + $0x7a8] sm:$0xff]
  %v291 = vld [vmem:[%s1 + $0x7b0] sm:$0xff]
  %v292 = vld [vmem:[%s1 + $0x7b8] sm:$0xff]
  %v293 = vld [vmem:[%s1 + $0x7c0] sm:$0xff]
  %v294 = vld [vmem:[%s1 + $0x7c8] sm:$0xff]
  %v295 = vld [vmem:[%s1 + $0x7d0] sm:$0xff]
  %v296 = vld [vmem:[%s1 + $0x7d8] sm:$0xff]
  %v297 = vld [vmem:[%s1 + $0x7e0] sm:$0xff]
  %v298 = vld [vmem:[%s1 + $0x7e8] sm:$0xff]
  %v299 = vld [vmem:[%s1 + $0x7f0] sm:$0xff]
  %v300 = vld [vmem:[%s1 + $0x7f8] sm:$0xff]
  %v301 = vld [vmem:[%s1 + $0x800] sm:$0xff]
  %v302 = vld [vmem:[%s1 + $0x808] sm:$0xff]
  %v303 = vld [vmem:[%s1 + $0x810] sm:$0xff]
  %v304 = vld [vmem:[%s1 + $0x818] sm:$0xff]
  %v305 = vld [vmem:[%s1 + $0x820] sm:$0xff]
  %v306 = vld [vmem:[%s1 + $0x828] sm:$0xff]
  %v307 = vld [vmem:[%s1 + $0x830] sm:$0xff]
  %v308 = vld [vmem:[%s1 + $0x838] sm:$0xff]
  %v309 = vld [vmem:[%s1 + $0x840] sm:$0xff]
  %v310 = vld [vmem:[%s1 + $0x848] sm:$0xff]
  %v311 = vld [vmem:[%s1 + $0x850] sm:$0xff]
  %v312 = vld [vmem:[%s1 + $0x858] sm:$0xff]
  %v313 = vld [vmem:[%s1 + $0x860] sm:$0xff]
  %v314 = vld [vmem:[%s1 + $0x868] sm:$0xff]
  %v315 = vld [vmem:[%s1 + $0x870] sm:$0xff]
  %v316 = vld [vmem:[%s1 + $0x878] sm:$0xff]
  %v317 = vld [vmem:[%s1 + $0x880] sm:$0xff]
  %v318 = vld [vmem:[%s1 + $0x888] sm:$0xff]
  %v319 = vld [vmem:[%s1 + $0x890] sm:$0xff]
  %v320 = vld [vmem:[%s1 + $0x898] sm:$0xff]
  %v321 = vld [vmem:[%s1 + $0x8a0] sm:$0xff]
  %v322 = vld [vmem:[%s1 + $0x8a8] sm:$0xff]
  %v323 = vld [vmem:[%s1 + $0x8b0] sm:$0xff]
  %v324 = vld [vmem:[%s1 + $0x8b8] sm:$0xff]
  %v325 = vld [vmem:[%s1 + $0x8c0] sm:$0xff]
  %v326 = vld [vmem:[%s1 + $0x8c8] sm:$0xff]
  %v327 = vld [vmem:[%s1 + $0x8d0] sm:$0xff]
  %v328 = vld [vmem:[%s1 + $0x8d8] sm:$0xff]
  %v329 = vld [vmem:[%s1 + $0x8e0] sm:$0xff]
  %v330 = vld [vmem:[%s1 + $0x8e8] sm:$0xff]
  %v331 = vld [vmem:[%s1 + $0x8f0] sm:$0xff]
  %v332 = vld [vmem:[%s1 + $0x8f8] sm:$0xff]
  %v333 = vld [vmem:[%s1 + $0x900] sm:$0xff]
  %v334 = vld [vmem:[%s1 + $0x908] sm:$0xff]
  %v335 = vld [vmem:[%s1 + $0x910] sm:$0xff]
  %v336 = vld [vmem:[%s1 + $0x918] sm:$0xff]
  %v337 = vld [vmem:[%s1 + $0x920] sm:$0xff]
  %v338 = vld [vmem:[%s1 + $0x928] sm:$0xff]
  %v339 = vld [vmem:[%s1 + $0x930] sm:$0xff]
  %v340 = vld [vmem:[%s1 + $0x938] sm:$0xff]
  %v341 = vld [vmem:[%s1 + $0x940] sm:$0xff]
  %v342 = vld [vmem:[%s1 + $0x948] sm:$0xff]
  %v343 = vld [vmem:[%s1 + $0x950] sm:$0xff]
  %v344 = vld [vmem:[%s1 + $0x958] sm:$0xff]
  %v345 = vld [vmem:[%s1 + $0x960] sm:$0xff]
  %v346 = vld [vmem:[%s1 + $0x968] sm:$0xff]
  %v347 = vld [vmem:[%s1 + $0x970] sm:$0xff]
  %v348 = vld [vmem:[%s1 + $0x978] sm:$0xff]
  %v349 = vld [vmem:[%s1 + $0x980] sm:$0xff]
  %v350 = vld [vmem:[%s1 + $0x988] sm:$0xff]
  %v351 = vld [vmem:[%s1 + $0x990] sm:$0xff]
  %v352 = vld [vmem:[%s1 + $0x998] sm:$0xff]
  %v353 = vld [vmem:[%s1 + $0x9a0] sm:$0xff]
  %v354 = vld [vmem:[%s1 + $0x9a8] sm:$0xff]
  %v355 = vld [vmem:[%s1 + $0x9b0] sm:$0xff]
  %v356 = vld [vmem:[%s1 + $0x9b8] sm:$0xff]
  %v357 = vld [vmem:[%s1 + $0x9c0] sm:$0xff]
  %v358 = vld [vmem:[%s1 + $0x9c8] sm:$0xff]
  %v359 = vld [vmem:[%s1 + $0x9d0] sm:$0xff]
  %v360 = vld [vmem:[%s1 + $0x9d8] sm:$0xff]
  %v361 = vld [vmem:[%s1 + $0x9e0] sm:$0xff]
  %v362 = vld [vmem:[%s1 + $0x9e8] sm:$0xff]
  %v363 = vld [vmem:[%s1 + $0x9f0] sm:$0xff]
  %v364 = vld [vmem:[%s1 + $0x9f8] sm:$0xff]
  %v365 = vld [vmem:[%s1 + $0xa00] sm:$0xff]
  %v366 = vld [vmem:[%s1 + $0xa08] sm:$0xff]
  %v367 = vld [vmem:[%s1 + $0xa10] sm:$0xff]
  %v368 = vld [vmem:[%s1 + $0xa18] sm:$0xff]
  %v369 = vld [vmem:[%s1 + $0xa20] sm:$0xff]
  %v370 = vld [vmem:[%s1 + $0xa28] sm:$0xff]
  %v371 = vld [vmem:[%s1 + $0xa30] sm:$0xff]
  %v372 = vld [vmem:[%s1 + $0xa38] sm:$0xff]
  %v373 = vld [vmem:[%s1 + $0xa40] sm:$0xff]
  %v374 = vld [vmem:[%s1 + $0xa48] sm:$0xff]
  %v375 = vld [vmem:[%s1 + $0xa50] sm:$0xff]
  %v376 = vld [vmem:[%s1 + $0xa58] sm:$0xff]
  %v377 = vld [vmem:[%s1 + $0xa60] sm:$0xff]
  %v378 = vld [vmem:[%s1 + $0xa68] sm:$0xff]
  %v379 = vld [vmem:[%s1 + $0xa70] sm:$0xff]
  %v380 = vld [vmem:[%s1 + $0xa78] sm:$0xff]
  %v381 = vld [vmem:[%s1 + $0xa80] sm:$0xff]
  %v382 = vld [vmem:[%s1 + $0xa88] sm:$0xff]
  %v383 = vld [vmem:[%s1 + $0xa90] sm:$0xff]
  %v384 = vld [vmem:[%s1 + $0xa98] sm:$0xff]
  %v385 = vld [vmem:[%s1 + $0xaa0] sm:$0xff]
  %v386 = vld [vmem:[%s1 + $0xaa8] sm:$0xff]
  %v387 = vld [vmem:[%s1 + $0xab0] sm:$0xff]
  %v388 = vld [vmem:[%s1 + $0xab8] sm:$0xff]
  %v389 = vld [vmem:[%s1 + $0xac0] sm:$0xff]
  %v390 = vld [vmem:[%s1 + $0xac8] sm:$0xff]
  %v391 = vld [vmem:[%s1 + $0xad0] sm:$0xff]
  %v392 = vld [vmem:[%s1 + $0xad8] sm:$0xff]
  %v393 = vld [vmem:[%s1 + $0xae0] sm:$0xff]
  %v394 = vld [vmem:[%s1 + $0xae8] sm:$0xff]
  %v395 = vld [vmem:[%s1 + $0xaf0] sm:$0xff]
  %v396 = vld [vmem:[%s1 + $0xaf8] sm:$0xff]
  %v397 = vld [vmem:[%s1 + $0xb00] sm:$0xff]
  %v398 = vld [vmem:[%s1 + $0xb08] sm:$0xff]
  %v399 = vld [vmem:[%s1 + $0xb10] sm:$0xff]
  %v400 = vld [vmem:[%s1 + $0xb18] sm:$0xff]
  %v401 = vld [vmem:[%s1 + $0xb20] sm:$0xff]
  %v402 = vld [vmem:[%s1 + $0xb28] sm:$0xff]
  %v403 = vld [vmem:[%s1 + $0xb30] sm:$0xff]
  %v404 = vld [vmem:[%s1 + $0xb38] sm:$0xff]
  %v405 = vld [vmem:[%s1 + $0xb40] sm:$0xff]
  %v406 = vld [vmem:[%s1 + $0xb48] sm:$0xff]
  %v407 = vld [vmem:[%s1 + $0xb50] sm:$0xff]
  %v408 = vld [vmem:[%s1 + $0xb58] sm:$0xff]
  %v409 = vld [vmem:[%s1 + $0xb60] sm:$0xff]
  %v410 = vld [vmem:[%s1 + $0xb68] sm:$0xff]
  %v411 = vld [vmem:[%s1 + $0xb70] sm:$0xff]
  %v412 = vld [vmem:[%s1 + $0xb78] sm:$0xff]
  %v413 = vld [vmem:[%s1 + $0xb80] sm:$0xff]
  %v414 = vld [vmem:[%s1 + $0xb88] sm:$0xff]
  %v415 = vld [vmem:[%s1 + $0xb90] sm:$0xff]
  %v416 = vld [vmem:[%s1 + $0xb98] sm:$0xff]
  %v417 = vld [vmem:[%s1 + $0xba0] sm:$0xff]
  %v418 = vld [vmem:[%s1 + $0xba8] sm:$0xff]
  %v419 = vld [vmem:[%s1 + $0xbb0] sm:$0xff]
  %v420 = vld [vmem:[%s1 + $0xbb8] sm:$0xff]
  %v421 = vld [vmem:[%s1 + $0xbc0] sm:$0xff]
  %v422 = vld [vmem:[%s1 + $0xbc8] sm:$0xff]
  %v423 = vld [vmem:[%s1 + $0xbd0] sm:$0xff]
  %v424 = vld [vmem:[%s1 + $0xbd8] sm:$0xff]
  %v425 = vld [vmem:[%s1 + $0xbe0] sm:$0xff]
  %v426 = vld [vmem:[%s1 + $0xbe8] sm:$0xff]
  %v427 = vld [vmem:[%s1 + $0xbf0] sm:$0xff]
  %v428 = vld [vmem:[%s1 + $0xbf8] sm:$0xff]
  %v429 = vld [vmem:[%s1 + $0xc00] sm:$0xff]
  %v430 = vld [vmem:[%s1 + $0xc08] sm:$0xff]
  %v431 = vld [vmem:[%s1 + $0xc10] sm:$0xff]
  %v432 = vld [vmem:[%s1 + $0xc18] sm:$0xff]
  %v433 = vld [vmem:[%s1 + $0xc20] sm:$0xff]
  %v434 = vld [vmem:[%s1 + $0xc28] sm:$0xff]
  %v435 = vld [vmem:[%s1 + $0xc30] sm:$0xff]
  %v436 = vld [vmem:[%s1 + $0xc38] sm:$0xff]
  %v437 = vld [vmem:[%s1 + $0xc40] sm:$0xff]
  %v438 = vld [vmem:[%s1 + $0xc48] sm:$0xff]
  %v439 = vld [vmem:[%s1 + $0xc50] sm:$0xff]
  %v440 = vld [vmem:[%s1 + $0xc58] sm:$0xff]
  %v441 = vld [vmem:[%s1 + $0xc60] sm:$0xff]
  %v442 = vld [vmem:[%s1 + $0xc68] sm:$0xff]
  %v443 = vld [vmem:[%s1 + $0xc70] sm:$0xff]
  %v444 = vld [vmem:[%s1 + $0xc78] sm:$0xff]
  %v445 = vld [vmem:[%s1 + $0xc80] sm:$0xff]
  %v446 = vld [vmem:[%s1 + $0xc88] sm:$0xff]
  %v447 = vld [vmem:[%s1 + $0xc90] sm:$0xff]
  %v448 = vld [vmem:[%s1 + $0xc98] sm:$0xff]
  %v449 = vld [vmem:[%s1 + $0xca0] sm:$0xff]
  %v450 = vld [vmem:[%s1 + $0xca8] sm:$0xff]
  %v451 = vld [vmem:[%s1 + $0xcb0] sm:$0xff]
  %v452 = vld [vmem:[%s1 + $0xcb8] sm:$0xff]
  %v453 = vld [vmem:[%s1 + $0xcc0] sm:$0xff]
  %v454 = vld [vmem:[%s1 + $0xcc8] sm:$0xff]
  %v455 = vld [vmem:[%s1 + $0xcd0] sm:$0xff]
  %v456 = vld [vmem:[%s1 + $0xcd8] sm:$0xff]
  %v457 = vld [vmem:[%s1 + $0xce0] sm:$0xff]
  %v458 = vld [vmem:[%s1 + $0xce8] sm:$0xff]
  %v459 = vld [vmem:[%s1 + $0xcf0] sm:$0xff]
  %v460 = vld [vmem:[%s1 + $0xcf8] sm:$0xff]
  %v461 = vld [vmem:[%s1 + $0xd00] sm:$0xff]
  %v462 = vld [vmem:[%s1 + $0xd08] sm:$0xff]
  %v463 = vld [vmem:[%s1 + $0xd10] sm:$0xff]
  %v464 = vld [vmem:[%s1 + $0xd18] sm:$0xff]
  %v465 = vld [vmem:[%s1 + $0xd20] sm:$0xff]
  %v466 = vld [vmem:[%s1 + $0xd28] sm:$0xff]
  %v467 = vld [vmem:[%s1 + $0xd30] sm:$0xff]
  %v468 = vld [vmem:[%s1 + $0xd38] sm:$0xff]
  %v469 = vld [vmem:[%s1 + $0xd40] sm:$0xff]
  %v470 = vld [vmem:[%s1 + $0xd48] sm:$0xff]
  %v471 = vld [vmem:[%s1 + $0xd50] sm:$0xff]
  %v472 = vld [vmem:[%s1 + $0xd58] sm:$0xff]
  %v473 = vld [vmem:[%s1 + $0xd60] sm:$0xff]
  %v474 = vld [vmem:[%s1 + $0xd68] sm:$0xff]
  %v475 = vld [vmem:[%s1 + $0xd70] sm:$0xff]
  %v476 = vld [vmem:[%s1 + $0xd78] sm:$0xff]
  %v477 = vld [vmem:[%s1 + $0xd80] sm:$0xff]
  %v478 = vld [vmem:[%s1 + $0xd88] sm:$0xff]
  %v479 = vld [vmem:[%s1 + $0xd90] sm:$0xff]
  %v480 = vld [vmem:[%s1 + $0xd98] sm:$0xff]
  %v481 = vld [vmem:[%s1 + $0xda0] sm:$0xff]
  %v482 = vld [vmem:[%s1 + $0xda8] sm:$0xff]
  %v483 = vld [vmem:[%s1 + $0xdb0] sm:$0xff]
  %v484 = vld [vmem:[%s1 + $0xdb8] sm:$0xff]
  %v485 = vld [vmem:[%s1 + $0xdc0] sm:$0xff]
  %v486 = vld [vmem:[%s1 + $0xdc8] sm:$0xff]
  %v487 = vld [vmem:[%s1 + $0xdd0] sm:$0xff]
  %v488 = vld [vmem:[%s1 + $0xdd8] sm:$0xff]
  %v489 = vld [vmem:[%s1 + $0xde0] sm:$0xff]
  %v490 = vld [vmem:[%s1 + $0xde8] sm:$0xff]
  %v491 = vld [vmem:[%s1 + $0xdf0] sm:$0xff]
  %v492 = vld [vmem:[%s1 + $0xdf8] sm:$0xff]
  %v493 = vld [vmem:[%s1 + $0xe00] sm:$0xff]
  %v494 = vld [vmem:[%s1 + $0xe08] sm:$0xff]
  %v495 = vld [vmem:[%s1 + $0xe10] sm:$0xff]
  %v496 = vld [vmem:[%s1 + $0xe18] sm:$0xff]
  %v497 = vld [vmem:[%s1 + $0xe20] sm:$0xff]
  %v498 = vld [vmem:[%s1 + $0xe28] sm:$0xff]
  %v499 = vld [vmem:[%s1 + $0xe30] sm:$0xff]
  %v500 = vld [vmem:[%s1 + $0xe38] sm:$0xff]
  %v501 = vld [vmem:[%s1 + $0xe40] sm:$0xff]
  %v502 = vld [vmem:[%s1 + $0xe48] sm:$0xff]
  %v503 = vld [vmem:[%s1 + $0xe50] sm:$0xff]
  %v504 = vld [vmem:[%s1 + $0xe58] sm:$0xff]
  %v505 = vld [vmem:[%s1 + $0xe60] sm:$0xff]
  %v506 = vld [vmem:[%s1 + $0xe68] sm:$0xff]
  %v507 = vld [vmem:[%s1 + $0xe70] sm:$0xff]
  %v508 = vld [vmem:[%s1 + $0xe78] sm:$0xff]
  %v509 = vld [vmem:[%s1 + $0xe80] sm:$0xff]
  %v510 = vld [vmem:[%s1 + $0xe88] sm:$0xff]
  %v511 = vld [vmem:[%s1 + $0xe90] sm:$0xff]
  %v512 = vld [vmem:[%s1 + $0xe98] sm:$0xff]
  %v513 = vld [vmem:[%s1 + $0xea0] sm:$0xff]
  %v514 = vld [vmem:[%s1 + $0xea8] sm:$0xff]
  %v515 = vld [vmem:[%s1 + $0xeb0] sm:$0xff]
  %v516 = vld [vmem:[%s1 + $0xeb8] sm:$0xff]
  %v517 = vld [vmem:[%s1 + $0xec0] sm:$0xff]
  %v518 = vld [vmem:[%s1 + $0xec8] sm:$0xff]
  %v519 = vld [vmem:[%s1 + $0xed0] sm:$0xff]
  %v520 = vld [vmem:[%s1 + $0xed8] sm:$0xff]
  %v521 = vld [vmem:[%s1 + $0xee0] sm:$0xff]
  %v522 = vld [vmem:[%s1 + $0xee8] sm:$0xff]
  %v523 = vld [vmem:[%s1 + $0xef0] sm:$0xff]
  %v524 = vld [vmem:[%s1 + $0xef8] sm:$0xff]
  %v525 = vld [vmem:[%s1 + $0xf00] sm:$0xff]
  %v526 = vld [vmem:[%s1 + $0xf08] sm:$0xff]
  %v527 = vld [vmem:[%s1 + $0xf10] sm:$0xff]
  %v528 = vld [vmem:[%s1 + $0xf18] sm:$0xff]
  %v529 = vld [vmem:[%s1 + $0xf20] sm:$0xff]
  %v530 = vld [vmem:[%s1 + $0xf28] sm:$0xff]
  %v531 = vld [vmem:[%s1 + $0xf30] sm:$0xff]
  %v532 = vld [vmem:[%s1 + $0xf38] sm:$0xff]
  %v533 = vld [vmem:[%s1 + $0xf40] sm:$0xff]
  %v534 = vld [vmem:[%s1 + $0xf48] sm:$0xff]
  %v535 = vld [vmem:[%s1 + $0xf50] sm:$0xff]
  %v536 = vld [vmem:[%s1 + $0xf58] sm:$0xff]
  %v537 = vld [vmem:[%s1 + $0xf60] sm:$0xff]
  %v538 = vld [vmem:[%s1 + $0xf68] sm:$0xff]
  %v539 = vld [vmem:[%s1 + $0xf70] sm:$0xff]
  %v540 = vld [vmem:[%s1 + $0xf78] sm:$0xff]
  %v541 = vld [vmem:[%s1 + $0xf80] sm:$0xff]
  %v542 = vld [vmem:[%s1 + $0xf88] sm:$0xff]
  %v543 = vld [vmem:[%s1 + $0xf90] sm:$0xff]
  %v544 = vld [vmem:[%s1 + $0xf98] sm:$0xff]
  %v545 = vld [vmem:[%s1 + $0xfa0] sm:$0xff]
  %v546 = vld [vmem:[%s1 + $0xfa8] sm:$0xff]
  %v547 = vld [vmem:[%s1 + $0xfb0] sm:$0xff]
  %v548 = vld [vmem:[%s1 + $0xfb8] sm:$0xff]
  %v549 = vld [vmem:[%s1 + $0xfc0] sm:$0xff]
  %v550 = vld [vmem:[%s1 + $0xfc8] sm:$0xff]
  %v551 = vld [vmem:[%s1 + $0xfd0] sm:$0xff]
  %v552 = vld [vmem:[%s1 + $0xfd8] sm:$0xff]
  %v553 = vld [vmem:[%s1 + $0xfe0] sm:$0xff]
  %v554 = vld [vmem:[%s1 + $0xfe8] sm:$0xff]
  %v555 = vld [vmem:[%s1 + $0xff0] sm:$0xff]
  %v556 = vld [vmem:[%s1 + $0xff8] sm:$0xff]
  %v557 = vld [vmem:[%s1 + $0x1000] sm:$0xff]
  %v558 = vld [vmem:[%s1 + $0x1008] sm:$0xff]
  %v559 = vld [vmem:[%s1 + $0x1010] sm:$0xff]
  %v560 = vld [vmem:[%s1 + $0x1018] sm:$0xff]
  %v561 = vld [vmem:[%s1 + $0x1020] sm:$0xff]
  %v562 = vld [vmem:[%s1 + $0x1028] sm:$0xff]
  %v563 = vld [vmem:[%s1 + $0x1030] sm:$0xff]
  %v564 = vld [vmem:[%s1 + $0x1038] sm:$0xff]
  %v565 = vld [vmem:[%s1 + $0x1040] sm:$0xff]
  %v566 = vld [vmem:[%s1 + $0x1048] sm:$0xff]
  %v567 = vld [vmem:[%s1 + $0x1050] sm:$0xff]
  %v568 = vld [vmem:[%s1 + $0x1058] sm:$0xff]
  %v569 = vld [vmem:[%s1 + $0x1060] sm:$0xff]
  %v570 = vld [vmem:[%s1 + $0x1068] sm:$0xff]
  %v571 = vld [vmem:[%s1 + $0x1070] sm:$0xff]
  %v572 = vld [vmem:[%s1 + $0x1078] sm:$0xff]
  %v573 = vld [vmem:[%s1 + $0x1080] sm:$0xff]
  %v574 = vld [vmem:[%s1 + $0x1088] sm:$0xff]
  %v575 = vld [vmem:[%s1 + $0x1090] sm:$0xff]
  %v576 = vld [vmem:[%s1 + $0x1098] sm:$0xff]
  %v577 = vld [vmem:[%s1 + $0x10a0] sm:$0xff]
  %v578 = vld [vmem:[%s1 + $0x10a8] sm:$0xff]
  %v579 = vld [vmem:[%s1 + $0x10b0] sm:$0xff]
  %v580 = vld [vmem:[%s1 + $0x10b8] sm:$0xff]
  %v581 = vld [vmem:[%s1 + $0x10c0] sm:$0xff]
  %v582 = vld [vmem:[%s1 + $0x10c8] sm:$0xff]
  %v583 = vld [vmem:[%s1 + $0x10d0] sm:$0xff]
  %v584 = vld [vmem:[%s1 + $0x10d8] sm:$0xff]
  %v585 = vld [vmem:[%s1 + $0x10e0] sm:$0xff]
  %v586 = vld [vmem:[%s1 + $0x10e8] sm:$0xff]
  %v587 = vld [vmem:[%s1 + $0x10f0] sm:$0xff]
  %v588 = vld [vmem:[%s1 + $0x10f8] sm:$0xff]
  %v589 = vld [vmem:[%s1 + $0x1100] sm:$0xff]
  %v590 = vld [vmem:[%s1 + $0x1108] sm:$0xff]
  %v591 = vld [vmem:[%s1 + $0x1110] sm:$0xff]
  %v592 = vld [vmem:[%s1 + $0x1118] sm:$0xff]
  %v593 = vld [vmem:[%s1 + $0x1120] sm:$0xff]
  %v594 = vld [vmem:[%s1 + $0x1128] sm:$0xff]
  %v595 = vld [vmem:[%s1 + $0x1130] sm:$0xff]
  %v596 = vld [vmem:[%s1 + $0x1138] sm:$0xff]
  %v597 = vld [vmem:[%s1 + $0x1140] sm:$0xff]
  %v598 = vld [vmem:[%s1 + $0x1148] sm:$0xff]
  %v599 = vld [vmem:[%s1 + $0x1150] sm:$0xff]
  %v600 = vld [vmem:[%s1 + $0x1158] sm:$0xff]
  %v601 = vld [vmem:[%s1 + $0x1160] sm:$0xff]
  %v602 = vld [vmem:[%s1 + $0x1168] sm:$0xff]
  %v603 = vld [vmem:[%s1 + $0x1170] sm:$0xff]
  %v604 = vld [vmem:[%s1 + $0x1178] sm:$0xff]
  %v605 = vld [vmem:[%s1 + $0x1180] sm:$0xff]
  %v606 = vld [vmem:[%s1 + $0x1188] sm:$0xff]
  %v607 = vld [vmem:[%s1 + $0x1190] sm:$0xff]
  %v608 = vld [vmem:[%s1 + $0x1198] sm:$0xff]
  %v609 = vld [vmem:[%s1 + $0x11a0] sm:$0xff]
  %v610 = vld [vmem:[%s1 + $0x11a8] sm:$0xff]
  %v611 = vld [vmem:[%s1 + $0x11b0] sm:$0xff]
  %v612 = vld [vmem:[%s1 + $0x11b8] sm:$0xff]
  %v613 = vld [vmem:[%s1 + $0x11c0] sm:$0xff]
  %v614 = vld [vmem:[%s1 + $0x11c8] sm:$0xff]
  %v615 = vld [vmem:[%s1 + $0x11d0] sm:$0xff]
  %v616 = vld [vmem:[%s1 + $0x11d8] sm:$0xff]
  %v617 = vld [vmem:[%s1 + $0x11e0] sm:$0xff]
  %v618 = vld [vmem:[%s1 + $0x11e8] sm:$0xff]
  %v619 = vld [vmem:[%s1 + $0x11f0] sm:$0xff]
  %v620 = vld [vmem:[%s1 + $0x11f8] sm:$0xff]
  %v621 = vld [vmem:[%s1 + $0x1200] sm:$0xff]
  %v622 = vld [vmem:[%s1 + $0x1208] sm:$0xff]
  %v623 = vld [vmem:[%s1 + $0x1210] sm:$0xff]
  %v624 = vld [vmem:[%s1 + $0x1218] sm:$0xff]
  %v625 = vld [vmem:[%s1 + $0x1220] sm:$0xff]
  %v626 = vld [vmem:[%s1 + $0x1228] sm:$0xff]
  %v627 = vld [vmem:[%s1 + $0x1230] sm:$0xff]
  %v628 = vld [vmem:[%s1 + $0x1238] sm:$0xff]
  %v629 = vld [vmem:[%s1 + $0x1240] sm:$0xff]
  %v630 = vld [vmem:[%s1 + $0x1248] sm:$0xff]
  %v631 = vld [vmem:[%s1 + $0x1250] sm:$0xff]
  %v632 = vld [vmem:[%s1 + $0x1258] sm:$0xff]
  %v633 = vld [vmem:[%s1 + $0x1260] sm:$0xff]
  %v634 = vld [vmem:[%s1 + $0x1268] sm:$0xff]
  %v635 = vld [vmem:[%s1 + $0x1270] sm:$0xff]
  %v636 = vld [vmem:[%s1 + $0x1278] sm:$0xff]
  %v637 = vld [vmem:[%s1 + $0x1280] sm:$0xff]
  %v638 = vld [vmem:[%s1 + $0x1288] sm:$0xff]
  %v639 = vld [vmem:[%s1 + $0x1290] sm:$0xff]
  %v640 = vld [vmem:[%s1 + $0x1298] sm:$0xff]
  %v641 = vld [vmem:[%s1 + $0x12a0] sm:$0xff]
  %v642 = vld [vmem:[%s1 + $0x12a8] sm:$0xff]
  %v643 = vld [vmem:[%s1 + $0x12b0] sm:$0xff]
  %v644 = vld [vmem:[%s1 + $0x12b8] sm:$0xff]
  %v645 = vld [vmem:[%s1 + $0x12c0] sm:$0xff]
  %v646 = vld [vmem:[%s1 + $0x12c8] sm:$0xff]
  %v647 = vld [vmem:[%s1 + $0x12d0] sm:$0xff]
  %v648 = vld [vmem:[%s1 + $0x12d8] sm:$0xff]
  %v649 = vld [vmem:[%s1 + $0x12e0] sm:$0xff]
  %v650 = vld [vmem:[%s1 + $0x12e8] sm:$0xff]
  %v651 = vld [vmem:[%s1 + $0x12f0] sm:$0xff]
  %v652 = vld [vmem:[%s1 + $0x12f8] sm:$0xff]
  %v653 = vld [vmem:[%s1 + $0x1300] sm:$0xff]
  %v654 = vld [vmem:[%s1 + $0x1308] sm:$0xff]
  %v655 = vld [vmem:[%s1 + $0x1310] sm:$0xff]
  %v656 = vld [vmem:[%s1 + $0x1318] sm:$0xff]
  %v657 = vld [vmem:[%s1 + $0x1320] sm:$0xff]
  %v658 = vld [vmem:[%s1 + $0x1328] sm:$0xff]
  %v659 = vld [vmem:[%s1 + $0x1330] sm:$0xff]
  %v660 = vld [vmem:[%s1 + $0x1338] sm:$0xff]
  %v661 = vld [vmem:[%s1 + $0x1340] sm:$0xff]
  %v662 = vld [vmem:[%s1 + $0x1348] sm:$0xff]
  %v663 = vld [vmem:[%s1 + $0x1350] sm:$0xff]
  %v664 = vld [vmem:[%s1 + $0x1358] sm:$0xff]
  %v665 = vld [vmem:[%s1 + $0x1360] sm:$0xff]
  %v666 = vld [vmem:[%s1 + $0x1368] sm:$0xff]
  %v667 = vld [vmem:[%s1 + $0x1370] sm:$0xff]
  %v668 = vld [vmem:[%s1 + $0x1378] sm:$0xff]
  %v669 = vld [vmem:[%s1 + $0x1380] sm:$0xff]
  %v670 = vld [vmem:[%s1 + $0x1388] sm:$0xff]
  %v671 = vld [vmem:[%s1 + $0x1390] sm:$0xff]
  %v672 = vld [vmem:[%s1 + $0x1398] sm:$0xff]
  %v673 = vld [vmem:[%s1 + $0x13a0] sm:$0xff]
  %v674 = vld [vmem:[%s1 + $0x13a8] sm:$0xff]
  %v675 = vld [vmem:[%s1 + $0x13b0] sm:$0xff]
  %v676 = vld [vmem:[%s1 + $0x13b8] sm:$0xff]
  %v677 = vld [vmem:[%s1 + $0x13c0] sm:$0xff]
  %v678 = vld [vmem:[%s1 + $0x13c8] sm:$0xff]
  %v679 = vld [vmem:[%s1 + $0x13d0] sm:$0xff]
  %v680 = vld [vmem:[%s1 + $0x13d8] sm:$0xff]
  %v681 = vld [vmem:[%s1 + $0x13e0] sm:$0xff]
  %v682 = vld [vmem:[%s1 + $0x13e8] sm:$0xff]
  %v683 = vld [vmem:[%s1 + $0x13f0] sm:$0xff]
  %v684 = vld [vmem:[%s1 + $0x13f8] sm:$0xff]
  %v685 = vld [vmem:[%s1 + $0x1400] sm:$0xff]
  %v686 = vld [vmem:[%s1 + $0x1408] sm:$0xff]
  %v687 = vld [vmem:[%s1 + $0x1410] sm:$0xff]
  %v688 = vld [vmem:[%s1 + $0x1418] sm:$0xff]
  %v689 = vld [vmem:[%s1 + $0x1420] sm:$0xff]
  %v690 = vld [vmem:[%s1 + $0x1428] sm:$0xff]
  %v691 = vld [vmem:[%s1 + $0x1430] sm:$0xff]
  %v692 = vld [vmem:[%s1 + $0x1438] sm:$0xff]
  %v693 = vld [vmem:[%s1 + $0x1440] sm:$0xff]
  %v694 = vld [vmem:[%s1 + $0x1448] sm:$0xff]
  %v695 = vld [vmem:[%s1 + $0x1450] sm:$0xff]
  %v696 = vld [vmem:[%s1 + $0x1458] sm:$0xff]
  %v697 = vld [vmem:[%s1 + $0x1460] sm:$0xff]
  %v698 = vld [vmem:[%s1 + $0x1468] sm:$0xff]
  %v699 = vld [vmem:[%s1 + $0x1470] sm:$0xff]
  %v700 = vld [vmem:[%s1 + $0x1478] sm:$0xff]
  %v701 = vld [vmem:[%s1 + $0x1480] sm:$0xff]
  %v702 = vld [vmem:[%s1 + $0x1488] sm:$0xff]
  %v703 = vld [vmem:[%s1 + $0x1490] sm:$0xff]
  %v704 = vld [vmem:[%s1 + $0x1498] sm:$0xff]
  %v705 = vld [vmem:[%s1 + $0x14a0] sm:$0xff]
  %v706 = vld [vmem:[%s1 + $0x14a8] sm:$0xff]
  %v707 = vld [vmem:[%s1 + $0x14b0] sm:$0xff]
  %v708 = vld [vmem:[%s1 + $0x14b8] sm:$0xff]
  %v709 = vld [vmem:[%s1 + $0x14c0] sm:$0xff]
  %v710 = vld [vmem:[%s1 + $0x14c8] sm:$0xff]
  %v711 = vld [vmem:[%s1 + $0x14d0] sm:$0xff]
  %v712 = vld [vmem:[%s1 + $0x14d8] sm:$0xff]
  %v713 = vld [vmem:[%s1 + $0x14e0] sm:$0xff]
  %v714 = vld [vmem:[%s1 + $0x14e8] sm:$0xff]
  %v715 = vld [vmem:[%s1 + $0x14f0] sm:$0xff]
  %v716 = vld [vmem:[%s1 + $0x14f8] sm:$0xff]
  %v717 = vld [vmem:[%s1 + $0x1500] sm:$0xff]
  %v718 = vld [vmem:[%s1 + $0x1508] sm:$0xff]
  %v719 = vld [vmem:[%s1 + $0x1510] sm:$0xff]
  %v720 = vld [vmem:[%s1 + $0x1518] sm:$0xff]
  %v721 = vld [vmem:[%s1 + $0x1520] sm:$0xff]
  %v722 = vld [vmem:[%s1 + $0x1528] sm:$0xff]
  %v723 = vld [vmem:[%s1 + $0x1530] sm:$0xff]
  %v724 = vld [vmem:[%s1 + $0x1538] sm:$0xff]
  %v725 = vld [vmem:[%s1 + $0x1540] sm:$0xff]
  %v726 = vld [vmem:[%s1 + $0x1548] sm:$0xff]
  %v727 = vld [vmem:[%s1 + $0x1550] sm:$0xff]
  %v728 = vld [vmem:[%s1 + $0x1558] sm:$0xff]
  %v729 = vld [vmem:[%s1 + $0x1560] sm:$0xff]
  %v730 = vld [vmem:[%s1 + $0x1568] sm:$0xff]
  %v731 = vld [vmem:[%s2] sm:$0x7f]
  %v733 = vperm.slane %v731, 0
  %v734 = vperm.slane %v731, 1
  %v735 = vperm.slane %v731, 2
  %v736 = vperm.slane %v731, 3
  %v737 = vperm.slane %v731, 4
  %v738 = vperm.slane %v731, 5
  %v739 = vperm.slane %v731, 6
  %vm747 = vcmask 130048
  %v749 = vsel %vm747, %v44, 0
  %751 = vmatpush.msra.mxu0 %v150
  %752 = vmatpush.msra.mxu0 %v143
  %753 = vmatpush.msra.mxu0 %v136
  %754 = vmatpush.msra.mxu0 %v129
  %755 = vmatpush.msra.mxu0 %v122
  %756 = vmatpush.msra.mxu0 %v115
  %757 = vmatpush.msra.mxu0 %v108
  %758 = vmatpush.msra.mxu0 %v101
  %759 = vmatpush.msra.mxu0 %v94
  %760 = vmatpush.msra.mxu0 %v87
  %761 = vmatpush.msra.mxu0 %v80
  %762 = vmatpush.msra.mxu0 %v73
  %763 = vmatpush.msra.mxu0 %v66
  %764 = vmatpush.msra.mxu0 %v59
  %765 = vmatpush.msra.mxu0 %v52
  %766 = vmatpush.msra.mxu0 %v45
  %767 = vmatmul.f32.gmra.mxu0 %v38
  %v768 = vpop.f32.mrf.mxu0
  %v769 = vadd.f32 %v733, %v768
  %770 = vdwg.mxu0
  %771 = vmatpush.msra.mxu0 %v262
  %772 = vmatpush.msra.mxu0 %v255
  %773 = vmatpush.msra.mxu0 %v248
  %774 = vmatpush.msra.mxu0 %v241
  %775 = vmatpush.msra.mxu0 %v234
  %776 = vmatpush.msra.mxu0 %v227
  %777 = vmatpush.msra.mxu0 %v220
  %778 = vmatpush.msra.mxu0 %v213
  %779 = vmatpush.msra.mxu0 %v206
  %780 = vmatpush.msra.mxu0 %v199
  %781 = vmatpush.msra.mxu0 %v192
  %782 = vmatpush.msra.mxu0 %v185
  %783 = vmatpush.msra.mxu0 %v178
  %784 = vmatpush.msra.mxu0 %v171
  %785 = vmatpush.msra.mxu0 %v164
  %786 = vmatpush.msra.mxu0 %v157
  %787 = vmatmul.f32.gmra.mxu0 %v39
  %v788 = vpop.f32.mrf.mxu0
  %v789 = vadd.f32 %v769, %v788
  %790 = vdwg.mxu0
  %791 = vmatpush.msra.mxu0 %v374
  %792 = vmatpush.msra.mxu0 %v367
  %793 = vmatpush.msra.mxu0 %v360
  %794 = vmatpush.msra.mxu0 %v353
  %795 = vmatpush.msra.mxu0 %v346
  %796 = vmatpush.msra.mxu0 %v339
  %797 = vmatpush.msra.mxu0 %v332
  %798 = vmatpush.msra.mxu0 %v325
  %799 = vmatpush.msra.mxu0 %v318
  %800 = vmatpush.msra.mxu0 %v311
  %801 = vmatpush.msra.mxu0 %v304
  %802 = vmatpush.msra.mxu0 %v297
  %803 = vmatpush.msra.mxu0 %v290
  %804 = vmatpush.msra.mxu0 %v283
  %805 = vmatpush.msra.mxu0 %v276
  %806 = vmatpush.msra.mxu0 %v269
  %807 = vmatmul.f32.gmra.mxu0 %v40
  %v808 = vpop.f32.mrf.mxu0
  %v809 = vadd.f32 %v789, %v808
  %810 = vdwg.mxu0
  %811 = vmatpush.msra.mxu0 %v486
  %812 = vmatpush.msra.mxu0 %v479
  %813 = vmatpush.msra.mxu0 %v472
  %814 = vmatpush.msra.mxu0 %v465
  %815 = vmatpush.msra.mxu0 %v458
  %816 = vmatpush.msra.mxu0 %v451
  %817 = vmatpush.msra.mxu0 %v444
  %818 = vmatpush.msra.mxu0 %v437
  %819 = vmatpush.msra.mxu0 %v430
  %820 = vmatpush.msra.mxu0 %v423
  %821 = vmatpush.msra.mxu0 %v416
  %822 = vmatpush.msra.mxu0 %v409
  %823 = vmatpush.msra.mxu0 %v402
  %824 = vmatpush.msra.mxu0 %v395
  %825 = vmatpush.msra.mxu0 %v388
  %826 = vmatpush.msra.mxu0 %v381
  %827 = vmatmul.f32.gmra.mxu0 %v41
  %v828 = vpop.f32.mrf.mxu0
  %v829 = vadd.f32 %v809, %v828
  %830 = vdwg.mxu0
  %831 = vmatpush.msra.mxu0 %v598
  %832 = vmatpush.msra.mxu0 %v591
  %833 = vmatpush.msra.mxu0 %v584
  %834 = vmatpush.msra.mxu0 %v577
  %835 = vmatpush.msra.mxu0 %v570
  %836 = vmatpush.msra.mxu0 %v563
  %837 = vmatpush.msra.mxu0 %v556
  %838 = vmatpush.msra.mxu0 %v549
  %839 = vmatpush.msra.mxu0 %v542
  %840 = vmatpush.msra.mxu0 %v535
  %841 = vmatpush.msra.mxu0 %v528
  %842 = vmatpush.msra.mxu0 %v521
  %843 = vmatpush.msra.mxu0 %v514
  %844 = vmatpush.msra.mxu0 %v507
  %845 = vmatpush.msra.mxu0 %v500
  %846 = vmatpush.msra.mxu0 %v493
  %847 = vmatmul.f32.gmra.mxu0 %v42
  %v848 = vpop.f32.mrf.mxu0
  %v849 = vadd.f32 %v829, %v848
  %850 = vdwg.mxu0
  %851 = vmatpush.msra.mxu0 %v710
  %852 = vmatpush.msra.mxu0 %v703
  %853 = vmatpush.msra.mxu0 %v696
  %854 = vmatpush.msra.mxu0 %v689
  %855 = vmatpush.msra.mxu0 %v682
  %856 = vmatpush.msra.mxu0 %v675
  %857 = vmatpush.msra.mxu0 %v668
  %858 = vmatpush.msra.mxu0 %v661
  %859 = vmatpush.msra.mxu0 %v654
  %860 = vmatpush.msra.mxu0 %v647
  %861 = vmatpush.msra.mxu0 %v640
  %862 = vmatpush.msra.mxu0 %v633
  %863 = vmatpush.msra.mxu0 %v626
  %864 = vmatpush.msra.mxu0 %v619
  %865 = vmatpush.msra.mxu0 %v612
  %866 = vmatpush.msra.mxu0 %v605
  %867 = vmatmul.f32.gmra.mxu0 %v43
  %v868 = vpop.f32.mrf.mxu0
  %v869 = vadd.f32 %v849, %v868
  %870 = vdwg.mxu0
  %871 = vmatpush.msra.mxu0 0.0
  %872 = vmatpush.msra.mxu0 0.0
  %873 = vmatpush.msra.mxu0 0.0
  %874 = vmatpush.msra.mxu0 0.0
  %875 = vmatpush.msra.mxu0 0.0
  %876 = vmatpush.msra.mxu0 0.0
  %877 = vmatpush.msra.mxu0 0.0
  %878 = vmatpush.msra.mxu0 0.0
  %879 = vmatpush.msra.mxu0 0.0
  %880 = vmatpush.msra.mxu0 0.0
  %881 = vmatpush.msra.mxu0 0.0
  %882 = vmatpush.msra.mxu0 0.0
  %883 = vmatpush.msra.mxu0 0.0
  %884 = vmatpush.msra.mxu0 0.0
  %885 = vmatpush.msra.mxu0 %v724
  %886 = vmatpush.msra.mxu0 %v717
  %887 = vmatmul.f32.gmra.mxu0 %v749
  %v888 = vpop.f32.mrf.mxu0
  %v889 = vadd.f32 %v869, %v888
  %890 = vdwg.mxu0
  %891 = vmatpush.msra.mxu0 %v151
  %892 = vmatpush.msra.mxu0 %v144
  %893 = vmatpush.msra.mxu0 %v137
  %894 = vmatpush.msra.mxu0 %v130
  %895 = vmatpush.msra.mxu0 %v123
  %896 = vmatpush.msra.mxu0 %v116
  %897 = vmatpush.msra.mxu0 %v109
  %898 = vmatpush.msra.mxu0 %v102
  %899 = vmatpush.msra.mxu0 %v95
  %900 = vmatpush.msra.mxu0 %v88
  %901 = vmatpush.msra.mxu0 %v81
  %902 = vmatpush.msra.mxu0 %v74
  %903 = vmatpush.msra.mxu0 %v67
  %904 = vmatpush.msra.mxu0 %v60
  %905 = vmatpush.msra.mxu0 %v53
  %906 = vmatpush.msra.mxu0 %v46
  %907 = vmatmul.f32.gmra.mxu0 %v38
  %v908 = vpop.f32.mrf.mxu0
  %v909 = vadd.f32 %v734, %v908
  %910 = vdwg.mxu0
  %911 = vmatpush.msra.mxu0 %v263
  %912 = vmatpush.msra.mxu0 %v256
  %913 = vmatpush.msra.mxu0 %v249
  %914 = vmatpush.msra.mxu0 %v242
  %915 = vmatpush.msra.mxu0 %v235
  %916 = vmatpush.msra.mxu0 %v228
  %917 = vmatpush.msra.mxu0 %v221
  %918 = vmatpush.msra.mxu0 %v214
  %919 = vmatpush.msra.mxu0 %v207
  %920 = vmatpush.msra.mxu0 %v200
  %921 = vmatpush.msra.mxu0 %v193
  %922 = vmatpush.msra.mxu0 %v186
  %923 = vmatpush.msra.mxu0 %v179
  %924 = vmatpush.msra.mxu0 %v172
  %925 = vmatpush.msra.mxu0 %v165
  %926 = vmatpush.msra.mxu0 %v158
  %927 = vmatmul.f32.gmra.mxu0 %v39
  %v928 = vpop.f32.mrf.mxu0
  %v929 = vadd.f32 %v909, %v928
  %930 = vdwg.mxu0
  %931 = vmatpush.msra.mxu0 %v375
  %932 = vmatpush.msra.mxu0 %v368
  %933 = vmatpush.msra.mxu0 %v361
  %934 = vmatpush.msra.mxu0 %v354
  %935 = vmatpush.msra.mxu0 %v347
  %936 = vmatpush.msra.mxu0 %v340
  %937 = vmatpush.msra.mxu0 %v333
  %938 = vmatpush.msra.mxu0 %v326
  %939 = vmatpush.msra.mxu0 %v319
  %940 = vmatpush.msra.mxu0 %v312
  %941 = vmatpush.msra.mxu0 %v305
  %942 = vmatpush.msra.mxu0 %v298
  %943 = vmatpush.msra.mxu0 %v291
  %944 = vmatpush.msra.mxu0 %v284
  %945 = vmatpush.msra.mxu0 %v277
  %946 = vmatpush.msra.mxu0 %v270
  %947 = vmatmul.f32.gmra.mxu0 %v40
  %v948 = vpop.f32.mrf.mxu0
  %v949 = vadd.f32 %v929, %v948
  %950 = vdwg.mxu0
  %951 = vmatpush.msra.mxu0 %v487
  %952 = vmatpush.msra.mxu0 %v480
  %953 = vmatpush.msra.mxu0 %v473
  %954 = vmatpush.msra.mxu0 %v466
  %955 = vmatpush.msra.mxu0 %v459
  %956 = vmatpush.msra.mxu0 %v452
  %957 = vmatpush.msra.mxu0 %v445
  %958 = vmatpush.msra.mxu0 %v438
  %959 = vmatpush.msra.mxu0 %v431
  %960 = vmatpush.msra.mxu0 %v424
  %961 = vmatpush.msra.mxu0 %v417
  %962 = vmatpush.msra.mxu0 %v410
  %963 = vmatpush.msra.mxu0 %v403
  %964 = vmatpush.msra.mxu0 %v396
  %965 = vmatpush.msra.mxu0 %v389
  %966 = vmatpush.msra.mxu0 %v382
  %967 = vmatmul.f32.gmra.mxu0 %v41
  %v968 = vpop.f32.mrf.mxu0
  %v969 = vadd.f32 %v949, %v968
  %970 = vdwg.mxu0
  %971 = vmatpush.msra.mxu0 %v599
  %972 = vmatpush.msra.mxu0 %v592
  %973 = vmatpush.msra.mxu0 %v585
  %974 = vmatpush.msra.mxu0 %v578
  %975 = vmatpush.msra.mxu0 %v571
  %976 = vmatpush.msra.mxu0 %v564
  %977 = vmatpush.msra.mxu0 %v557
  %978 = vmatpush.msra.mxu0 %v550
  %979 = vmatpush.msra.mxu0 %v543
  %980 = vmatpush.msra.mxu0 %v536
  %981 = vmatpush.msra.mxu0 %v529
  %982 = vmatpush.msra.mxu0 %v522
  %983 = vmatpush.msra.mxu0 %v515
  %984 = vmatpush.msra.mxu0 %v508
  %985 = vmatpush.msra.mxu0 %v501
  %986 = vmatpush.msra.mxu0 %v494
  %987 = vmatmul.f32.gmra.mxu0 %v42
  %v988 = vpop.f32.mrf.mxu0
  %v989 = vadd.f32 %v969, %v988
  %990 = vdwg.mxu0
  %991 = vmatpush.msra.mxu0 %v711
  %992 = vmatpush.msra.mxu0 %v704
  %993 = vmatpush.msra.mxu0 %v697
  %994 = vmatpush.msra.mxu0 %v690
  %995 = vmatpush.msra.mxu0 %v683
  %996 = vmatpush.msra.mxu0 %v676
  %997 = vmatpush.msra.mxu0 %v669
  %998 = vmatpush.msra.mxu0 %v662
  %999 = vmatpush.msra.mxu0 %v655
  %1000 = vmatpush.msra.mxu0 %v648
  %1001 = vmatpush.msra.mxu0 %v641
  %1002 = vmatpush.msra.mxu0 %v634
  %1003 = vmatpush.msra.mxu0 %v627
  %1004 = vmatpush.msra.mxu0 %v620
  %1005 = vmatpush.msra.mxu0 %v613
  %1006 = vmatpush.msra.mxu0 %v606
  %1007 = vmatmul.f32.gmra.mxu0 %v43
  %v1008 = vpop.f32.mrf.mxu0
  %v1009 = vadd.f32 %v989, %v1008
  %1010 = vdwg.mxu0
  %1011 = vmatpush.msra.mxu0 0.0
  %1012 = vmatpush.msra.mxu0 0.0
  %1013 = vmatpush.msra.mxu0 0.0
  %1014 = vmatpush.msra.mxu0 0.0
  %1015 = vmatpush.msra.mxu0 0.0
  %1016 = vmatpush.msra.mxu0 0.0
  %1017 = vmatpush.msra.mxu0 0.0
  %1018 = vmatpush.msra.mxu0 0.0
  %1019 = vmatpush.msra.mxu0 0.0
  %1020 = vmatpush.msra.mxu0 0.0
  %1021 = vmatpush.msra.mxu0 0.0
  %1022 = vmatpush.msra.mxu0 0.0
  %1023 = vmatpush.msra.mxu0 0.0
  %1024 = vmatpush.msra.mxu0 0.0
  %1025 = vmatpush.msra.mxu0 %v725
  %1026 = vmatpush.msra.mxu0 %v718
  %1027 = vmatmul.f32.gmra.mxu0 %v749
  %v1028 = vpop.f32.mrf.mxu0
  %v1029 = vadd.f32 %v1009, %v1028
  %1030 = vdwg.mxu0
  %1031 = vmatpush.msra.mxu0 %v152
  %1032 = vmatpush.msra.mxu0 %v145
  %1033 = vmatpush.msra.mxu0 %v138
  %1034 = vmatpush.msra.mxu0 %v131
  %1035 = vmatpush.msra.mxu0 %v124
  %1036 = vmatpush.msra.mxu0 %v117
  %1037 = vmatpush.msra.mxu0 %v110
  %1038 = vmatpush.msra.mxu0 %v103
  %1039 = vmatpush.msra.mxu0 %v96
  %1040 = vmatpush.msra.mxu0 %v89
  %1041 = vmatpush.msra.mxu0 %v82
  %1042 = vmatpush.msra.mxu0 %v75
  %1043 = vmatpush.msra.mxu0 %v68
  %1044 = vmatpush.msra.mxu0 %v61
  %1045 = vmatpush.msra.mxu0 %v54
  %1046 = vmatpush.msra.mxu0 %v47
  %1047 = vmatmul.f32.gmra.mxu0 %v38
  %v1048 = vpop.f32.mrf.mxu0
  %v1049 = vadd.f32 %v735, %v1048
  %1050 = vdwg.mxu0
  %1051 = vmatpush.msra.mxu0 %v264
  %1052 = vmatpush.msra.mxu0 %v257
  %1053 = vmatpush.msra.mxu0 %v250
  %1054 = vmatpush.msra.mxu0 %v243
  %1055 = vmatpush.msra.mxu0 %v236
  %1056 = vmatpush.msra.mxu0 %v229
  %1057 = vmatpush.msra.mxu0 %v222
  %1058 = vmatpush.msra.mxu0 %v215
  %1059 = vmatpush.msra.mxu0 %v208
  %1060 = vmatpush.msra.mxu0 %v201
  %1061 = vmatpush.msra.mxu0 %v194
  %1062 = vmatpush.msra.mxu0 %v187
  %1063 = vmatpush.msra.mxu0 %v180
  %1064 = vmatpush.msra.mxu0 %v173
  %1065 = vmatpush.msra.mxu0 %v166
  %1066 = vmatpush.msra.mxu0 %v159
  %1067 = vmatmul.f32.gmra.mxu0 %v39
  %v1068 = vpop.f32.mrf.mxu0
  %v1069 = vadd.f32 %v1049, %v1068
  %1070 = vdwg.mxu0
  %1071 = vmatpush.msra.mxu0 %v376
  %1072 = vmatpush.msra.mxu0 %v369
  %1073 = vmatpush.msra.mxu0 %v362
  %1074 = vmatpush.msra.mxu0 %v355
  %1075 = vmatpush.msra.mxu0 %v348
  %1076 = vmatpush.msra.mxu0 %v341
  %1077 = vmatpush.msra.mxu0 %v334
  %1078 = vmatpush.msra.mxu0 %v327
  %1079 = vmatpush.msra.mxu0 %v320
  %1080 = vmatpush.msra.mxu0 %v313
  %1081 = vmatpush.msra.mxu0 %v306
  %1082 = vmatpush.msra.mxu0 %v299
  %1083 = vmatpush.msra.mxu0 %v292
  %1084 = vmatpush.msra.mxu0 %v285
  %1085 = vmatpush.msra.mxu0 %v278
  %1086 = vmatpush.msra.mxu0 %v271
  %1087 = vmatmul.f32.gmra.mxu0 %v40
  %v1088 = vpop.f32.mrf.mxu0
  %v1089 = vadd.f32 %v1069, %v1088
  %1090 = vdwg.mxu0
  %1091 = vmatpush.msra.mxu0 %v488
  %1092 = vmatpush.msra.mxu0 %v481
  %1093 = vmatpush.msra.mxu0 %v474
  %1094 = vmatpush.msra.mxu0 %v467
  %1095 = vmatpush.msra.mxu0 %v460
  %1096 = vmatpush.msra.mxu0 %v453
  %1097 = vmatpush.msra.mxu0 %v446
  %1098 = vmatpush.msra.mxu0 %v439
  %1099 = vmatpush.msra.mxu0 %v432
  %1100 = vmatpush.msra.mxu0 %v425
  %1101 = vmatpush.msra.mxu0 %v418
  %1102 = vmatpush.msra.mxu0 %v411
  %1103 = vmatpush.msra.mxu0 %v404
  %1104 = vmatpush.msra.mxu0 %v397
  %1105 = vmatpush.msra.mxu0 %v390
  %1106 = vmatpush.msra.mxu0 %v383
  %1107 = vmatmul.f32.gmra.mxu0 %v41
  %v1108 = vpop.f32.mrf.mxu0
  %v1109 = vadd.f32 %v1089, %v1108
  %1110 = vdwg.mxu0
  %1111 = vmatpush.msra.mxu0 %v600
  %1112 = vmatpush.msra.mxu0 %v593
  %1113 = vmatpush.msra.mxu0 %v586
  %1114 = vmatpush.msra.mxu0 %v579
  %1115 = vmatpush.msra.mxu0 %v572
  %1116 = vmatpush.msra.mxu0 %v565
  %1117 = vmatpush.msra.mxu0 %v558
  %1118 = vmatpush.msra.mxu0 %v551
  %1119 = vmatpush.msra.mxu0 %v544
  %1120 = vmatpush.msra.mxu0 %v537
  %1121 = vmatpush.msra.mxu0 %v530
  %1122 = vmatpush.msra.mxu0 %v523
  %1123 = vmatpush.msra.mxu0 %v516
  %1124 = vmatpush.msra.mxu0 %v509
  %1125 = vmatpush.msra.mxu0 %v502
  %1126 = vmatpush.msra.mxu0 %v495
  %1127 = vmatmul.f32.gmra.mxu0 %v42
  %v1128 = vpop.f32.mrf.mxu0
  %v1129 = vadd.f32 %v1109, %v1128
  %1130 = vdwg.mxu0
  %1131 = vmatpush.msra.mxu0 %v712
  %1132 = vmatpush.msra.mxu0 %v705
  %1133 = vmatpush.msra.mxu0 %v698
  %1134 = vmatpush.msra.mxu0 %v691
  %1135 = vmatpush.msra.mxu0 %v684
  %1136 = vmatpush.msra.mxu0 %v677
  %1137 = vmatpush.msra.mxu0 %v670
  %1138 = vmatpush.msra.mxu0 %v663
  %1139 = vmatpush.msra.mxu0 %v656
  %1140 = vmatpush.msra.mxu0 %v649
  %1141 = vmatpush.msra.mxu0 %v642
  %1142 = vmatpush.msra.mxu0 %v635
  %1143 = vmatpush.msra.mxu0 %v628
  %1144 = vmatpush.msra.mxu0 %v621
  %1145 = vmatpush.msra.mxu0 %v614
  %1146 = vmatpush.msra.mxu0 %v607
  %1147 = vmatmul.f32.gmra.mxu0 %v43
  %v1148 = vpop.f32.mrf.mxu0
  %v1149 = vadd.f32 %v1129, %v1148
  %1150 = vdwg.mxu0
  %1151 = vmatpush.msra.mxu0 0.0
  %1152 = vmatpush.msra.mxu0 0.0
  %1153 = vmatpush.msra.mxu0 0.0
  %1154 = vmatpush.msra.mxu0 0.0
  %1155 = vmatpush.msra.mxu0 0.0
  %1156 = vmatpush.msra.mxu0 0.0
  %1157 = vmatpush.msra.mxu0 0.0
  %1158 = vmatpush.msra.mxu0 0.0
  %1159 = vmatpush.msra.mxu0 0.0
  %1160 = vmatpush.msra.mxu0 0.0
  %1161 = vmatpush.msra.mxu0 0.0
  %1162 = vmatpush.msra.mxu0 0.0
  %1163 = vmatpush.msra.mxu0 0.0
  %1164 = vmatpush.msra.mxu0 0.0
  %1165 = vmatpush.msra.mxu0 %v726
  %1166 = vmatpush.msra.mxu0 %v719
  %1167 = vmatmul.f32.gmra.mxu0 %v749
  %v1168 = vpop.f32.mrf.mxu0
  %v1169 = vadd.f32 %v1149, %v1168
  %1170 = vdwg.mxu0
  %1171 = vmatpush.msra.mxu0 %v153
  %1172 = vmatpush.msra.mxu0 %v146
  %1173 = vmatpush.msra.mxu0 %v139
  %1174 = vmatpush.msra.mxu0 %v132
  %1175 = vmatpush.msra.mxu0 %v125
  %1176 = vmatpush.msra.mxu0 %v118
  %1177 = vmatpush.msra.mxu0 %v111
  %1178 = vmatpush.msra.mxu0 %v104
  %1179 = vmatpush.msra.mxu0 %v97
  %1180 = vmatpush.msra.mxu0 %v90
  %1181 = vmatpush.msra.mxu0 %v83
  %1182 = vmatpush.msra.mxu0 %v76
  %1183 = vmatpush.msra.mxu0 %v69
  %1184 = vmatpush.msra.mxu0 %v62
  %1185 = vmatpush.msra.mxu0 %v55
  %1186 = vmatpush.msra.mxu0 %v48
  %1187 = vmatmul.f32.gmra.mxu0 %v38
  %v1188 = vpop.f32.mrf.mxu0
  %v1189 = vadd.f32 %v736, %v1188
  %1190 = vdwg.mxu0
  %1191 = vmatpush.msra.mxu0 %v265
  %1192 = vmatpush.msra.mxu0 %v258
  %1193 = vmatpush.msra.mxu0 %v251
  %1194 = vmatpush.msra.mxu0 %v244
  %1195 = vmatpush.msra.mxu0 %v237
  %1196 = vmatpush.msra.mxu0 %v230
  %1197 = vmatpush.msra.mxu0 %v223
  %1198 = vmatpush.msra.mxu0 %v216
  %1199 = vmatpush.msra.mxu0 %v209
  %1200 = vmatpush.msra.mxu0 %v202
  %1201 = vmatpush.msra.mxu0 %v195
  %1202 = vmatpush.msra.mxu0 %v188
  %1203 = vmatpush.msra.mxu0 %v181
  %1204 = vmatpush.msra.mxu0 %v174
  %1205 = vmatpush.msra.mxu0 %v167
  %1206 = vmatpush.msra.mxu0 %v160
  %1207 = vmatmul.f32.gmra.mxu0 %v39
  %v1208 = vpop.f32.mrf.mxu0
  %v1209 = vadd.f32 %v1189, %v1208
  %1210 = vdwg.mxu0
  %1211 = vmatpush.msra.mxu0 %v377
  %1212 = vmatpush.msra.mxu0 %v370
  %1213 = vmatpush.msra.mxu0 %v363
  %1214 = vmatpush.msra.mxu0 %v356
  %1215 = vmatpush.msra.mxu0 %v349
  %1216 = vmatpush.msra.mxu0 %v342
  %1217 = vmatpush.msra.mxu0 %v335
  %1218 = vmatpush.msra.mxu0 %v328
  %1219 = vmatpush.msra.mxu0 %v321
  %1220 = vmatpush.msra.mxu0 %v314
  %1221 = vmatpush.msra.mxu0 %v307
  %1222 = vmatpush.msra.mxu0 %v300
  %1223 = vmatpush.msra.mxu0 %v293
  %1224 = vmatpush.msra.mxu0 %v286
  %1225 = vmatpush.msra.mxu0 %v279
  %1226 = vmatpush.msra.mxu0 %v272
  %1227 = vmatmul.f32.gmra.mxu0 %v40
  %v1228 = vpop.f32.mrf.mxu0
  %v1229 = vadd.f32 %v1209, %v1228
  %1230 = vdwg.mxu0
  %1231 = vmatpush.msra.mxu0 %v489
  %1232 = vmatpush.msra.mxu0 %v482
  %1233 = vmatpush.msra.mxu0 %v475
  %1234 = vmatpush.msra.mxu0 %v468
  %1235 = vmatpush.msra.mxu0 %v461
  %1236 = vmatpush.msra.mxu0 %v454
  %1237 = vmatpush.msra.mxu0 %v447
  %1238 = vmatpush.msra.mxu0 %v440
  %1239 = vmatpush.msra.mxu0 %v433
  %1240 = vmatpush.msra.mxu0 %v426
  %1241 = vmatpush.msra.mxu0 %v419
  %1242 = vmatpush.msra.mxu0 %v412
  %1243 = vmatpush.msra.mxu0 %v405
  %1244 = vmatpush.msra.mxu0 %v398
  %1245 = vmatpush.msra.mxu0 %v391
  %1246 = vmatpush.msra.mxu0 %v384
  %1247 = vmatmul.f32.gmra.mxu0 %v41
  %v1248 = vpop.f32.mrf.mxu0
  %v1249 = vadd.f32 %v1229, %v1248
  %1250 = vdwg.mxu0
  %1251 = vmatpush.msra.mxu0 %v601
  %1252 = vmatpush.msra.mxu0 %v594
  %1253 = vmatpush.msra.mxu0 %v587
  %1254 = vmatpush.msra.mxu0 %v580
  %1255 = vmatpush.msra.mxu0 %v573
  %1256 = vmatpush.msra.mxu0 %v566
  %1257 = vmatpush.msra.mxu0 %v559
  %1258 = vmatpush.msra.mxu0 %v552
  %1259 = vmatpush.msra.mxu0 %v545
  %1260 = vmatpush.msra.mxu0 %v538
  %1261 = vmatpush.msra.mxu0 %v531
  %1262 = vmatpush.msra.mxu0 %v524
  %1263 = vmatpush.msra.mxu0 %v517
  %1264 = vmatpush.msra.mxu0 %v510
  %1265 = vmatpush.msra.mxu0 %v503
  %1266 = vmatpush.msra.mxu0 %v496
  %1267 = vmatmul.f32.gmra.mxu0 %v42
  %v1268 = vpop.f32.mrf.mxu0
  %v1269 = vadd.f32 %v1249, %v1268
  %1270 = vdwg.mxu0
  %1271 = vmatpush.msra.mxu0 %v713
  %1272 = vmatpush.msra.mxu0 %v706
  %1273 = vmatpush.msra.mxu0 %v699
  %1274 = vmatpush.msra.mxu0 %v692
  %1275 = vmatpush.msra.mxu0 %v685
  %1276 = vmatpush.msra.mxu0 %v678
  %1277 = vmatpush.msra.mxu0 %v671
  %1278 = vmatpush.msra.mxu0 %v664
  %1279 = vmatpush.msra.mxu0 %v657
  %1280 = vmatpush.msra.mxu0 %v650
  %1281 = vmatpush.msra.mxu0 %v643
  %1282 = vmatpush.msra.mxu0 %v636
  %1283 = vmatpush.msra.mxu0 %v629
  %1284 = vmatpush.msra.mxu0 %v622
  %1285 = vmatpush.msra.mxu0 %v615
  %1286 = vmatpush.msra.mxu0 %v608
  %1287 = vmatmul.f32.gmra.mxu0 %v43
  %v1288 = vpop.f32.mrf.mxu0
  %v1289 = vadd.f32 %v1269, %v1288
  %1290 = vdwg.mxu0
  %1291 = vmatpush.msra.mxu0 0.0
  %1292 = vmatpush.msra.mxu0 0.0
  %1293 = vmatpush.msra.mxu0 0.0
  %1294 = vmatpush.msra.mxu0 0.0
  %1295 = vmatpush.msra.mxu0 0.0
  %1296 = vmatpush.msra.mxu0 0.0
  %1297 = vmatpush.msra.mxu0 0.0
  %1298 = vmatpush.msra.mxu0 0.0
  %1299 = vmatpush.msra.mxu0 0.0
  %1300 = vmatpush.msra.mxu0 0.0
  %1301 = vmatpush.msra.mxu0 0.0
  %1302 = vmatpush.msra.mxu0 0.0
  %1303 = vmatpush.msra.mxu0 0.0
  %1304 = vmatpush.msra.mxu0 0.0
  %1305 = vmatpush.msra.mxu0 %v727
  %1306 = vmatpush.msra.mxu0 %v720
  %1307 = vmatmul.f32.gmra.mxu0 %v749
  %v1308 = vpop.f32.mrf.mxu0
  %v1309 = vadd.f32 %v1289, %v1308
  %1310 = vdwg.mxu0
  %1311 = vmatpush.msra.mxu0 %v154
  %1312 = vmatpush.msra.mxu0 %v147
  %1313 = vmatpush.msra.mxu0 %v140
  %1314 = vmatpush.msra.mxu0 %v133
  %1315 = vmatpush.msra.mxu0 %v126
  %1316 = vmatpush.msra.mxu0 %v119
  %1317 = vmatpush.msra.mxu0 %v112
  %1318 = vmatpush.msra.mxu0 %v105
  %1319 = vmatpush.msra.mxu0 %v98
  %1320 = vmatpush.msra.mxu0 %v91
  %1321 = vmatpush.msra.mxu0 %v84
  %1322 = vmatpush.msra.mxu0 %v77
  %1323 = vmatpush.msra.mxu0 %v70
  %1324 = vmatpush.msra.mxu0 %v63
  %1325 = vmatpush.msra.mxu0 %v56
  %1326 = vmatpush.msra.mxu0 %v49
  %1327 = vmatmul.f32.gmra.mxu0 %v38
  %v1328 = vpop.f32.mrf.mxu0
  %v1329 = vadd.f32 %v737, %v1328
  %1330 = vdwg.mxu0
  %1331 = vmatpush.msra.mxu0 %v266
  %1332 = vmatpush.msra.mxu0 %v259
  %1333 = vmatpush.msra.mxu0 %v252
  %1334 = vmatpush.msra.mxu0 %v245
  %1335 = vmatpush.msra.mxu0 %v238
  %1336 = vmatpush.msra.mxu0 %v231
  %1337 = vmatpush.msra.mxu0 %v224
  %1338 = vmatpush.msra.mxu0 %v217
  %1339 = vmatpush.msra.mxu0 %v210
  %1340 = vmatpush.msra.mxu0 %v203
  %1341 = vmatpush.msra.mxu0 %v196
  %1342 = vmatpush.msra.mxu0 %v189
  %1343 = vmatpush.msra.mxu0 %v182
  %1344 = vmatpush.msra.mxu0 %v175
  %1345 = vmatpush.msra.mxu0 %v168
  %1346 = vmatpush.msra.mxu0 %v161
  %1347 = vmatmul.f32.gmra.mxu0 %v39
  %v1348 = vpop.f32.mrf.mxu0
  %v1349 = vadd.f32 %v1329, %v1348
  %1350 = vdwg.mxu0
  %1351 = vmatpush.msra.mxu0 %v378
  %1352 = vmatpush.msra.mxu0 %v371
  %1353 = vmatpush.msra.mxu0 %v364
  %1354 = vmatpush.msra.mxu0 %v357
  %1355 = vmatpush.msra.mxu0 %v350
  %1356 = vmatpush.msra.mxu0 %v343
  %1357 = vmatpush.msra.mxu0 %v336
  %1358 = vmatpush.msra.mxu0 %v329
  %1359 = vmatpush.msra.mxu0 %v322
  %1360 = vmatpush.msra.mxu0 %v315
  %1361 = vmatpush.msra.mxu0 %v308
  %1362 = vmatpush.msra.mxu0 %v301
  %1363 = vmatpush.msra.mxu0 %v294
  %1364 = vmatpush.msra.mxu0 %v287
  %1365 = vmatpush.msra.mxu0 %v280
  %1366 = vmatpush.msra.mxu0 %v273
  %1367 = vmatmul.f32.gmra.mxu0 %v40
  %v1368 = vpop.f32.mrf.mxu0
  %v1369 = vadd.f32 %v1349, %v1368
  %1370 = vdwg.mxu0
  %1371 = vmatpush.msra.mxu0 %v490
  %1372 = vmatpush.msra.mxu0 %v483
  %1373 = vmatpush.msra.mxu0 %v476
  %1374 = vmatpush.msra.mxu0 %v469
  %1375 = vmatpush.msra.mxu0 %v462
  %1376 = vmatpush.msra.mxu0 %v455
  %1377 = vmatpush.msra.mxu0 %v448
  %1378 = vmatpush.msra.mxu0 %v441
  %1379 = vmatpush.msra.mxu0 %v434
  %1380 = vmatpush.msra.mxu0 %v427
  %1381 = vmatpush.msra.mxu0 %v420
  %1382 = vmatpush.msra.mxu0 %v413
  %1383 = vmatpush.msra.mxu0 %v406
  %1384 = vmatpush.msra.mxu0 %v399
  %1385 = vmatpush.msra.mxu0 %v392
  %1386 = vmatpush.msra.mxu0 %v385
  %1387 = vmatmul.f32.gmra.mxu0 %v41
  %v1388 = vpop.f32.mrf.mxu0
  %v1389 = vadd.f32 %v1369, %v1388
  %1390 = vdwg.mxu0
  %1391 = vmatpush.msra.mxu0 %v602
  %1392 = vmatpush.msra.mxu0 %v595
  %1393 = vmatpush.msra.mxu0 %v588
  %1394 = vmatpush.msra.mxu0 %v581
  %1395 = vmatpush.msra.mxu0 %v574
  %1396 = vmatpush.msra.mxu0 %v567
  %1397 = vmatpush.msra.mxu0 %v560
  %1398 = vmatpush.msra.mxu0 %v553
  %1399 = vmatpush.msra.mxu0 %v546
  %1400 = vmatpush.msra.mxu0 %v539
  %1401 = vmatpush.msra.mxu0 %v532
  %1402 = vmatpush.msra.mxu0 %v525
  %1403 = vmatpush.msra.mxu0 %v518
  %1404 = vmatpush.msra.mxu0 %v511
  %1405 = vmatpush.msra.mxu0 %v504
  %1406 = vmatpush.msra.mxu0 %v497
  %1407 = vmatmul.f32.gmra.mxu0 %v42
  %v1408 = vpop.f32.mrf.mxu0
  %v1409 = vadd.f32 %v1389, %v1408
  %1410 = vdwg.mxu0
  %1411 = vmatpush.msra.mxu0 %v714
  %1412 = vmatpush.msra.mxu0 %v707
  %1413 = vmatpush.msra.mxu0 %v700
  %1414 = vmatpush.msra.mxu0 %v693
  %1415 = vmatpush.msra.mxu0 %v686
  %1416 = vmatpush.msra.mxu0 %v679
  %1417 = vmatpush.msra.mxu0 %v672
  %1418 = vmatpush.msra.mxu0 %v665
  %1419 = vmatpush.msra.mxu0 %v658
  %1420 = vmatpush.msra.mxu0 %v651
  %1421 = vmatpush.msra.mxu0 %v644
  %1422 = vmatpush.msra.mxu0 %v637
  %1423 = vmatpush.msra.mxu0 %v630
  %1424 = vmatpush.msra.mxu0 %v623
  %1425 = vmatpush.msra.mxu0 %v616
  %1426 = vmatpush.msra.mxu0 %v609
  %1427 = vmatmul.f32.gmra.mxu0 %v43
  %v1428 = vpop.f32.mrf.mxu0
  %v1429 = vadd.f32 %v1409, %v1428
  %1430 = vdwg.mxu0
  %1431 = vmatpush.msra.mxu0 0.0
  %1432 = vmatpush.msra.mxu0 0.0
  %1433 = vmatpush.msra.mxu0 0.0
  %1434 = vmatpush.msra.mxu0 0.0
  %1435 = vmatpush.msra.mxu0 0.0
  %1436 = vmatpush.msra.mxu0 0.0
  %1437 = vmatpush.msra.mxu0 0.0
  %1438 = vmatpush.msra.mxu0 0.0
  %1439 = vmatpush.msra.mxu0 0.0
  %1440 = vmatpush.msra.mxu0 0.0
  %1441 = vmatpush.msra.mxu0 0.0
  %1442 = vmatpush.msra.mxu0 0.0
  %1443 = vmatpush.msra.mxu0 0.0
  %1444 = vmatpush.msra.mxu0 0.0
  %1445 = vmatpush.msra.mxu0 %v728
  %1446 = vmatpush.msra.mxu0 %v721
  %1447 = vmatmul.f32.gmra.mxu0 %v749
  %v1448 = vpop.f32.mrf.mxu0
  %v1449 = vadd.f32 %v1429, %v1448
  %1450 = vdwg.mxu0
  %1451 = vmatpush.msra.mxu0 %v155
  %1452 = vmatpush.msra.mxu0 %v148
  %1453 = vmatpush.msra.mxu0 %v141
  %1454 = vmatpush.msra.mxu0 %v134
  %1455 = vmatpush.msra.mxu0 %v127
  %1456 = vmatpush.msra.mxu0 %v120
  %1457 = vmatpush.msra.mxu0 %v113
  %1458 = vmatpush.msra.mxu0 %v106
  %1459 = vmatpush.msra.mxu0 %v99
  %1460 = vmatpush.msra.mxu0 %v92
  %1461 = vmatpush.msra.mxu0 %v85
  %1462 = vmatpush.msra.mxu0 %v78
  %1463 = vmatpush.msra.mxu0 %v71
  %1464 = vmatpush.msra.mxu0 %v64
  %1465 = vmatpush.msra.mxu0 %v57
  %1466 = vmatpush.msra.mxu0 %v50
  %1467 = vmatmul.f32.gmra.mxu0 %v38
  %v1468 = vpop.f32.mrf.mxu0
  %v1469 = vadd.f32 %v738, %v1468
  %1470 = vdwg.mxu0
  %1471 = vmatpush.msra.mxu0 %v267
  %1472 = vmatpush.msra.mxu0 %v260
  %1473 = vmatpush.msra.mxu0 %v253
  %1474 = vmatpush.msra.mxu0 %v246
  %1475 = vmatpush.msra.mxu0 %v239
  %1476 = vmatpush.msra.mxu0 %v232
  %1477 = vmatpush.msra.mxu0 %v225
  %1478 = vmatpush.msra.mxu0 %v218
  %1479 = vmatpush.msra.mxu0 %v211
  %1480 = vmatpush.msra.mxu0 %v204
  %1481 = vmatpush.msra.mxu0 %v197
  %1482 = vmatpush.msra.mxu0 %v190
  %1483 = vmatpush.msra.mxu0 %v183
  %1484 = vmatpush.msra.mxu0 %v176
  %1485 = vmatpush.msra.mxu0 %v169
  %1486 = vmatpush.msra.mxu0 %v162
  %1487 = vmatmul.f32.gmra.mxu0 %v39
  %v1488 = vpop.f32.mrf.mxu0
  %v1489 = vadd.f32 %v1469, %v1488
  %1490 = vdwg.mxu0
  %1491 = vmatpush.msra.mxu0 %v379
  %1492 = vmatpush.msra.mxu0 %v372
  %1493 = vmatpush.msra.mxu0 %v365
  %1494 = vmatpush.msra.mxu0 %v358
  %1495 = vmatpush.msra.mxu0 %v351
  %1496 = vmatpush.msra.mxu0 %v344
  %1497 = vmatpush.msra.mxu0 %v337
  %1498 = vmatpush.msra.mxu0 %v330
  %1499 = vmatpush.msra.mxu0 %v323
  %1500 = vmatpush.msra.mxu0 %v316
  %1501 = vmatpush.msra.mxu0 %v309
  %1502 = vmatpush.msra.mxu0 %v302
  %1503 = vmatpush.msra.mxu0 %v295
  %1504 = vmatpush.msra.mxu0 %v288
  %1505 = vmatpush.msra.mxu0 %v281
  %1506 = vmatpush.msra.mxu0 %v274
  %1507 = vmatmul.f32.gmra.mxu0 %v40
  %v1508 = vpop.f32.mrf.mxu0
  %v1509 = vadd.f32 %v1489, %v1508
  %1510 = vdwg.mxu0
  %1511 = vmatpush.msra.mxu0 %v491
  %1512 = vmatpush.msra.mxu0 %v484
  %1513 = vmatpush.msra.mxu0 %v477
  %1514 = vmatpush.msra.mxu0 %v470
  %1515 = vmatpush.msra.mxu0 %v463
  %1516 = vmatpush.msra.mxu0 %v456
  %1517 = vmatpush.msra.mxu0 %v449
  %1518 = vmatpush.msra.mxu0 %v442
  %1519 = vmatpush.msra.mxu0 %v435
  %1520 = vmatpush.msra.mxu0 %v428
  %1521 = vmatpush.msra.mxu0 %v421
  %1522 = vmatpush.msra.mxu0 %v414
  %1523 = vmatpush.msra.mxu0 %v407
  %1524 = vmatpush.msra.mxu0 %v400
  %1525 = vmatpush.msra.mxu0 %v393
  %1526 = vmatpush.msra.mxu0 %v386
  %1527 = vmatmul.f32.gmra.mxu0 %v41
  %v1528 = vpop.f32.mrf.mxu0
  %v1529 = vadd.f32 %v1509, %v1528
  %1530 = vdwg.mxu0
  %1531 = vmatpush.msra.mxu0 %v603
  %1532 = vmatpush.msra.mxu0 %v596
  %1533 = vmatpush.msra.mxu0 %v589
  %1534 = vmatpush.msra.mxu0 %v582
  %1535 = vmatpush.msra.mxu0 %v575
  %1536 = vmatpush.msra.mxu0 %v568
  %1537 = vmatpush.msra.mxu0 %v561
  %1538 = vmatpush.msra.mxu0 %v554
  %1539 = vmatpush.msra.mxu0 %v547
  %1540 = vmatpush.msra.mxu0 %v540
  %1541 = vmatpush.msra.mxu0 %v533
  %1542 = vmatpush.msra.mxu0 %v526
  %1543 = vmatpush.msra.mxu0 %v519
  %1544 = vmatpush.msra.mxu0 %v512
  %1545 = vmatpush.msra.mxu0 %v505
  %1546 = vmatpush.msra.mxu0 %v498
  %1547 = vmatmul.f32.gmra.mxu0 %v42
  %v1548 = vpop.f32.mrf.mxu0
  %v1549 = vadd.f32 %v1529, %v1548
  %1550 = vdwg.mxu0
  %1551 = vmatpush.msra.mxu0 %v715
  %1552 = vmatpush.msra.mxu0 %v708
  %1553 = vmatpush.msra.mxu0 %v701
  %1554 = vmatpush.msra.mxu0 %v694
  %1555 = vmatpush.msra.mxu0 %v687
  %1556 = vmatpush.msra.mxu0 %v680
  %1557 = vmatpush.msra.mxu0 %v673
  %1558 = vmatpush.msra.mxu0 %v666
  %1559 = vmatpush.msra.mxu0 %v659
  %1560 = vmatpush.msra.mxu0 %v652
  %1561 = vmatpush.msra.mxu0 %v645
  %1562 = vmatpush.msra.mxu0 %v638
  %1563 = vmatpush.msra.mxu0 %v631
  %1564 = vmatpush.msra.mxu0 %v624
  %1565 = vmatpush.msra.mxu0 %v617
  %1566 = vmatpush.msra.mxu0 %v610
  %1567 = vmatmul.f32.gmra.mxu0 %v43
  %v1568 = vpop.f32.mrf.mxu0
  %v1569 = vadd.f32 %v1549, %v1568
  %1570 = vdwg.mxu0
  %1571 = vmatpush.msra.mxu0 0.0
  %1572 = vmatpush.msra.mxu0 0.0
  %1573 = vmatpush.msra.mxu0 0.0
  %1574 = vmatpush.msra.mxu0 0.0
  %1575 = vmatpush.msra.mxu0 0.0
  %1576 = vmatpush.msra.mxu0 0.0
  %1577 = vmatpush.msra.mxu0 0.0
  %1578 = vmatpush.msra.mxu0 0.0
  %1579 = vmatpush.msra.mxu0 0.0
  %1580 = vmatpush.msra.mxu0 0.0
  %1581 = vmatpush.msra.mxu0 0.0
  %1582 = vmatpush.msra.mxu0 0.0
  %1583 = vmatpush.msra.mxu0 0.0
  %1584 = vmatpush.msra.mxu0 0.0
  %1585 = vmatpush.msra.mxu0 %v729
  %1586 = vmatpush.msra.mxu0 %v722
  %1587 = vmatmul.f32.gmra.mxu0 %v749
  %v1588 = vpop.f32.mrf.mxu0
  %v1589 = vadd.f32 %v1569, %v1588
  %1590 = vdwg.mxu0
  %1591 = vmatpush.msra.mxu0 %v156
  %1592 = vmatpush.msra.mxu0 %v149
  %1593 = vmatpush.msra.mxu0 %v142
  %1594 = vmatpush.msra.mxu0 %v135
  %1595 = vmatpush.msra.mxu0 %v128
  %1596 = vmatpush.msra.mxu0 %v121
  %1597 = vmatpush.msra.mxu0 %v114
  %1598 = vmatpush.msra.mxu0 %v107
  %1599 = vmatpush.msra.mxu0 %v100
  %1600 = vmatpush.msra.mxu0 %v93
  %1601 = vmatpush.msra.mxu0 %v86
  %1602 = vmatpush.msra.mxu0 %v79
  %1603 = vmatpush.msra.mxu0 %v72
  %1604 = vmatpush.msra.mxu0 %v65
  %1605 = vmatpush.msra.mxu0 %v58
  %1606 = vmatpush.msra.mxu0 %v51
  %1607 = vmatmul.f32.gmra.mxu0 %v38
  %v1608 = vpop.f32.mrf.mxu0
  %v1609 = vadd.f32 %v739, %v1608
  %1610 = vdwg.mxu0
  %1611 = vmatpush.msra.mxu0 %v268
  %1612 = vmatpush.msra.mxu0 %v261
  %1613 = vmatpush.msra.mxu0 %v254
  %1614 = vmatpush.msra.mxu0 %v247
  %1615 = vmatpush.msra.mxu0 %v240
  %1616 = vmatpush.msra.mxu0 %v233
  %1617 = vmatpush.msra.mxu0 %v226
  %1618 = vmatpush.msra.mxu0 %v219
  %1619 = vmatpush.msra.mxu0 %v212
  %1620 = vmatpush.msra.mxu0 %v205
  %1621 = vmatpush.msra.mxu0 %v198
  %1622 = vmatpush.msra.mxu0 %v191
  %1623 = vmatpush.msra.mxu0 %v184
  %1624 = vmatpush.msra.mxu0 %v177
  %1625 = vmatpush.msra.mxu0 %v170
  %1626 = vmatpush.msra.mxu0 %v163
  %1627 = vmatmul.f32.gmra.mxu0 %v39
  %v1628 = vpop.f32.mrf.mxu0
  %v1629 = vadd.f32 %v1609, %v1628
  %1630 = vdwg.mxu0
  %1631 = vmatpush.msra.mxu0 %v380
  %1632 = vmatpush.msra.mxu0 %v373
  %1633 = vmatpush.msra.mxu0 %v366
  %1634 = vmatpush.msra.mxu0 %v359
  %1635 = vmatpush.msra.mxu0 %v352
  %1636 = vmatpush.msra.mxu0 %v345
  %1637 = vmatpush.msra.mxu0 %v338
  %1638 = vmatpush.msra.mxu0 %v331
  %1639 = vmatpush.msra.mxu0 %v324
  %1640 = vmatpush.msra.mxu0 %v317
  %1641 = vmatpush.msra.mxu0 %v310
  %1642 = vmatpush.msra.mxu0 %v303
  %1643 = vmatpush.msra.mxu0 %v296
  %1644 = vmatpush.msra.mxu0 %v289
  %1645 = vmatpush.msra.mxu0 %v282
  %1646 = vmatpush.msra.mxu0 %v275
  %1647 = vmatmul.f32.gmra.mxu0 %v40
  %v1648 = vpop.f32.mrf.mxu0
  %v1649 = vadd.f32 %v1629, %v1648
  %1650 = vdwg.mxu0
  %1651 = vmatpush.msra.mxu0 %v492
  %1652 = vmatpush.msra.mxu0 %v485
  %1653 = vmatpush.msra.mxu0 %v478
  %1654 = vmatpush.msra.mxu0 %v471
  %1655 = vmatpush.msra.mxu0 %v464
  %1656 = vmatpush.msra.mxu0 %v457
  %1657 = vmatpush.msra.mxu0 %v450
  %1658 = vmatpush.msra.mxu0 %v443
  %1659 = vmatpush.msra.mxu0 %v436
  %1660 = vmatpush.msra.mxu0 %v429
  %1661 = vmatpush.msra.mxu0 %v422
  %1662 = vmatpush.msra.mxu0 %v415
  %1663 = vmatpush.msra.mxu0 %v408
  %1664 = vmatpush.msra.mxu0 %v401
  %1665 = vmatpush.msra.mxu0 %v394
  %1666 = vmatpush.msra.mxu0 %v387
  %1667 = vmatmul.f32.gmra.mxu0 %v41
  %v1668 = vpop.f32.mrf.mxu0
  %v1669 = vadd.f32 %v1649, %v1668
  %1670 = vdwg.mxu0
  %1671 = vmatpush.msra.mxu0 %v604
  %1672 = vmatpush.msra.mxu0 %v597
  %1673 = vmatpush.msra.mxu0 %v590
  %1674 = vmatpush.msra.mxu0 %v583
  %1675 = vmatpush.msra.mxu0 %v576
  %1676 = vmatpush.msra.mxu0 %v569
  %1677 = vmatpush.msra.mxu0 %v562
  %1678 = vmatpush.msra.mxu0 %v555
  %1679 = vmatpush.msra.mxu0 %v548
  %1680 = vmatpush.msra.mxu0 %v541
  %1681 = vmatpush.msra.mxu0 %v534
  %1682 = vmatpush.msra.mxu0 %v527
  %1683 = vmatpush.msra.mxu0 %v520
  %1684 = vmatpush.msra.mxu0 %v513
  %1685 = vmatpush.msra.mxu0 %v506
  %1686 = vmatpush.msra.mxu0 %v499
  %1687 = vmatmul.f32.gmra.mxu0 %v42
  %v1688 = vpop.f32.mrf.mxu0
  %v1689 = vadd.f32 %v1669, %v1688
  %1690 = vdwg.mxu0
  %1691 = vmatpush.msra.mxu0 %v716
  %1692 = vmatpush.msra.mxu0 %v709
  %1693 = vmatpush.msra.mxu0 %v702
  %1694 = vmatpush.msra.mxu0 %v695
  %1695 = vmatpush.msra.mxu0 %v688
  %1696 = vmatpush.msra.mxu0 %v681
  %1697 = vmatpush.msra.mxu0 %v674
  %1698 = vmatpush.msra.mxu0 %v667
  %1699 = vmatpush.msra.mxu0 %v660
  %1700 = vmatpush.msra.mxu0 %v653
  %1701 = vmatpush.msra.mxu0 %v646
  %1702 = vmatpush.msra.mxu0 %v639
  %1703 = vmatpush.msra.mxu0 %v632
  %1704 = vmatpush.msra.mxu0 %v625
  %1705 = vmatpush.msra.mxu0 %v618
  %1706 = vmatpush.msra.mxu0 %v611
  %1707 = vmatmul.f32.gmra.mxu0 %v43
  %v1708 = vpop.f32.mrf.mxu0
  %v1709 = vadd.f32 %v1689, %v1708
  %1710 = vdwg.mxu0
  %1711 = vmatpush.msra.mxu0 0.0
  %1712 = vmatpush.msra.mxu0 0.0
  %1713 = vmatpush.msra.mxu0 0.0
  %1714 = vmatpush.msra.mxu0 0.0
  %1715 = vmatpush.msra.mxu0 0.0
  %1716 = vmatpush.msra.mxu0 0.0
  %1717 = vmatpush.msra.mxu0 0.0
  %1718 = vmatpush.msra.mxu0 0.0
  %1719 = vmatpush.msra.mxu0 0.0
  %1720 = vmatpush.msra.mxu0 0.0
  %1721 = vmatpush.msra.mxu0 0.0
  %1722 = vmatpush.msra.mxu0 0.0
  %1723 = vmatpush.msra.mxu0 0.0
  %1724 = vmatpush.msra.mxu0 0.0
  %1725 = vmatpush.msra.mxu0 %v730
  %1726 = vmatpush.msra.mxu0 %v723
  %1727 = vmatmul.f32.gmra.mxu0 %v749
  %v1728 = vpop.f32.mrf.mxu0
  %v1729 = vadd.f32 %v1709, %v1728
  %1730 = vdwg.mxu0
  %v1731 = vmax.f32 %v889, 0.0
  %v1732 = vmax.f32 %v1029, 0.0
  %v1733 = vmax.f32 %v1169, 0.0
  %v1734 = vmax.f32 %v1309, 0.0
  %v1735 = vmax.f32 %v1449, 0.0
  %v1736 = vmax.f32 %v1589, 0.0
  %v1737 = vmax.f32 %v1729, 0.0
  %v1738 = vld [vmem:[%s3] sm:$0xff]
  %v1739 = vld [vmem:[%s3 + $0x8] sm:$0xff]
  %v1740 = vld [vmem:[%s3 + $0x10] sm:$0xff]
  %v1741 = vld [vmem:[%s3 + $0x18] sm:$0xff]
  %v1742 = vld [vmem:[%s3 + $0x20] sm:$0xff]
  %v1743 = vld [vmem:[%s3 + $0x28] sm:$0xff]
  %v1744 = vld [vmem:[%s3 + $0x30] sm:$0xff]
  %v1745 = vld [vmem:[%s3 + $0x38] sm:$0xff]
  %v1746 = vld [vmem:[%s3 + $0x40] sm:$0xff]
  %v1747 = vld [vmem:[%s3 + $0x48] sm:$0xff]
  %v1748 = vld [vmem:[%s3 + $0x50] sm:$0xff]
  %v1749 = vld [vmem:[%s3 + $0x58] sm:$0xff]
  %v1750 = vld [vmem:[%s3 + $0x60] sm:$0xff]
  %v1751 = vld [vmem:[%s3 + $0x68] sm:$0xff]
  %v1752 = vld [vmem:[%s3 + $0x70] sm:$0xff]
  %v1753 = vld [vmem:[%s3 + $0x78] sm:$0xff]
  %v1754 = vld [vmem:[%s3 + $0x80] sm:$0xff]
  %v1755 = vld [vmem:[%s3 + $0x88] sm:$0xff]
  %v1756 = vld [vmem:[%s3 + $0x90] sm:$0xff]
  %v1757 = vld [vmem:[%s3 + $0x98] sm:$0xff]
  %v1758 = vld [vmem:[%s3 + $0xa0] sm:$0xff]
  %v1759 = vld [vmem:[%s3 + $0xa8] sm:$0xff]
  %v1760 = vld [vmem:[%s3 + $0xb0] sm:$0xff]
  %v1761 = vld [vmem:[%s3 + $0xb8] sm:$0xff]
  %v1762 = vld [vmem:[%s3 + $0xc0] sm:$0xff]
  %v1763 = vld [vmem:[%s3 + $0xc8] sm:$0xff]
  %v1764 = vld [vmem:[%s3 + $0xd0] sm:$0xff]
  %v1765 = vld [vmem:[%s3 + $0xd8] sm:$0xff]
  %v1766 = vld [vmem:[%s3 + $0xe0] sm:$0xff]
  %v1767 = vld [vmem:[%s3 + $0xe8] sm:$0xff]
  %v1768 = vld [vmem:[%s3 + $0xf0] sm:$0xff]
  %v1769 = vld [vmem:[%s3 + $0xf8] sm:$0xff]
  %v1770 = vld [vmem:[%s3 + $0x100] sm:$0xff]
  %v1771 = vld [vmem:[%s3 + $0x108] sm:$0xff]
  %v1772 = vld [vmem:[%s3 + $0x110] sm:$0xff]
  %v1773 = vld [vmem:[%s3 + $0x118] sm:$0xff]
  %v1774 = vld [vmem:[%s3 + $0x120] sm:$0xff]
  %v1775 = vld [vmem:[%s3 + $0x128] sm:$0xff]
  %v1776 = vld [vmem:[%s3 + $0x130] sm:$0xff]
  %v1777 = vld [vmem:[%s3 + $0x138] sm:$0xff]
  %v1778 = vld [vmem:[%s3 + $0x140] sm:$0xff]
  %v1779 = vld [vmem:[%s3 + $0x148] sm:$0xff]
  %v1780 = vld [vmem:[%s3 + $0x150] sm:$0xff]
  %v1781 = vld [vmem:[%s3 + $0x158] sm:$0xff]
  %v1782 = vld [vmem:[%s3 + $0x160] sm:$0xff]
  %v1783 = vld [vmem:[%s3 + $0x168] sm:$0xff]
  %v1784 = vld [vmem:[%s3 + $0x170] sm:$0xff]
  %v1785 = vld [vmem:[%s3 + $0x178] sm:$0xff]
  %v1786 = vld [vmem:[%s3 + $0x180] sm:$0xff]
  %v1787 = vld [vmem:[%s3 + $0x188] sm:$0xff]
  %v1788 = vld [vmem:[%s3 + $0x190] sm:$0xff]
  %v1789 = vld [vmem:[%s3 + $0x198] sm:$0xff]
  %v1790 = vld [vmem:[%s3 + $0x1a0] sm:$0xff]
  %v1791 = vld [vmem:[%s3 + $0x1a8] sm:$0xff]
  %v1792 = vld [vmem:[%s3 + $0x1b0] sm:$0xff]
  %v1793 = vld [vmem:[%s3 + $0x1b8] sm:$0xff]
  %v1794 = vld [vmem:[%s3 + $0x1c0] sm:$0xff]
  %v1795 = vld [vmem:[%s3 + $0x1c8] sm:$0xff]
  %v1796 = vld [vmem:[%s3 + $0x1d0] sm:$0xff]
  %v1797 = vld [vmem:[%s3 + $0x1d8] sm:$0xff]
  %v1798 = vld [vmem:[%s3 + $0x1e0] sm:$0xff]
  %v1799 = vld [vmem:[%s3 + $0x1e8] sm:$0xff]
  %v1800 = vld [vmem:[%s3 + $0x1f0] sm:$0xff]
  %v1801 = vld [vmem:[%s3 + $0x1f8] sm:$0xff]
  %v1802 = vld [vmem:[%s3 + $0x200] sm:$0xff]
  %v1803 = vld [vmem:[%s3 + $0x208] sm:$0xff]
  %v1804 = vld [vmem:[%s3 + $0x210] sm:$0xff]
  %v1805 = vld [vmem:[%s3 + $0x218] sm:$0xff]
  %v1806 = vld [vmem:[%s3 + $0x220] sm:$0xff]
  %v1807 = vld [vmem:[%s3 + $0x228] sm:$0xff]
  %v1808 = vld [vmem:[%s3 + $0x230] sm:$0xff]
  %v1809 = vld [vmem:[%s3 + $0x238] sm:$0xff]
  %v1810 = vld [vmem:[%s3 + $0x240] sm:$0xff]
  %v1811 = vld [vmem:[%s3 + $0x248] sm:$0xff]
  %v1812 = vld [vmem:[%s3 + $0x250] sm:$0xff]
  %v1813 = vld [vmem:[%s3 + $0x258] sm:$0xff]
  %v1814 = vld [vmem:[%s3 + $0x260] sm:$0xff]
  %v1815 = vld [vmem:[%s3 + $0x268] sm:$0xff]
  %v1816 = vld [vmem:[%s3 + $0x270] sm:$0xff]
  %v1817 = vld [vmem:[%s3 + $0x278] sm:$0xff]
  %v1818 = vld [vmem:[%s3 + $0x280] sm:$0xff]
  %v1819 = vld [vmem:[%s3 + $0x288] sm:$0xff]
  %v1820 = vld [vmem:[%s3 + $0x290] sm:$0xff]
  %v1821 = vld [vmem:[%s3 + $0x298] sm:$0xff]
  %v1822 = vld [vmem:[%s3 + $0x2a0] sm:$0xff]
  %v1823 = vld [vmem:[%s3 + $0x2a8] sm:$0xff]
  %v1824 = vld [vmem:[%s3 + $0x2b0] sm:$0xff]
  %v1825 = vld [vmem:[%s3 + $0x2b8] sm:$0xff]
  %v1826 = vld [vmem:[%s3 + $0x2c0] sm:$0xff]
  %v1827 = vld [vmem:[%s3 + $0x2c8] sm:$0xff]
  %v1828 = vld [vmem:[%s3 + $0x2d0] sm:$0xff]
  %v1829 = vld [vmem:[%s3 + $0x2d8] sm:$0xff]
  %v1830 = vld [vmem:[%s3 + $0x2e0] sm:$0xff]
  %v1831 = vld [vmem:[%s3 + $0x2e8] sm:$0xff]
  %v1832 = vld [vmem:[%s3 + $0x2f0] sm:$0xff]
  %v1833 = vld [vmem:[%s3 + $0x2f8] sm:$0xff]
  %v1834 = vld [vmem:[%s3 + $0x300] sm:$0xff]
  %v1835 = vld [vmem:[%s3 + $0x308] sm:$0xff]
  %v1836 = vld [vmem:[%s3 + $0x310] sm:$0xff]
  %v1837 = vld [vmem:[%s3 + $0x318] sm:$0xff]
  %v1838 = vld [vmem:[%s3 + $0x320] sm:$0xff]
  %v1839 = vld [vmem:[%s3 + $0x328] sm:$0xff]
  %v1840 = vld [vmem:[%s3 + $0x330] sm:$0xff]
  %v1841 = vld [vmem:[%s3 + $0x338] sm:$0xff]
  %v1842 = vld [vmem:[%s3 + $0x340] sm:$0xff]
  %v1843 = vld [vmem:[%s3 + $0x348] sm:$0xff]
  %v1844 = vld [vmem:[%s3 + $0x350] sm:$0xff]
  %v1845 = vld [vmem:[%s3 + $0x358] sm:$0xff]
  %v1846 = vld [vmem:[%s3 + $0x360] sm:$0xff]
  %v1847 = vld [vmem:[%s3 + $0x368] sm:$0xff]
  %v1848 = vld [vmem:[%s3 + $0x370] sm:$0xff]
  %v1849 = vld [vmem:[%s3 + $0x378] sm:$0xff]
  %v1850 = vld [vmem:[%s3 + $0x380] sm:$0xff]
  %v1851 = vld [vmem:[%s3 + $0x388] sm:$0xff]
  %v1852 = vld [vmem:[%s3 + $0x390] sm:$0xff]
  %v1853 = vld [vmem:[%s3 + $0x398] sm:$0xff]
  %v1854 = vld [vmem:[%s3 + $0x3a0] sm:$0xff]
  %v1855 = vld [vmem:[%s3 + $0x3a8] sm:$0xff]
  %v1856 = vld [vmem:[%s3 + $0x3b0] sm:$0xff]
  %v1857 = vld [vmem:[%s3 + $0x3b8] sm:$0xff]
  %v1858 = vld [vmem:[%s3 + $0x3c0] sm:$0xff]
  %v1859 = vld [vmem:[%s3 + $0x3c8] sm:$0xff]
  %v1860 = vld [vmem:[%s3 + $0x3d0] sm:$0xff]
  %v1861 = vld [vmem:[%s3 + $0x3d8] sm:$0xff]
  %v1862 = vld [vmem:[%s3 + $0x3e0] sm:$0xff]
  %v1863 = vld [vmem:[%s3 + $0x3e8] sm:$0xff]
  %v1864 = vld [vmem:[%s3 + $0x3f0] sm:$0xff]
  %v1865 = vld [vmem:[%s3 + $0x3f8] sm:$0xff]
  %v1866 = vld [vmem:[%s3 + $0x400] sm:$0xff]
  %v1867 = vld [vmem:[%s3 + $0x408] sm:$0xff]
  %v1868 = vld [vmem:[%s3 + $0x410] sm:$0xff]
  %v1869 = vld [vmem:[%s3 + $0x418] sm:$0xff]
  %v1870 = vld [vmem:[%s3 + $0x420] sm:$0xff]
  %v1871 = vld [vmem:[%s3 + $0x428] sm:$0xff]
  %v1872 = vld [vmem:[%s3 + $0x430] sm:$0xff]
  %v1873 = vld [vmem:[%s3 + $0x438] sm:$0xff]
  %v1874 = vld [vmem:[%s3 + $0x440] sm:$0xff]
  %v1875 = vld [vmem:[%s3 + $0x448] sm:$0xff]
  %v1876 = vld [vmem:[%s3 + $0x450] sm:$0xff]
  %v1877 = vld [vmem:[%s3 + $0x458] sm:$0xff]
  %v1878 = vld [vmem:[%s3 + $0x460] sm:$0xff]
  %v1879 = vld [vmem:[%s3 + $0x468] sm:$0xff]
  %v1880 = vld [vmem:[%s3 + $0x470] sm:$0xff]
  %v1881 = vld [vmem:[%s3 + $0x478] sm:$0xff]
  %v1882 = vld [vmem:[%s3 + $0x480] sm:$0xff]
  %v1883 = vld [vmem:[%s3 + $0x488] sm:$0xff]
  %v1884 = vld [vmem:[%s3 + $0x490] sm:$0xff]
  %v1885 = vld [vmem:[%s3 + $0x498] sm:$0xff]
  %v1886 = vld [vmem:[%s3 + $0x4a0] sm:$0xff]
  %v1887 = vld [vmem:[%s3 + $0x4a8] sm:$0xff]
  %v1888 = vld [vmem:[%s3 + $0x4b0] sm:$0xff]
  %v1889 = vld [vmem:[%s3 + $0x4b8] sm:$0xff]
  %v1890 = vld [vmem:[%s3 + $0x4c0] sm:$0xff]
  %v1891 = vld [vmem:[%s3 + $0x4c8] sm:$0xff]
  %v1892 = vld [vmem:[%s3 + $0x4d0] sm:$0xff]
  %v1893 = vld [vmem:[%s3 + $0x4d8] sm:$0xff]
  %v1894 = vld [vmem:[%s3 + $0x4e0] sm:$0xff]
  %v1895 = vld [vmem:[%s3 + $0x4e8] sm:$0xff]
  %v1896 = vld [vmem:[%s3 + $0x4f0] sm:$0xff]
  %v1897 = vld [vmem:[%s3 + $0x4f8] sm:$0xff]
  %v1898 = vld [vmem:[%s3 + $0x500] sm:$0xff]
  %v1899 = vld [vmem:[%s3 + $0x508] sm:$0xff]
  %v1900 = vld [vmem:[%s3 + $0x510] sm:$0xff]
  %v1901 = vld [vmem:[%s3 + $0x518] sm:$0xff]
  %v1902 = vld [vmem:[%s3 + $0x520] sm:$0xff]
  %v1903 = vld [vmem:[%s3 + $0x528] sm:$0xff]
  %v1904 = vld [vmem:[%s3 + $0x530] sm:$0xff]
  %v1905 = vld [vmem:[%s3 + $0x538] sm:$0xff]
  %v1906 = vld [vmem:[%s3 + $0x540] sm:$0xff]
  %v1907 = vld [vmem:[%s3 + $0x548] sm:$0xff]
  %v1908 = vld [vmem:[%s3 + $0x550] sm:$0xff]
  %v1909 = vld [vmem:[%s3 + $0x558] sm:$0xff]
  %v1910 = vld [vmem:[%s3 + $0x560] sm:$0xff]
  %v1911 = vld [vmem:[%s3 + $0x568] sm:$0xff]
  %v1912 = vld [vmem:[%s3 + $0x570] sm:$0xff]
  %v1913 = vld [vmem:[%s3 + $0x578] sm:$0xff]
  %v1914 = vld [vmem:[%s3 + $0x580] sm:$0xff]
  %v1915 = vld [vmem:[%s3 + $0x588] sm:$0xff]
  %v1916 = vld [vmem:[%s3 + $0x590] sm:$0xff]
  %v1917 = vld [vmem:[%s3 + $0x598] sm:$0xff]
  %v1918 = vld [vmem:[%s3 + $0x5a0] sm:$0xff]
  %v1919 = vld [vmem:[%s3 + $0x5a8] sm:$0xff]
  %v1920 = vld [vmem:[%s3 + $0x5b0] sm:$0xff]
  %v1921 = vld [vmem:[%s3 + $0x5b8] sm:$0xff]
  %v1922 = vld [vmem:[%s3 + $0x5c0] sm:$0xff]
  %v1923 = vld [vmem:[%s3 + $0x5c8] sm:$0xff]
  %v1924 = vld [vmem:[%s3 + $0x5d0] sm:$0xff]
  %v1925 = vld [vmem:[%s3 + $0x5d8] sm:$0xff]
  %v1926 = vld [vmem:[%s3 + $0x5e0] sm:$0xff]
  %v1927 = vld [vmem:[%s3 + $0x5e8] sm:$0xff]
  %v1928 = vld [vmem:[%s3 + $0x5f0] sm:$0xff]
  %v1929 = vld [vmem:[%s3 + $0x5f8] sm:$0xff]
  %v1930 = vld [vmem:[%s3 + $0x600] sm:$0xff]
  %v1931 = vld [vmem:[%s3 + $0x608] sm:$0xff]
  %v1932 = vld [vmem:[%s3 + $0x610] sm:$0xff]
  %v1933 = vld [vmem:[%s3 + $0x618] sm:$0xff]
  %v1934 = vld [vmem:[%s3 + $0x620] sm:$0xff]
  %v1935 = vld [vmem:[%s3 + $0x628] sm:$0xff]
  %v1936 = vld [vmem:[%s3 + $0x630] sm:$0xff]
  %v1937 = vld [vmem:[%s3 + $0x638] sm:$0xff]
  %v1938 = vld [vmem:[%s3 + $0x640] sm:$0xff]
  %v1939 = vld [vmem:[%s3 + $0x648] sm:$0xff]
  %v1940 = vld [vmem:[%s3 + $0x650] sm:$0xff]
  %v1941 = vld [vmem:[%s3 + $0x658] sm:$0xff]
  %v1942 = vld [vmem:[%s3 + $0x660] sm:$0xff]
  %v1943 = vld [vmem:[%s3 + $0x668] sm:$0xff]
  %v1944 = vld [vmem:[%s3 + $0x670] sm:$0xff]
  %v1945 = vld [vmem:[%s3 + $0x678] sm:$0xff]
  %v1946 = vld [vmem:[%s3 + $0x680] sm:$0xff]
  %v1947 = vld [vmem:[%s3 + $0x688] sm:$0xff]
  %v1948 = vld [vmem:[%s3 + $0x690] sm:$0xff]
  %v1949 = vld [vmem:[%s3 + $0x698] sm:$0xff]
  %v1950 = vld [vmem:[%s3 + $0x6a0] sm:$0xff]
  %v1951 = vld [vmem:[%s3 + $0x6a8] sm:$0xff]
  %v1952 = vld [vmem:[%s3 + $0x6b0] sm:$0xff]
  %v1953 = vld [vmem:[%s3 + $0x6b8] sm:$0xff]
  %v1954 = vld [vmem:[%s3 + $0x6c0] sm:$0xff]
  %v1955 = vld [vmem:[%s3 + $0x6c8] sm:$0xff]
  %v1956 = vld [vmem:[%s3 + $0x6d0] sm:$0xff]
  %v1957 = vld [vmem:[%s3 + $0x6d8] sm:$0xff]
  %v1958 = vld [vmem:[%s3 + $0x6e0] sm:$0xff]
  %v1959 = vld [vmem:[%s3 + $0x6e8] sm:$0xff]
  %v1960 = vld [vmem:[%s3 + $0x6f0] sm:$0xff]
  %v1961 = vld [vmem:[%s3 + $0x6f8] sm:$0xff]
  %v1962 = vld [vmem:[%s3 + $0x700] sm:$0xff]
  %v1963 = vld [vmem:[%s3 + $0x708] sm:$0xff]
  %v1964 = vld [vmem:[%s3 + $0x710] sm:$0xff]
  %v1965 = vld [vmem:[%s3 + $0x718] sm:$0xff]
  %v1966 = vld [vmem:[%s3 + $0x720] sm:$0xff]
  %v1967 = vld [vmem:[%s3 + $0x728] sm:$0xff]
  %v1968 = vld [vmem:[%s3 + $0x730] sm:$0xff]
  %v1969 = vld [vmem:[%s3 + $0x738] sm:$0xff]
  %v1970 = vld [vmem:[%s3 + $0x740] sm:$0xff]
  %v1971 = vld [vmem:[%s3 + $0x748] sm:$0xff]
  %v1972 = vld [vmem:[%s3 + $0x750] sm:$0xff]
  %v1973 = vld [vmem:[%s3 + $0x758] sm:$0xff]
  %v1974 = vld [vmem:[%s3 + $0x760] sm:$0xff]
  %v1975 = vld [vmem:[%s3 + $0x768] sm:$0xff]
  %v1976 = vld [vmem:[%s3 + $0x770] sm:$0xff]
  %v1977 = vld [vmem:[%s3 + $0x778] sm:$0xff]
  %v1978 = vld [vmem:[%s3 + $0x780] sm:$0xff]
  %v1979 = vld [vmem:[%s3 + $0x788] sm:$0xff]
  %v1980 = vld [vmem:[%s3 + $0x790] sm:$0xff]
  %v1981 = vld [vmem:[%s3 + $0x798] sm:$0xff]
  %v1982 = vld [vmem:[%s3 + $0x7a0] sm:$0xff]
  %v1983 = vld [vmem:[%s3 + $0x7a8] sm:$0xff]
  %v1984 = vld [vmem:[%s3 + $0x7b0] sm:$0xff]
  %v1985 = vld [vmem:[%s3 + $0x7b8] sm:$0xff]
  %v1986 = vld [vmem:[%s3 + $0x7c0] sm:$0xff]
  %v1987 = vld [vmem:[%s3 + $0x7c8] sm:$0xff]
  %v1988 = vld [vmem:[%s3 + $0x7d0] sm:$0xff]
  %v1989 = vld [vmem:[%s3 + $0x7d8] sm:$0xff]
  %v1990 = vld [vmem:[%s3 + $0x7e0] sm:$0xff]
  %v1991 = vld [vmem:[%s3 + $0x7e8] sm:$0xff]
  %v1992 = vld [vmem:[%s3 + $0x7f0] sm:$0xff]
  %v1993 = vld [vmem:[%s3 + $0x7f8] sm:$0xff]
  %v1994 = vld [vmem:[%s3 + $0x800] sm:$0xff]
  %v1995 = vld [vmem:[%s3 + $0x808] sm:$0xff]
  %v1996 = vld [vmem:[%s3 + $0x810] sm:$0xff]
  %v1997 = vld [vmem:[%s3 + $0x818] sm:$0xff]
  %v1998 = vld [vmem:[%s3 + $0x820] sm:$0xff]
  %v1999 = vld [vmem:[%s3 + $0x828] sm:$0xff]
  %v2000 = vld [vmem:[%s3 + $0x830] sm:$0xff]
  %v2001 = vld [vmem:[%s3 + $0x838] sm:$0xff]
  %v2002 = vld [vmem:[%s3 + $0x840] sm:$0xff]
  %v2003 = vld [vmem:[%s3 + $0x848] sm:$0xff]
  %v2004 = vld [vmem:[%s3 + $0x850] sm:$0xff]
  %v2005 = vld [vmem:[%s3 + $0x858] sm:$0xff]
  %v2006 = vld [vmem:[%s3 + $0x860] sm:$0xff]
  %v2007 = vld [vmem:[%s3 + $0x868] sm:$0xff]
  %v2008 = vld [vmem:[%s3 + $0x870] sm:$0xff]
  %v2009 = vld [vmem:[%s3 + $0x878] sm:$0xff]
  %v2010 = vld [vmem:[%s3 + $0x880] sm:$0xff]
  %v2011 = vld [vmem:[%s3 + $0x888] sm:$0xff]
  %v2012 = vld [vmem:[%s3 + $0x890] sm:$0xff]
  %v2013 = vld [vmem:[%s3 + $0x898] sm:$0xff]
  %v2014 = vld [vmem:[%s3 + $0x8a0] sm:$0xff]
  %v2015 = vld [vmem:[%s3 + $0x8a8] sm:$0xff]
  %v2016 = vld [vmem:[%s3 + $0x8b0] sm:$0xff]
  %v2017 = vld [vmem:[%s3 + $0x8b8] sm:$0xff]
  %v2018 = vld [vmem:[%s3 + $0x8c0] sm:$0xff]
  %v2019 = vld [vmem:[%s3 + $0x8c8] sm:$0xff]
  %v2020 = vld [vmem:[%s3 + $0x8d0] sm:$0xff]
  %v2021 = vld [vmem:[%s3 + $0x8d8] sm:$0xff]
  %v2022 = vld [vmem:[%s3 + $0x8e0] sm:$0xff]
  %v2023 = vld [vmem:[%s3 + $0x8e8] sm:$0xff]
  %v2024 = vld [vmem:[%s3 + $0x8f0] sm:$0xff]
  %v2025 = vld [vmem:[%s3 + $0x8f8] sm:$0xff]
  %v2026 = vld [vmem:[%s3 + $0x900] sm:$0xff]
  %v2027 = vld [vmem:[%s3 + $0x908] sm:$0xff]
  %v2028 = vld [vmem:[%s3 + $0x910] sm:$0xff]
  %v2029 = vld [vmem:[%s3 + $0x918] sm:$0xff]
  %v2030 = vld [vmem:[%s3 + $0x920] sm:$0xff]
  %v2031 = vld [vmem:[%s3 + $0x928] sm:$0xff]
  %v2032 = vld [vmem:[%s3 + $0x930] sm:$0xff]
  %v2033 = vld [vmem:[%s3 + $0x938] sm:$0xff]
  %v2034 = vld [vmem:[%s3 + $0x940] sm:$0xff]
  %v2035 = vld [vmem:[%s3 + $0x948] sm:$0xff]
  %v2036 = vld [vmem:[%s3 + $0x950] sm:$0xff]
  %v2037 = vld [vmem:[%s3 + $0x958] sm:$0xff]
  %v2038 = vld [vmem:[%s3 + $0x960] sm:$0xff]
  %v2039 = vld [vmem:[%s3 + $0x968] sm:$0xff]
  %v2040 = vld [vmem:[%s3 + $0x970] sm:$0xff]
  %v2041 = vld [vmem:[%s3 + $0x978] sm:$0xff]
  %v2042 = vld [vmem:[%s3 + $0x980] sm:$0xff]
  %v2043 = vld [vmem:[%s3 + $0x988] sm:$0xff]
  %v2044 = vld [vmem:[%s3 + $0x990] sm:$0xff]
  %v2045 = vld [vmem:[%s3 + $0x998] sm:$0xff]
  %v2046 = vld [vmem:[%s3 + $0x9a0] sm:$0xff]
  %v2047 = vld [vmem:[%s3 + $0x9a8] sm:$0xff]
  %v2048 = vld [vmem:[%s3 + $0x9b0] sm:$0xff]
  %v2049 = vld [vmem:[%s3 + $0x9b8] sm:$0xff]
  %v2050 = vld [vmem:[%s3 + $0x9c0] sm:$0xff]
  %v2051 = vld [vmem:[%s3 + $0x9c8] sm:$0xff]
  %v2052 = vld [vmem:[%s3 + $0x9d0] sm:$0xff]
  %v2053 = vld [vmem:[%s3 + $0x9d8] sm:$0xff]
  %v2054 = vld [vmem:[%s3 + $0x9e0] sm:$0xff]
  %v2055 = vld [vmem:[%s3 + $0x9e8] sm:$0xff]
  %v2056 = vld [vmem:[%s3 + $0x9f0] sm:$0xff]
  %v2057 = vld [vmem:[%s3 + $0x9f8] sm:$0xff]
  %v2058 = vld [vmem:[%s3 + $0xa00] sm:$0xff]
  %v2059 = vld [vmem:[%s3 + $0xa08] sm:$0xff]
  %v2060 = vld [vmem:[%s3 + $0xa10] sm:$0xff]
  %v2061 = vld [vmem:[%s3 + $0xa18] sm:$0xff]
  %v2062 = vld [vmem:[%s3 + $0xa20] sm:$0xff]
  %v2063 = vld [vmem:[%s3 + $0xa28] sm:$0xff]
  %v2064 = vld [vmem:[%s3 + $0xa30] sm:$0xff]
  %v2065 = vld [vmem:[%s3 + $0xa38] sm:$0xff]
  %v2066 = vld [vmem:[%s3 + $0xa40] sm:$0xff]
  %v2067 = vld [vmem:[%s3 + $0xa48] sm:$0xff]
  %v2068 = vld [vmem:[%s3 + $0xa50] sm:$0xff]
  %v2069 = vld [vmem:[%s3 + $0xa58] sm:$0xff]
  %v2070 = vld [vmem:[%s3 + $0xa60] sm:$0xff]
  %v2071 = vld [vmem:[%s3 + $0xa68] sm:$0xff]
  %v2072 = vld [vmem:[%s3 + $0xa70] sm:$0xff]
  %v2073 = vld [vmem:[%s3 + $0xa78] sm:$0xff]
  %v2074 = vld [vmem:[%s3 + $0xa80] sm:$0xff]
  %v2075 = vld [vmem:[%s3 + $0xa88] sm:$0xff]
  %v2076 = vld [vmem:[%s3 + $0xa90] sm:$0xff]
  %v2077 = vld [vmem:[%s3 + $0xa98] sm:$0xff]
  %v2078 = vld [vmem:[%s3 + $0xaa0] sm:$0xff]
  %v2079 = vld [vmem:[%s3 + $0xaa8] sm:$0xff]
  %v2080 = vld [vmem:[%s3 + $0xab0] sm:$0xff]
  %v2081 = vld [vmem:[%s3 + $0xab8] sm:$0xff]
  %v2082 = vld [vmem:[%s3 + $0xac0] sm:$0xff]
  %v2083 = vld [vmem:[%s3 + $0xac8] sm:$0xff]
  %v2084 = vld [vmem:[%s3 + $0xad0] sm:$0xff]
  %v2085 = vld [vmem:[%s3 + $0xad8] sm:$0xff]
  %v2086 = vld [vmem:[%s3 + $0xae0] sm:$0xff]
  %v2087 = vld [vmem:[%s3 + $0xae8] sm:$0xff]
  %v2088 = vld [vmem:[%s3 + $0xaf0] sm:$0xff]
  %v2089 = vld [vmem:[%s3 + $0xaf8] sm:$0xff]
  %v2090 = vld [vmem:[%s3 + $0xb00] sm:$0xff]
  %v2091 = vld [vmem:[%s3 + $0xb08] sm:$0xff]
  %v2092 = vld [vmem:[%s3 + $0xb10] sm:$0xff]
  %v2093 = vld [vmem:[%s3 + $0xb18] sm:$0xff]
  %v2094 = vld [vmem:[%s3 + $0xb20] sm:$0xff]
  %v2095 = vld [vmem:[%s3 + $0xb28] sm:$0xff]
  %v2096 = vld [vmem:[%s3 + $0xb30] sm:$0xff]
  %v2097 = vld [vmem:[%s3 + $0xb38] sm:$0xff]
  %v2098 = vld [vmem:[%s3 + $0xb40] sm:$0xff]
  %v2099 = vld [vmem:[%s3 + $0xb48] sm:$0xff]
  %v2100 = vld [vmem:[%s3 + $0xb50] sm:$0xff]
  %v2101 = vld [vmem:[%s3 + $0xb58] sm:$0xff]
  %v2102 = vld [vmem:[%s3 + $0xb60] sm:$0xff]
  %v2103 = vld [vmem:[%s3 + $0xb68] sm:$0xff]
  %v2104 = vld [vmem:[%s3 + $0xb70] sm:$0xff]
  %v2105 = vld [vmem:[%s3 + $0xb78] sm:$0xff]
  %v2106 = vld [vmem:[%s3 + $0xb80] sm:$0xff]
  %v2107 = vld [vmem:[%s3 + $0xb88] sm:$0xff]
  %v2108 = vld [vmem:[%s3 + $0xb90] sm:$0xff]
  %v2109 = vld [vmem:[%s3 + $0xb98] sm:$0xff]
  %v2110 = vld [vmem:[%s3 + $0xba0] sm:$0xff]
  %v2111 = vld [vmem:[%s3 + $0xba8] sm:$0xff]
  %v2112 = vld [vmem:[%s3 + $0xbb0] sm:$0xff]
  %v2113 = vld [vmem:[%s3 + $0xbb8] sm:$0xff]
  %v2114 = vld [vmem:[%s3 + $0xbc0] sm:$0xff]
  %v2115 = vld [vmem:[%s3 + $0xbc8] sm:$0xff]
  %v2116 = vld [vmem:[%s3 + $0xbd0] sm:$0xff]
  %v2117 = vld [vmem:[%s3 + $0xbd8] sm:$0xff]
  %v2118 = vld [vmem:[%s3 + $0xbe0] sm:$0xff]
  %v2119 = vld [vmem:[%s3 + $0xbe8] sm:$0xff]
  %v2120 = vld [vmem:[%s3 + $0xbf0] sm:$0xff]
  %v2121 = vld [vmem:[%s3 + $0xbf8] sm:$0xff]
  %v2122 = vld [vmem:[%s3 + $0xc00] sm:$0xff]
  %v2123 = vld [vmem:[%s3 + $0xc08] sm:$0xff]
  %v2124 = vld [vmem:[%s3 + $0xc10] sm:$0xff]
  %v2125 = vld [vmem:[%s3 + $0xc18] sm:$0xff]
  %v2126 = vld [vmem:[%s3 + $0xc20] sm:$0xff]
  %v2127 = vld [vmem:[%s3 + $0xc28] sm:$0xff]
  %v2128 = vld [vmem:[%s3 + $0xc30] sm:$0xff]
  %v2129 = vld [vmem:[%s3 + $0xc38] sm:$0xff]
  %v2130 = vld [vmem:[%s3 + $0xc40] sm:$0xff]
  %v2131 = vld [vmem:[%s3 + $0xc48] sm:$0xff]
  %v2132 = vld [vmem:[%s3 + $0xc50] sm:$0xff]
  %v2133 = vld [vmem:[%s3 + $0xc58] sm:$0xff]
  %v2134 = vld [vmem:[%s3 + $0xc60] sm:$0xff]
  %v2135 = vld [vmem:[%s3 + $0xc68] sm:$0xff]
  %v2136 = vld [vmem:[%s3 + $0xc70] sm:$0xff]
  %v2137 = vld [vmem:[%s3 + $0xc78] sm:$0xff]
  %v2138 = vld [vmem:[%s3 + $0xc80] sm:$0xff]
  %v2139 = vld [vmem:[%s3 + $0xc88] sm:$0xff]
  %v2140 = vld [vmem:[%s3 + $0xc90] sm:$0xff]
  %v2141 = vld [vmem:[%s3 + $0xc98] sm:$0xff]
  %v2142 = vld [vmem:[%s3 + $0xca0] sm:$0xff]
  %v2143 = vld [vmem:[%s3 + $0xca8] sm:$0xff]
  %v2144 = vld [vmem:[%s3 + $0xcb0] sm:$0xff]
  %v2145 = vld [vmem:[%s3 + $0xcb8] sm:$0xff]
  %v2146 = vld [vmem:[%s3 + $0xcc0] sm:$0xff]
  %v2147 = vld [vmem:[%s3 + $0xcc8] sm:$0xff]
  %v2148 = vld [vmem:[%s3 + $0xcd0] sm:$0xff]
  %v2149 = vld [vmem:[%s3 + $0xcd8] sm:$0xff]
  %v2150 = vld [vmem:[%s3 + $0xce0] sm:$0xff]
  %v2151 = vld [vmem:[%s3 + $0xce8] sm:$0xff]
  %v2152 = vld [vmem:[%s3 + $0xcf0] sm:$0xff]
  %v2153 = vld [vmem:[%s3 + $0xcf8] sm:$0xff]
  %v2154 = vld [vmem:[%s3 + $0xd00] sm:$0xff]
  %v2155 = vld [vmem:[%s3 + $0xd08] sm:$0xff]
  %v2156 = vld [vmem:[%s3 + $0xd10] sm:$0xff]
  %v2157 = vld [vmem:[%s3 + $0xd18] sm:$0xff]
  %v2158 = vld [vmem:[%s3 + $0xd20] sm:$0xff]
  %v2159 = vld [vmem:[%s3 + $0xd28] sm:$0xff]
  %v2160 = vld [vmem:[%s3 + $0xd30] sm:$0xff]
  %v2161 = vld [vmem:[%s3 + $0xd38] sm:$0xff]
  %v2162 = vld [vmem:[%s3 + $0xd40] sm:$0xff]
  %v2163 = vld [vmem:[%s3 + $0xd48] sm:$0xff]
  %v2164 = vld [vmem:[%s3 + $0xd50] sm:$0xff]
  %v2165 = vld [vmem:[%s3 + $0xd58] sm:$0xff]
  %v2166 = vld [vmem:[%s3 + $0xd60] sm:$0xff]
  %v2167 = vld [vmem:[%s3 + $0xd68] sm:$0xff]
  %v2168 = vld [vmem:[%s3 + $0xd70] sm:$0xff]
  %v2169 = vld [vmem:[%s3 + $0xd78] sm:$0xff]
  %v2170 = vld [vmem:[%s4] sm:$0xf]
  %v2172 = vperm.slane %v2170, 0
  %v2173 = vperm.slane %v2170, 1
  %v2174 = vperm.slane %v2170, 2
  %v2175 = vperm.slane %v2170, 3
  %vm2180 = vcmask 785408
  %v2182 = vsel %vm2180, %v1737, 0
  %2184 = vmatpush.msra.mxu0 %v1798
  %2185 = vmatpush.msra.mxu0 %v1794
  %2186 = vmatpush.msra.mxu0 %v1790
  %2187 = vmatpush.msra.mxu0 %v1786
  %2188 = vmatpush.msra.mxu0 %v1782
  %2189 = vmatpush.msra.mxu0 %v1778
  %2190 = vmatpush.msra.mxu0 %v1774
  %2191 = vmatpush.msra.mxu0 %v1770
  %2192 = vmatpush.msra.mxu0 %v1766
  %2193 = vmatpush.msra.mxu0 %v1762
  %2194 = vmatpush.msra.mxu0 %v1758
  %2195 = vmatpush.msra.mxu0 %v1754
  %2196 = vmatpush.msra.mxu0 %v1750
  %2197 = vmatpush.msra.mxu0 %v1746
  %2198 = vmatpush.msra.mxu0 %v1742
  %2199 = vmatpush.msra.mxu0 %v1738
  %2200 = vmatmul.f32.gmra.mxu0 %v1731
  %v2201 = vpop.f32.mrf.mxu0
  %v2202 = vadd.f32 %v2172, %v2201
  %2203 = vdwg.mxu0
  %2204 = vmatpush.msra.mxu0 %v1862
  %2205 = vmatpush.msra.mxu0 %v1858
  %2206 = vmatpush.msra.mxu0 %v1854
  %2207 = vmatpush.msra.mxu0 %v1850
  %2208 = vmatpush.msra.mxu0 %v1846
  %2209 = vmatpush.msra.mxu0 %v1842
  %2210 = vmatpush.msra.mxu0 %v1838
  %2211 = vmatpush.msra.mxu0 %v1834
  %2212 = vmatpush.msra.mxu0 %v1830
  %2213 = vmatpush.msra.mxu0 %v1826
  %2214 = vmatpush.msra.mxu0 %v1822
  %2215 = vmatpush.msra.mxu0 %v1818
  %2216 = vmatpush.msra.mxu0 %v1814
  %2217 = vmatpush.msra.mxu0 %v1810
  %2218 = vmatpush.msra.mxu0 %v1806
  %2219 = vmatpush.msra.mxu0 %v1802
  %2220 = vmatmul.f32.gmra.mxu0 %v1732
  %v2221 = vpop.f32.mrf.mxu0
  %v2222 = vadd.f32 %v2202, %v2221
  %2223 = vdwg.mxu0
  %2224 = vmatpush.msra.mxu0 %v1926
  %2225 = vmatpush.msra.mxu0 %v1922
  %2226 = vmatpush.msra.mxu0 %v1918
  %2227 = vmatpush.msra.mxu0 %v1914
  %2228 = vmatpush.msra.mxu0 %v1910
  %2229 = vmatpush.msra.mxu0 %v1906
  %2230 = vmatpush.msra.mxu0 %v1902
  %2231 = vmatpush.msra.mxu0 %v1898
  %2232 = vmatpush.msra.mxu0 %v1894
  %2233 = vmatpush.msra.mxu0 %v1890
  %2234 = vmatpush.msra.mxu0 %v1886
  %2235 = vmatpush.msra.mxu0 %v1882
  %2236 = vmatpush.msra.mxu0 %v1878
  %2237 = vmatpush.msra.mxu0 %v1874
  %2238 = vmatpush.msra.mxu0 %v1870
  %2239 = vmatpush.msra.mxu0 %v1866
  %2240 = vmatmul.f32.gmra.mxu0 %v1733
  %v2241 = vpop.f32.mrf.mxu0
  %v2242 = vadd.f32 %v2222, %v2241
  %2243 = vdwg.mxu0
  %2244 = vmatpush.msra.mxu0 %v1990
  %2245 = vmatpush.msra.mxu0 %v1986
  %2246 = vmatpush.msra.mxu0 %v1982
  %2247 = vmatpush.msra.mxu0 %v1978
  %2248 = vmatpush.msra.mxu0 %v1974
  %2249 = vmatpush.msra.mxu0 %v1970
  %2250 = vmatpush.msra.mxu0 %v1966
  %2251 = vmatpush.msra.mxu0 %v1962
  %2252 = vmatpush.msra.mxu0 %v1958
  %2253 = vmatpush.msra.mxu0 %v1954
  %2254 = vmatpush.msra.mxu0 %v1950
  %2255 = vmatpush.msra.mxu0 %v1946
  %2256 = vmatpush.msra.mxu0 %v1942
  %2257 = vmatpush.msra.mxu0 %v1938
  %2258 = vmatpush.msra.mxu0 %v1934
  %2259 = vmatpush.msra.mxu0 %v1930
  %2260 = vmatmul.f32.gmra.mxu0 %v1734
  %v2261 = vpop.f32.mrf.mxu0
  %v2262 = vadd.f32 %v2242, %v2261
  %2263 = vdwg.mxu0
  %2264 = vmatpush.msra.mxu0 %v2054
  %2265 = vmatpush.msra.mxu0 %v2050
  %2266 = vmatpush.msra.mxu0 %v2046
  %2267 = vmatpush.msra.mxu0 %v2042
  %2268 = vmatpush.msra.mxu0 %v2038
  %2269 = vmatpush.msra.mxu0 %v2034
  %2270 = vmatpush.msra.mxu0 %v2030
  %2271 = vmatpush.msra.mxu0 %v2026
  %2272 = vmatpush.msra.mxu0 %v2022
  %2273 = vmatpush.msra.mxu0 %v2018
  %2274 = vmatpush.msra.mxu0 %v2014
  %2275 = vmatpush.msra.mxu0 %v2010
  %2276 = vmatpush.msra.mxu0 %v2006
  %2277 = vmatpush.msra.mxu0 %v2002
  %2278 = vmatpush.msra.mxu0 %v1998
  %2279 = vmatpush.msra.mxu0 %v1994
  %2280 = vmatmul.f32.gmra.mxu0 %v1735
  %v2281 = vpop.f32.mrf.mxu0
  %v2282 = vadd.f32 %v2262, %v2281
  %2283 = vdwg.mxu0
  %2284 = vmatpush.msra.mxu0 %v2118
  %2285 = vmatpush.msra.mxu0 %v2114
  %2286 = vmatpush.msra.mxu0 %v2110
  %2287 = vmatpush.msra.mxu0 %v2106
  %2288 = vmatpush.msra.mxu0 %v2102
  %2289 = vmatpush.msra.mxu0 %v2098
  %2290 = vmatpush.msra.mxu0 %v2094
  %2291 = vmatpush.msra.mxu0 %v2090
  %2292 = vmatpush.msra.mxu0 %v2086
  %2293 = vmatpush.msra.mxu0 %v2082
  %2294 = vmatpush.msra.mxu0 %v2078
  %2295 = vmatpush.msra.mxu0 %v2074
  %2296 = vmatpush.msra.mxu0 %v2070
  %2297 = vmatpush.msra.mxu0 %v2066
  %2298 = vmatpush.msra.mxu0 %v2062
  %2299 = vmatpush.msra.mxu0 %v2058
  %2300 = vmatmul.f32.gmra.mxu0 %v1736
  %v2301 = vpop.f32.mrf.mxu0
  %v2302 = vadd.f32 %v2282, %v2301
  %2303 = vdwg.mxu0
  %2304 = vmatpush.msra.mxu0 0.0
  %2305 = vmatpush.msra.mxu0 0.0
  %2306 = vmatpush.msra.mxu0 0.0
  %2307 = vmatpush.msra.mxu0 0.0
  %2308 = vmatpush.msra.mxu0 %v2166
  %2309 = vmatpush.msra.mxu0 %v2162
  %2310 = vmatpush.msra.mxu0 %v2158
  %2311 = vmatpush.msra.mxu0 %v2154
  %2312 = vmatpush.msra.mxu0 %v2150
  %2313 = vmatpush.msra.mxu0 %v2146
  %2314 = vmatpush.msra.mxu0 %v2142
  %2315 = vmatpush.msra.mxu0 %v2138
  %2316 = vmatpush.msra.mxu0 %v2134
  %2317 = vmatpush.msra.mxu0 %v2130
  %2318 = vmatpush.msra.mxu0 %v2126
  %2319 = vmatpush.msra.mxu0 %v2122
  %2320 = vmatmul.f32.gmra.mxu0 %v2182
  %v2321 = vpop.f32.mrf.mxu0
  %v2322 = vadd.f32 %v2302, %v2321
  %2323 = vdwg.mxu0
  %2324 = vmatpush.msra.mxu0 %v1799
  %2325 = vmatpush.msra.mxu0 %v1795
  %2326 = vmatpush.msra.mxu0 %v1791
  %2327 = vmatpush.msra.mxu0 %v1787
  %2328 = vmatpush.msra.mxu0 %v1783
  %2329 = vmatpush.msra.mxu0 %v1779
  %2330 = vmatpush.msra.mxu0 %v1775
  %2331 = vmatpush.msra.mxu0 %v1771
  %2332 = vmatpush.msra.mxu0 %v1767
  %2333 = vmatpush.msra.mxu0 %v1763
  %2334 = vmatpush.msra.mxu0 %v1759
  %2335 = vmatpush.msra.mxu0 %v1755
  %2336 = vmatpush.msra.mxu0 %v1751
  %2337 = vmatpush.msra.mxu0 %v1747
  %2338 = vmatpush.msra.mxu0 %v1743
  %2339 = vmatpush.msra.mxu0 %v1739
  %2340 = vmatmul.f32.gmra.mxu0 %v1731
  %v2341 = vpop.f32.mrf.mxu0
  %v2342 = vadd.f32 %v2173, %v2341
  %2343 = vdwg.mxu0
  %2344 = vmatpush.msra.mxu0 %v1863
  %2345 = vmatpush.msra.mxu0 %v1859
  %2346 = vmatpush.msra.mxu0 %v1855
  %2347 = vmatpush.msra.mxu0 %v1851
  %2348 = vmatpush.msra.mxu0 %v1847
  %2349 = vmatpush.msra.mxu0 %v1843
  %2350 = vmatpush.msra.mxu0 %v1839
  %2351 = vmatpush.msra.mxu0 %v1835
  %2352 = vmatpush.msra.mxu0 %v1831
  %2353 = vmatpush.msra.mxu0 %v1827
  %2354 = vmatpush.msra.mxu0 %v1823
  %2355 = vmatpush.msra.mxu0 %v1819
  %2356 = vmatpush.msra.mxu0 %v1815
  %2357 = vmatpush.msra.mxu0 %v1811
  %2358 = vmatpush.msra.mxu0 %v1807
  %2359 = vmatpush.msra.mxu0 %v1803
  %2360 = vmatmul.f32.gmra.mxu0 %v1732
  %v2361 = vpop.f32.mrf.mxu0
  %v2362 = vadd.f32 %v2342, %v2361
  %2363 = vdwg.mxu0
  %2364 = vmatpush.msra.mxu0 %v1927
  %2365 = vmatpush.msra.mxu0 %v1923
  %2366 = vmatpush.msra.mxu0 %v1919
  %2367 = vmatpush.msra.mxu0 %v1915
  %2368 = vmatpush.msra.mxu0 %v1911
  %2369 = vmatpush.msra.mxu0 %v1907
  %2370 = vmatpush.msra.mxu0 %v1903
  %2371 = vmatpush.msra.mxu0 %v1899
  %2372 = vmatpush.msra.mxu0 %v1895
  %2373 = vmatpush.msra.mxu0 %v1891
  %2374 = vmatpush.msra.mxu0 %v1887
  %2375 = vmatpush.msra.mxu0 %v1883
  %2376 = vmatpush.msra.mxu0 %v1879
  %2377 = vmatpush.msra.mxu0 %v1875
  %2378 = vmatpush.msra.mxu0 %v1871
  %2379 = vmatpush.msra.mxu0 %v1867
  %2380 = vmatmul.f32.gmra.mxu0 %v1733
  %v2381 = vpop.f32.mrf.mxu0
  %v2382 = vadd.f32 %v2362, %v2381
  %2383 = vdwg.mxu0
  %2384 = vmatpush.msra.mxu0 %v1991
  %2385 = vmatpush.msra.mxu0 %v1987
  %2386 = vmatpush.msra.mxu0 %v1983
  %2387 = vmatpush.msra.mxu0 %v1979
  %2388 = vmatpush.msra.mxu0 %v1975
  %2389 = vmatpush.msra.mxu0 %v1971
  %2390 = vmatpush.msra.mxu0 %v1967
  %2391 = vmatpush.msra.mxu0 %v1963
  %2392 = vmatpush.msra.mxu0 %v1959
  %2393 = vmatpush.msra.mxu0 %v1955
  %2394 = vmatpush.msra.mxu0 %v1951
  %2395 = vmatpush.msra.mxu0 %v1947
  %2396 = vmatpush.msra.mxu0 %v1943
  %2397 = vmatpush.msra.mxu0 %v1939
  %2398 = vmatpush.msra.mxu0 %v1935
  %2399 = vmatpush.msra.mxu0 %v1931
  %2400 = vmatmul.f32.gmra.mxu0 %v1734
  %v2401 = vpop.f32.mrf.mxu0
  %v2402 = vadd.f32 %v2382, %v2401
  %2403 = vdwg.mxu0
  %2404 = vmatpush.msra.mxu0 %v2055
  %2405 = vmatpush.msra.mxu0 %v2051
  %2406 = vmatpush.msra.mxu0 %v2047
  %2407 = vmatpush.msra.mxu0 %v2043
  %2408 = vmatpush.msra.mxu0 %v2039
  %2409 = vmatpush.msra.mxu0 %v2035
  %2410 = vmatpush.msra.mxu0 %v2031
  %2411 = vmatpush.msra.mxu0 %v2027
  %2412 = vmatpush.msra.mxu0 %v2023
  %2413 = vmatpush.msra.mxu0 %v2019
  %2414 = vmatpush.msra.mxu0 %v2015
  %2415 = vmatpush.msra.mxu0 %v2011
  %2416 = vmatpush.msra.mxu0 %v2007
  %2417 = vmatpush.msra.mxu0 %v2003
  %2418 = vmatpush.msra.mxu0 %v1999
  %2419 = vmatpush.msra.mxu0 %v1995
  %2420 = vmatmul.f32.gmra.mxu0 %v1735
  %v2421 = vpop.f32.mrf.mxu0
  %v2422 = vadd.f32 %v2402, %v2421
  %2423 = vdwg.mxu0
  %2424 = vmatpush.msra.mxu0 %v2119
  %2425 = vmatpush.msra.mxu0 %v2115
  %2426 = vmatpush.msra.mxu0 %v2111
  %2427 = vmatpush.msra.mxu0 %v2107
  %2428 = vmatpush.msra.mxu0 %v2103
  %2429 = vmatpush.msra.mxu0 %v2099
  %2430 = vmatpush.msra.mxu0 %v2095
  %2431 = vmatpush.msra.mxu0 %v2091
  %2432 = vmatpush.msra.mxu0 %v2087
  %2433 = vmatpush.msra.mxu0 %v2083
  %2434 = vmatpush.msra.mxu0 %v2079
  %2435 = vmatpush.msra.mxu0 %v2075
  %2436 = vmatpush.msra.mxu0 %v2071
  %2437 = vmatpush.msra.mxu0 %v2067
  %2438 = vmatpush.msra.mxu0 %v2063
  %2439 = vmatpush.msra.mxu0 %v2059
  %2440 = vmatmul.f32.gmra.mxu0 %v1736
  %v2441 = vpop.f32.mrf.mxu0
  %v2442 = vadd.f32 %v2422, %v2441
  %2443 = vdwg.mxu0
  %2444 = vmatpush.msra.mxu0 0.0
  %2445 = vmatpush.msra.mxu0 0.0
  %2446 = vmatpush.msra.mxu0 0.0
  %2447 = vmatpush.msra.mxu0 0.0
  %2448 = vmatpush.msra.mxu0 %v2167
  %2449 = vmatpush.msra.mxu0 %v2163
  %2450 = vmatpush.msra.mxu0 %v2159
  %2451 = vmatpush.msra.mxu0 %v2155
  %2452 = vmatpush.msra.mxu0 %v2151
  %2453 = vmatpush.msra.mxu0 %v2147
  %2454 = vmatpush.msra.mxu0 %v2143
  %2455 = vmatpush.msra.mxu0 %v2139
  %2456 = vmatpush.msra.mxu0 %v2135
  %2457 = vmatpush.msra.mxu0 %v2131
  %2458 = vmatpush.msra.mxu0 %v2127
  %2459 = vmatpush.msra.mxu0 %v2123
  %2460 = vmatmul.f32.gmra.mxu0 %v2182
  %v2461 = vpop.f32.mrf.mxu0
  %v2462 = vadd.f32 %v2442, %v2461
  %2463 = vdwg.mxu0
  %2464 = vmatpush.msra.mxu0 %v1800
  %2465 = vmatpush.msra.mxu0 %v1796
  %2466 = vmatpush.msra.mxu0 %v1792
  %2467 = vmatpush.msra.mxu0 %v1788
  %2468 = vmatpush.msra.mxu0 %v1784
  %2469 = vmatpush.msra.mxu0 %v1780
  %2470 = vmatpush.msra.mxu0 %v1776
  %2471 = vmatpush.msra.mxu0 %v1772
  %2472 = vmatpush.msra.mxu0 %v1768
  %2473 = vmatpush.msra.mxu0 %v1764
  %2474 = vmatpush.msra.mxu0 %v1760
  %2475 = vmatpush.msra.mxu0 %v1756
  %2476 = vmatpush.msra.mxu0 %v1752
  %2477 = vmatpush.msra.mxu0 %v1748
  %2478 = vmatpush.msra.mxu0 %v1744
  %2479 = vmatpush.msra.mxu0 %v1740
  %2480 = vmatmul.f32.gmra.mxu0 %v1731
  %v2481 = vpop.f32.mrf.mxu0
  %v2482 = vadd.f32 %v2174, %v2481
  %2483 = vdwg.mxu0
  %2484 = vmatpush.msra.mxu0 %v1864
  %2485 = vmatpush.msra.mxu0 %v1860
  %2486 = vmatpush.msra.mxu0 %v1856
  %2487 = vmatpush.msra.mxu0 %v1852
  %2488 = vmatpush.msra.mxu0 %v1848
  %2489 = vmatpush.msra.mxu0 %v1844
  %2490 = vmatpush.msra.mxu0 %v1840
  %2491 = vmatpush.msra.mxu0 %v1836
  %2492 = vmatpush.msra.mxu0 %v1832
  %2493 = vmatpush.msra.mxu0 %v1828
  %2494 = vmatpush.msra.mxu0 %v1824
  %2495 = vmatpush.msra.mxu0 %v1820
  %2496 = vmatpush.msra.mxu0 %v1816
  %2497 = vmatpush.msra.mxu0 %v1812
  %2498 = vmatpush.msra.mxu0 %v1808
  %2499 = vmatpush.msra.mxu0 %v1804
  %2500 = vmatmul.f32.gmra.mxu0 %v1732
  %v2501 = vpop.f32.mrf.mxu0
  %v2502 = vadd.f32 %v2482, %v2501
  %2503 = vdwg.mxu0
  %2504 = vmatpush.msra.mxu0 %v1928
  %2505 = vmatpush.msra.mxu0 %v1924
  %2506 = vmatpush.msra.mxu0 %v1920
  %2507 = vmatpush.msra.mxu0 %v1916
  %2508 = vmatpush.msra.mxu0 %v1912
  %2509 = vmatpush.msra.mxu0 %v1908
  %2510 = vmatpush.msra.mxu0 %v1904
  %2511 = vmatpush.msra.mxu0 %v1900
  %2512 = vmatpush.msra.mxu0 %v1896
  %2513 = vmatpush.msra.mxu0 %v1892
  %2514 = vmatpush.msra.mxu0 %v1888
  %2515 = vmatpush.msra.mxu0 %v1884
  %2516 = vmatpush.msra.mxu0 %v1880
  %2517 = vmatpush.msra.mxu0 %v1876
  %2518 = vmatpush.msra.mxu0 %v1872
  %2519 = vmatpush.msra.mxu0 %v1868
  %2520 = vmatmul.f32.gmra.mxu0 %v1733
  %v2521 = vpop.f32.mrf.mxu0
  %v2522 = vadd.f32 %v2502, %v2521
  %2523 = vdwg.mxu0
  %2524 = vmatpush.msra.mxu0 %v1992
  %2525 = vmatpush.msra.mxu0 %v1988
  %2526 = vmatpush.msra.mxu0 %v1984
  %2527 = vmatpush.msra.mxu0 %v1980
  %2528 = vmatpush.msra.mxu0 %v1976
  %2529 = vmatpush.msra.mxu0 %v1972
  %2530 = vmatpush.msra.mxu0 %v1968
  %2531 = vmatpush.msra.mxu0 %v1964
  %2532 = vmatpush.msra.mxu0 %v1960
  %2533 = vmatpush.msra.mxu0 %v1956
  %2534 = vmatpush.msra.mxu0 %v1952
  %2535 = vmatpush.msra.mxu0 %v1948
  %2536 = vmatpush.msra.mxu0 %v1944
  %2537 = vmatpush.msra.mxu0 %v1940
  %2538 = vmatpush.msra.mxu0 %v1936
  %2539 = vmatpush.msra.mxu0 %v1932
  %2540 = vmatmul.f32.gmra.mxu0 %v1734
  %v2541 = vpop.f32.mrf.mxu0
  %v2542 = vadd.f32 %v2522, %v2541
  %2543 = vdwg.mxu0
  %2544 = vmatpush.msra.mxu0 %v2056
  %2545 = vmatpush.msra.mxu0 %v2052
  %2546 = vmatpush.msra.mxu0 %v2048
  %2547 = vmatpush.msra.mxu0 %v2044
  %2548 = vmatpush.msra.mxu0 %v2040
  %2549 = vmatpush.msra.mxu0 %v2036
  %2550 = vmatpush.msra.mxu0 %v2032
  %2551 = vmatpush.msra.mxu0 %v2028
  %2552 = vmatpush.msra.mxu0 %v2024
  %2553 = vmatpush.msra.mxu0 %v2020
  %2554 = vmatpush.msra.mxu0 %v2016
  %2555 = vmatpush.msra.mxu0 %v2012
  %2556 = vmatpush.msra.mxu0 %v2008
  %2557 = vmatpush.msra.mxu0 %v2004
  %2558 = vmatpush.msra.mxu0 %v2000
  %2559 = vmatpush.msra.mxu0 %v1996
  %2560 = vmatmul.f32.gmra.mxu0 %v1735
  %v2561 = vpop.f32.mrf.mxu0
  %v2562 = vadd.f32 %v2542, %v2561
  %2563 = vdwg.mxu0
  %2564 = vmatpush.msra.mxu0 %v2120
  %2565 = vmatpush.msra.mxu0 %v2116
  %2566 = vmatpush.msra.mxu0 %v2112
  %2567 = vmatpush.msra.mxu0 %v2108
  %2568 = vmatpush.msra.mxu0 %v2104
  %2569 = vmatpush.msra.mxu0 %v2100
  %2570 = vmatpush.msra.mxu0 %v2096
  %2571 = vmatpush.msra.mxu0 %v2092
  %2572 = vmatpush.msra.mxu0 %v2088
  %2573 = vmatpush.msra.mxu0 %v2084
  %2574 = vmatpush.msra.mxu0 %v2080
  %2575 = vmatpush.msra.mxu0 %v2076
  %2576 = vmatpush.msra.mxu0 %v2072
  %2577 = vmatpush.msra.mxu0 %v2068
  %2578 = vmatpush.msra.mxu0 %v2064
  %2579 = vmatpush.msra.mxu0 %v2060
  %2580 = vmatmul.f32.gmra.mxu0 %v1736
  %v2581 = vpop.f32.mrf.mxu0
  %v2582 = vadd.f32 %v2562, %v2581
  %2583 = vdwg.mxu0
  %2584 = vmatpush.msra.mxu0 0.0
  %2585 = vmatpush.msra.mxu0 0.0
  %2586 = vmatpush.msra.mxu0 0.0
  %2587 = vmatpush.msra.mxu0 0.0
  %2588 = vmatpush.msra.mxu0 %v2168
  %2589 = vmatpush.msra.mxu0 %v2164
  %2590 = vmatpush.msra.mxu0 %v2160
  %2591 = vmatpush.msra.mxu0 %v2156
  %2592 = vmatpush.msra.mxu0 %v2152
  %2593 = vmatpush.msra.mxu0 %v2148
  %2594 = vmatpush.msra.mxu0 %v2144
  %2595 = vmatpush.msra.mxu0 %v2140
  %2596 = vmatpush.msra.mxu0 %v2136
  %2597 = vmatpush.msra.mxu0 %v2132
  %2598 = vmatpush.msra.mxu0 %v2128
  %2599 = vmatpush.msra.mxu0 %v2124
  %2600 = vmatmul.f32.gmra.mxu0 %v2182
  %v2601 = vpop.f32.mrf.mxu0
  %v2602 = vadd.f32 %v2582, %v2601
  %2603 = vdwg.mxu0
  %2604 = vmatpush.msra.mxu0 %v1801
  %2605 = vmatpush.msra.mxu0 %v1797
  %2606 = vmatpush.msra.mxu0 %v1793
  %2607 = vmatpush.msra.mxu0 %v1789
  %2608 = vmatpush.msra.mxu0 %v1785
  %2609 = vmatpush.msra.mxu0 %v1781
  %2610 = vmatpush.msra.mxu0 %v1777
  %2611 = vmatpush.msra.mxu0 %v1773
  %2612 = vmatpush.msra.mxu0 %v1769
  %2613 = vmatpush.msra.mxu0 %v1765
  %2614 = vmatpush.msra.mxu0 %v1761
  %2615 = vmatpush.msra.mxu0 %v1757
  %2616 = vmatpush.msra.mxu0 %v1753
  %2617 = vmatpush.msra.mxu0 %v1749
  %2618 = vmatpush.msra.mxu0 %v1745
  %2619 = vmatpush.msra.mxu0 %v1741
  %2620 = vmatmul.f32.gmra.mxu0 %v1731
  %v2621 = vpop.f32.mrf.mxu0
  %v2622 = vadd.f32 %v2175, %v2621
  %2623 = vdwg.mxu0
  %2624 = vmatpush.msra.mxu0 %v1865
  %2625 = vmatpush.msra.mxu0 %v1861
  %2626 = vmatpush.msra.mxu0 %v1857
  %2627 = vmatpush.msra.mxu0 %v1853
  %2628 = vmatpush.msra.mxu0 %v1849
  %2629 = vmatpush.msra.mxu0 %v1845
  %2630 = vmatpush.msra.mxu0 %v1841
  %2631 = vmatpush.msra.mxu0 %v1837
  %2632 = vmatpush.msra.mxu0 %v1833
  %2633 = vmatpush.msra.mxu0 %v1829
  %2634 = vmatpush.msra.mxu0 %v1825
  %2635 = vmatpush.msra.mxu0 %v1821
  %2636 = vmatpush.msra.mxu0 %v1817
  %2637 = vmatpush.msra.mxu0 %v1813
  %2638 = vmatpush.msra.mxu0 %v1809
  %2639 = vmatpush.msra.mxu0 %v1805
  %2640 = vmatmul.f32.gmra.mxu0 %v1732
  %v2641 = vpop.f32.mrf.mxu0
  %v2642 = vadd.f32 %v2622, %v2641
  %2643 = vdwg.mxu0
  %2644 = vmatpush.msra.mxu0 %v1929
  %2645 = vmatpush.msra.mxu0 %v1925
  %2646 = vmatpush.msra.mxu0 %v1921
  %2647 = vmatpush.msra.mxu0 %v1917
  %2648 = vmatpush.msra.mxu0 %v1913
  %2649 = vmatpush.msra.mxu0 %v1909
  %2650 = vmatpush.msra.mxu0 %v1905
  %2651 = vmatpush.msra.mxu0 %v1901
  %2652 = vmatpush.msra.mxu0 %v1897
  %2653 = vmatpush.msra.mxu0 %v1893
  %2654 = vmatpush.msra.mxu0 %v1889
  %2655 = vmatpush.msra.mxu0 %v1885
  %2656 = vmatpush.msra.mxu0 %v1881
  %2657 = vmatpush.msra.mxu0 %v1877
  %2658 = vmatpush.msra.mxu0 %v1873
  %2659 = vmatpush.msra.mxu0 %v1869
  %2660 = vmatmul.f32.gmra.mxu0 %v1733
  %v2661 = vpop.f32.mrf.mxu0
  %v2662 = vadd.f32 %v2642, %v2661
  %2663 = vdwg.mxu0
  %2664 = vmatpush.msra.mxu0 %v1993
  %2665 = vmatpush.msra.mxu0 %v1989
  %2666 = vmatpush.msra.mxu0 %v1985
  %2667 = vmatpush.msra.mxu0 %v1981
  %2668 = vmatpush.msra.mxu0 %v1977
  %2669 = vmatpush.msra.mxu0 %v1973
  %2670 = vmatpush.msra.mxu0 %v1969
  %2671 = vmatpush.msra.mxu0 %v1965
  %2672 = vmatpush.msra.mxu0 %v1961
  %2673 = vmatpush.msra.mxu0 %v1957
  %2674 = vmatpush.msra.mxu0 %v1953
  %2675 = vmatpush.msra.mxu0 %v1949
  %2676 = vmatpush.msra.mxu0 %v1945
  %2677 = vmatpush.msra.mxu0 %v1941
  %2678 = vmatpush.msra.mxu0 %v1937
  %2679 = vmatpush.msra.mxu0 %v1933
  %2680 = vmatmul.f32.gmra.mxu0 %v1734
  %v2681 = vpop.f32.mrf.mxu0
  %v2682 = vadd.f32 %v2662, %v2681
  %2683 = vdwg.mxu0
  %2684 = vmatpush.msra.mxu0 %v2057
  %2685 = vmatpush.msra.mxu0 %v2053
  %2686 = vmatpush.msra.mxu0 %v2049
  %2687 = vmatpush.msra.mxu0 %v2045
  %2688 = vmatpush.msra.mxu0 %v2041
  %2689 = vmatpush.msra.mxu0 %v2037
  %2690 = vmatpush.msra.mxu0 %v2033
  %2691 = vmatpush.msra.mxu0 %v2029
  %2692 = vmatpush.msra.mxu0 %v2025
  %2693 = vmatpush.msra.mxu0 %v2021
  %2694 = vmatpush.msra.mxu0 %v2017
  %2695 = vmatpush.msra.mxu0 %v2013
  %2696 = vmatpush.msra.mxu0 %v2009
  %2697 = vmatpush.msra.mxu0 %v2005
  %2698 = vmatpush.msra.mxu0 %v2001
  %2699 = vmatpush.msra.mxu0 %v1997
  %2700 = vmatmul.f32.gmra.mxu0 %v1735
  %v2701 = vpop.f32.mrf.mxu0
  %v2702 = vadd.f32 %v2682, %v2701
  %2703 = vdwg.mxu0
  %2704 = vmatpush.msra.mxu0 %v2121
  %2705 = vmatpush.msra.mxu0 %v2117
  %2706 = vmatpush.msra.mxu0 %v2113
  %2707 = vmatpush.msra.mxu0 %v2109
  %2708 = vmatpush.msra.mxu0 %v2105
  %2709 = vmatpush.msra.mxu0 %v2101
  %2710 = vmatpush.msra.mxu0 %v2097
  %2711 = vmatpush.msra.mxu0 %v2093
  %2712 = vmatpush.msra.mxu0 %v2089
  %2713 = vmatpush.msra.mxu0 %v2085
  %2714 = vmatpush.msra.mxu0 %v2081
  %2715 = vmatpush.msra.mxu0 %v2077
  %2716 = vmatpush.msra.mxu0 %v2073
  %2717 = vmatpush.msra.mxu0 %v2069
  %2718 = vmatpush.msra.mxu0 %v2065
  %2719 = vmatpush.msra.mxu0 %v2061
  %2720 = vmatmul.f32.gmra.mxu0 %v1736
  %v2721 = vpop.f32.mrf.mxu0
  %v2722 = vadd.f32 %v2702, %v2721
  %2723 = vdwg.mxu0
  %2724 = vmatpush.msra.mxu0 0.0
  %2725 = vmatpush.msra.mxu0 0.0
  %2726 = vmatpush.msra.mxu0 0.0
  %2727 = vmatpush.msra.mxu0 0.0
  %2728 = vmatpush.msra.mxu0 %v2169
  %2729 = vmatpush.msra.mxu0 %v2165
  %2730 = vmatpush.msra.mxu0 %v2161
  %2731 = vmatpush.msra.mxu0 %v2157
  %2732 = vmatpush.msra.mxu0 %v2153
  %2733 = vmatpush.msra.mxu0 %v2149
  %2734 = vmatpush.msra.mxu0 %v2145
  %2735 = vmatpush.msra.mxu0 %v2141
  %2736 = vmatpush.msra.mxu0 %v2137
  %2737 = vmatpush.msra.mxu0 %v2133
  %2738 = vmatpush.msra.mxu0 %v2129
  %2739 = vmatpush.msra.mxu0 %v2125
  %2740 = vmatmul.f32.gmra.mxu0 %v2182
  %v2741 = vpop.f32.mrf.mxu0
  %v2742 = vadd.f32 %v2722, %v2741
  %2743 = vdwg.mxu0
  %v2744 = vmax.f32 %v2322, 0.0
  %v2745 = vmax.f32 %v2462, 0.0
  %v2746 = vmax.f32 %v2602, 0.0
  %v2747 = vmax.f32 %v2742, 0.0
  %v2748 = vld [vmem:[%s5] sm:$0xff]
  %v2749 = vld [vmem:[%s5 + $0x8] sm:$0xff]
  %v2750 = vld [vmem:[%s5 + $0x10] sm:$0xff]
  %v2751 = vld [vmem:[%s5 + $0x18] sm:$0xff]
  %v2752 = vld [vmem:[%s5 + $0x20] sm:$0xff]
  %v2753 = vld [vmem:[%s5 + $0x28] sm:$0xff]
  %v2754 = vld [vmem:[%s5 + $0x30] sm:$0xff]
  %v2755 = vld [vmem:[%s5 + $0x38] sm:$0xff]
  %v2756 = vld [vmem:[%s5 + $0x40] sm:$0xff]
  %v2757 = vld [vmem:[%s5 + $0x48] sm:$0xff]
  %v2758 = vld [vmem:[%s5 + $0x50] sm:$0xff]
  %v2759 = vld [vmem:[%s5 + $0x58] sm:$0xff]
  %v2760 = vld [vmem:[%s5 + $0x60] sm:$0xff]
  %v2761 = vld [vmem:[%s5 + $0x68] sm:$0xff]
  %v2762 = vld [vmem:[%s5 + $0x70] sm:$0xff]
  %v2763 = vld [vmem:[%s5 + $0x78] sm:$0xff]
  %v2764 = vld [vmem:[%s5 + $0x80] sm:$0xff]
  %v2765 = vld [vmem:[%s5 + $0x88] sm:$0xff]
  %v2766 = vld [vmem:[%s5 + $0x90] sm:$0xff]
  %v2767 = vld [vmem:[%s5 + $0x98] sm:$0xff]
  %v2768 = vld [vmem:[%s5 + $0xa0] sm:$0xff]
  %v2769 = vld [vmem:[%s5 + $0xa8] sm:$0xff]
  %v2770 = vld [vmem:[%s5 + $0xb0] sm:$0xff]
  %v2771 = vld [vmem:[%s5 + $0xb8] sm:$0xff]
  %v2772 = vld [vmem:[%s5 + $0xc0] sm:$0xff]
  %v2773 = vld [vmem:[%s5 + $0xc8] sm:$0xff]
  %v2774 = vld [vmem:[%s5 + $0xd0] sm:$0xff]
  %v2775 = vld [vmem:[%s5 + $0xd8] sm:$0xff]
  %v2776 = vld [vmem:[%s5 + $0xe0] sm:$0xff]
  %v2777 = vld [vmem:[%s5 + $0xe8] sm:$0xff]
  %v2778 = vld [vmem:[%s5 + $0xf0] sm:$0xff]
  %v2779 = vld [vmem:[%s5 + $0xf8] sm:$0xff]
  %v2780 = vld [vmem:[%s5 + $0x100] sm:$0xff]
  %v2781 = vld [vmem:[%s5 + $0x108] sm:$0xff]
  %v2782 = vld [vmem:[%s5 + $0x110] sm:$0xff]
  %v2783 = vld [vmem:[%s5 + $0x118] sm:$0xff]
  %v2784 = vld [vmem:[%s5 + $0x120] sm:$0xff]
  %v2785 = vld [vmem:[%s5 + $0x128] sm:$0xff]
  %v2786 = vld [vmem:[%s5 + $0x130] sm:$0xff]
  %v2787 = vld [vmem:[%s5 + $0x138] sm:$0xff]
  %v2788 = vld [vmem:[%s5 + $0x140] sm:$0xff]
  %v2789 = vld [vmem:[%s5 + $0x148] sm:$0xff]
  %v2790 = vld [vmem:[%s5 + $0x150] sm:$0xff]
  %v2791 = vld [vmem:[%s5 + $0x158] sm:$0xff]
  %v2792 = vld [vmem:[%s5 + $0x160] sm:$0xff]
  %v2793 = vld [vmem:[%s5 + $0x168] sm:$0xff]
  %v2794 = vld [vmem:[%s5 + $0x170] sm:$0xff]
  %v2795 = vld [vmem:[%s5 + $0x178] sm:$0xff]
  %v2796 = vld [vmem:[%s5 + $0x180] sm:$0xff]
  %v2797 = vld [vmem:[%s5 + $0x188] sm:$0xff]
  %v2798 = vld [vmem:[%s6] sm:$0x1]
  %v2800 = vperm.slane %v2798, 0
  %v2803 = vsel %vm747, %v2747, 0
  %2805 = vmatpush.msra.mxu0 %v2763
  %2806 = vmatpush.msra.mxu0 %v2762
  %2807 = vmatpush.msra.mxu0 %v2761
  %2808 = vmatpush.msra.mxu0 %v2760
  %2809 = vmatpush.msra.mxu0 %v2759
  %2810 = vmatpush.msra.mxu0 %v2758
  %2811 = vmatpush.msra.mxu0 %v2757
  %2812 = vmatpush.msra.mxu0 %v2756
  %2813 = vmatpush.msra.mxu0 %v2755
  %2814 = vmatpush.msra.mxu0 %v2754
  %2815 = vmatpush.msra.mxu0 %v2753
  %2816 = vmatpush.msra.mxu0 %v2752
  %2817 = vmatpush.msra.mxu0 %v2751
  %2818 = vmatpush.msra.mxu0 %v2750
  %2819 = vmatpush.msra.mxu0 %v2749
  %2820 = vmatpush.msra.mxu0 %v2748
  %2821 = vmatmul.f32.gmra.mxu0 %v2744
  %v2822 = vpop.f32.mrf.mxu0
  %v2823 = vadd.f32 %v2800, %v2822
  %2824 = vdwg.mxu0
  %2825 = vmatpush.msra.mxu0 %v2779
  %2826 = vmatpush.msra.mxu0 %v2778
  %2827 = vmatpush.msra.mxu0 %v2777
  %2828 = vmatpush.msra.mxu0 %v2776
  %2829 = vmatpush.msra.mxu0 %v2775
  %2830 = vmatpush.msra.mxu0 %v2774
  %2831 = vmatpush.msra.mxu0 %v2773
  %2832 = vmatpush.msra.mxu0 %v2772
  %2833 = vmatpush.msra.mxu0 %v2771
  %2834 = vmatpush.msra.mxu0 %v2770
  %2835 = vmatpush.msra.mxu0 %v2769
  %2836 = vmatpush.msra.mxu0 %v2768
  %2837 = vmatpush.msra.mxu0 %v2767
  %2838 = vmatpush.msra.mxu0 %v2766
  %2839 = vmatpush.msra.mxu0 %v2765
  %2840 = vmatpush.msra.mxu0 %v2764
  %2841 = vmatmul.f32.gmra.mxu0 %v2745
  %v2842 = vpop.f32.mrf.mxu0
  %v2843 = vadd.f32 %v2823, %v2842
  %2844 = vdwg.mxu0
  %2845 = vmatpush.msra.mxu0 %v2795
  %2846 = vmatpush.msra.mxu0 %v2794
  %2847 = vmatpush.msra.mxu0 %v2793
  %2848 = vmatpush.msra.mxu0 %v2792
  %2849 = vmatpush.msra.mxu0 %v2791
  %2850 = vmatpush.msra.mxu0 %v2790
  %2851 = vmatpush.msra.mxu0 %v2789
  %2852 = vmatpush.msra.mxu0 %v2788
  %2853 = vmatpush.msra.mxu0 %v2787
  %2854 = vmatpush.msra.mxu0 %v2786
  %2855 = vmatpush.msra.mxu0 %v2785
  %2856 = vmatpush.msra.mxu0 %v2784
  %2857 = vmatpush.msra.mxu0 %v2783
  %2858 = vmatpush.msra.mxu0 %v2782
  %2859 = vmatpush.msra.mxu0 %v2781
  %2860 = vmatpush.msra.mxu0 %v2780
  %2861 = vmatmul.f32.gmra.mxu0 %v2746
  %v2862 = vpop.f32.mrf.mxu0
  %v2863 = vadd.f32 %v2843, %v2862
  %2864 = vdwg.mxu0
  %2865 = vmatpush.msra.mxu0 0.0
  %2866 = vmatpush.msra.mxu0 0.0
  %2867 = vmatpush.msra.mxu0 0.0
  %2868 = vmatpush.msra.mxu0 0.0
  %2869 = vmatpush.msra.mxu0 0.0
  %2870 = vmatpush.msra.mxu0 0.0
  %2871 = vmatpush.msra.mxu0 0.0
  %2872 = vmatpush.msra.mxu0 0.0
  %2873 = vmatpush.msra.mxu0 0.0
  %2874 = vmatpush.msra.mxu0 0.0
  %2875 = vmatpush.msra.mxu0 0.0
  %2876 = vmatpush.msra.mxu0 0.0
  %2877 = vmatpush.msra.mxu0 0.0
  %2878 = vmatpush.msra.mxu0 0.0
  %2879 = vmatpush.msra.mxu0 %v2797
  %2880 = vmatpush.msra.mxu0 %v2796
  %2881 = vmatmul.f32.gmra.mxu0 %v2803
  %v2882 = vpop.f32.mrf.mxu0
  %v2883 = vadd.f32 %v2863, %v2882
  %2884 = vdwg.mxu0
  %v2885 = vmax.f32 %v2883, 0.0
  %v2886 = vld [vmem:[%s7] sm:$0xff]
  %v2887 = vld [vmem:[%s7 + $0x8] sm:$0xff]
  %v2888 = vld [vmem:[%s7 + $0x10] sm:$0xff]
  %v2889 = vld [vmem:[%s7 + $0x18] sm:$0xff]
  %v2890 = vld [vmem:[%s7 + $0x20] sm:$0xff]
  %v2891 = vld [vmem:[%s7 + $0x28] sm:$0xff]
  %v2892 = vld [vmem:[%s7 + $0x30] sm:$0xff]
  %v2893 = vld [vmem:[%s7 + $0x38] sm:$0xff]
  %v2894 = vld [vmem:[%s7 + $0x40] sm:$0xff]
  %v2895 = vld [vmem:[%s7 + $0x48] sm:$0xff]
  %v2896 = vld [vmem:[%s7 + $0x50] sm:$0xff]
  %v2897 = vld [vmem:[%s7 + $0x58] sm:$0xff]
  %v2898 = vld [vmem:[%s7 + $0x60] sm:$0xff]
  %v2899 = vld [vmem:[%s7 + $0x68] sm:$0xff]
  %v2900 = vld [vmem:[%s7 + $0x70] sm:$0xff]
  %v2901 = vld [vmem:[%s8] sm:$0x1]
  %v2903 = vperm.slane %v2901, 0
  %vm2905 = vcmask 982016
  %v2907 = vsel %vm2905, %v2885, 0
  %2909 = vmatpush.msra.mxu0 0.0
  %2910 = vmatpush.msra.mxu0 %v2900
  %2911 = vmatpush.msra.mxu0 %v2899
  %2912 = vmatpush.msra.mxu0 %v2898
  %2913 = vmatpush.msra.mxu0 %v2897
  %2914 = vmatpush.msra.mxu0 %v2896
  %2915 = vmatpush.msra.mxu0 %v2895
  %2916 = vmatpush.msra.mxu0 %v2894
  %2917 = vmatpush.msra.mxu0 %v2893
  %2918 = vmatpush.msra.mxu0 %v2892
  %2919 = vmatpush.msra.mxu0 %v2891
  %2920 = vmatpush.msra.mxu0 %v2890
  %2921 = vmatpush.msra.mxu0 %v2889
  %2922 = vmatpush.msra.mxu0 %v2888
  %2923 = vmatpush.msra.mxu0 %v2887
  %2924 = vmatpush.msra.mxu0 %v2886
  %2925 = vmatmul.f32.gmra.mxu0 %v2907
  %v2926 = vpop.f32.mrf.mxu0
  %v2927 = vadd.f32 %v2903, %v2926
  %2928 = vdwg.mxu0
  %v2929 = vmax.f32 %v2927, 0.0
  %v2930 = vld [vmem:[%s9] sm:$0xff]
  %v2931 = vld [vmem:[%s9 + $0x8] sm:$0xff]
  %v2932 = vld [vmem:[%s9 + $0x10] sm:$0xff]
  %v2933 = vld [vmem:[%s9 + $0x18] sm:$0xff]
  %v2934 = vld [vmem:[%s9 + $0x20] sm:$0xff]
  %v2935 = vld [vmem:[%s9 + $0x28] sm:$0xff]
  %v2936 = vld [vmem:[%s9 + $0x30] sm:$0xff]
  %v2937 = vld [vmem:[%s9 + $0x38] sm:$0xff]
  %v2938 = vld [vmem:[%s9 + $0x40] sm:$0xff]
  %v2939 = vld [vmem:[%s9 + $0x48] sm:$0xff]
  %v2940 = vld [vmem:[%s9 + $0x50] sm:$0xf]
  %v2941 = vld [vmem:[%s10] sm:$0x1]
  %v2943 = vperm.slane %v2941, 0
  %vm2945 = vcmask 687104
  %v2947 = vsel %vm2945, %v2929, 0
  %vm2949 = vcmask 1043456
  %v2951 = vsel %vm2949, %v2940, 0
  %2953 = vmatpush.msra.mxu0 0.0
  %2954 = vmatpush.msra.mxu0 0.0
  %2955 = vmatpush.msra.mxu0 0.0
  %2956 = vmatpush.msra.mxu0 0.0
  %2957 = vmatpush.msra.mxu0 0.0
  %2958 = vmatpush.msra.mxu0 %v2951
  %2959 = vmatpush.msra.mxu0 %v2939
  %2960 = vmatpush.msra.mxu0 %v2938
  %2961 = vmatpush.msra.mxu0 %v2937
  %2962 = vmatpush.msra.mxu0 %v2936
  %2963 = vmatpush.msra.mxu0 %v2935
  %2964 = vmatpush.msra.mxu0 %v2934
  %2965 = vmatpush.msra.mxu0 %v2933
  %2966 = vmatpush.msra.mxu0 %v2932
  %2967 = vmatpush.msra.mxu0 %v2931
  %2968 = vmatpush.msra.mxu0 %v2930
  %2969 = vmatmul.f32.gmra.mxu0 %v2947
  %v2970 = vpop.f32.mrf.mxu0
  %v2971 = vadd.f32 %v2943, %v2970
  %2972 = vdwg.mxu0
  %2973 = vst [vmem:[%s11] sm:$0xff] %v2971
  // Predicated region
  $region46: #{classifier_forward.1} parent=0 // pred_check
    _
  $region47: #{classifier_forward.1} parent=0 // pred_check_branch
    %2975 = sbr.rel (0) target = $region49
  $region48: #{classifier_forward.1} parent=0 // pred_region
    _
  $region49: #{classifier_forward.1} parent=0 // pred_fallthru
    _
  // Predicated region
  $region50: #{classifier_forward.1} parent=0 // pred_check
    _
  $region51: #{classifier_forward.1} parent=0 // pred_check_branch
    %2977 = sbr.rel (0) target = $region53
  $region52: #{classifier_forward.1} parent=0 // pred_region
    _
  $region53: #{classifier_forward.1} parent=0 // pred_fallthru
    _

</llo_original>
